<compile_context>
chip_gen: v7x
topology: tpu7x:2x2x1
jax: 0.10.0
libtpu: 0.0.40
codegen_flags: <defaults>
</compile_context>

<pallas_src>
import functools

import jax
import jax.numpy as jnp
from jax.experimental import pallas as pl
from jax.experimental.pallas import tpu as pltpu

LN_EPS = 1e-5  # torch.nn.LayerNorm default


# ----------------------------- in-kernel helpers -----------------------------

def _layernorm(x, g, b):
    mu = jnp.mean(x, axis=-1, keepdims=True)
    var = jnp.mean(jnp.square(x - mu), axis=-1, keepdims=True)
    return (x - mu) * jax.lax.rsqrt(var + LN_EPS) * g + b


def _erf(x):
    # Abramowitz & Stegun 7.1.26 rational approximation (max abs err ~1.5e-7).
    # Realizes torch.nn.GELU()'s exact-erf GELU with VPU/EUP ops only.
    a1, a2, a3, a4, a5 = (0.254829592, -0.284496736, 1.421413741,
                          -1.453152027, 1.061405429)
    p = 0.3275911
    s = jnp.where(x >= 0.0, 1.0, -1.0)
    ax = jnp.abs(x)
    t = 1.0 / (1.0 + p * ax)
    poly = ((((a5 * t + a4) * t + a3) * t + a2) * t + a1) * t
    return s * (1.0 - poly * jnp.exp(-ax * ax))


def _gelu_exact(x):
    return 0.5 * x * (1.0 + _erf(x * 0.7071067811865476))


# ------------------------------ fused ViT kernel ------------------------------

def vit_kernel(patches_ref, pe_w, pe_b, cls_ref, pos_ref,
               ln1_g, ln1_b, wqkv, bqkv, wo, bo,
               ln2_g, ln2_b, w1, b1, w2, b2,
               h_lng, h_lnb, h_w1, h_b1, h_w2, h_b2,
               out_ref, x_s, *, num_heads):
    """Grid = (batch, layer).  One grid step == one transformer layer of one image."""
    l = pl.program_id(1)
    n_layers = pl.num_programs(1)

    D = pos_ref.shape[-1]
    hd = D // num_heads
    scale = 1.0 / float(hd) ** 0.5
    cdt = pe_w.dtype  # MXU operand dtype (bf16); accumulation is always f32.

    # ---- layer-0 prologue: patch embedding + CLS token + positional embeddings ----
    @pl.when(l == 0)
    def _():
        patches = patches_ref[0]                                        # (N, P)
        n = patches.shape[0]
        emb = jnp.dot(patches.astype(cdt), pe_w[...],
                      preferred_element_type=jnp.float32) + pe_b[...]   # (N, D) f32
        x_s[pl.ds(0, 1), :] = cls_ref[...] + pos_ref[pl.ds(0, 1), :]
        x_s[pl.ds(1, n), :] = emb + pos_ref[pl.ds(1, n), :]

    x = x_s[...]                                                        # (S, D) f32

    # ---- one transformer layer (weights for layer l are this step's blocks) ----
    # MSA block (pre-LN): fused QKV projection, per-head attention, fused out-proj.
    xn = _layernorm(x, ln1_g[0], ln1_b[0])                              # (S, D)
    qkv = jnp.dot(xn.astype(cdt), wqkv[0],
                  preferred_element_type=jnp.float32) + bqkv[0]         # (S, 3D) f32

    ctx_heads = []
    for h in range(num_heads):
        qh = qkv[:, h * hd:(h + 1) * hd] * scale                        # (S, hd)
        kh = qkv[:, D + h * hd:D + (h + 1) * hd]                        # (S, hd)
        vh = qkv[:, 2 * D + h * hd:2 * D + (h + 1) * hd]                # (S, hd)
        s = jax.lax.dot_general(qh, kh, (((1,), (1,)), ((), ())),
                                preferred_element_type=jnp.float32)     # (S, S)
        s = s - jnp.max(s, axis=-1, keepdims=True)
        p = jnp.exp(s)
        p = p * pl.reciprocal(jnp.sum(p, axis=-1, keepdims=True), approx=True)
        ctx_heads.append(jnp.dot(p, vh, preferred_element_type=jnp.float32))
    ctx = jnp.concatenate(ctx_heads, axis=-1)                           # (S, D)

    attn = jnp.dot(ctx.astype(cdt), wo[0],
                   preferred_element_type=jnp.float32) + bo[0]          # (S, D)
    z = attn + x                                                        # residual 1

    # MLP block (pre-LN).
    zn = _layernorm(z, ln2_g[0], ln2_b[0])
    h1 = _gelu_exact(jnp.dot(zn.astype(cdt), w1[0],
                             preferred_element_type=jnp.float32) + b1[0])
    x_new = jnp.dot(h1.astype(cdt), w2[0],
                    preferred_element_type=jnp.float32) + b2[0] + z     # residual 2
    x_s[...] = x_new                                                    # carry to l+1

    # ---- last-layer epilogue: final LayerNorm (CLS row) + classification head ----
    @pl.when(l == n_layers - 1)
    def _():
        x_cls = x_new[0:1, :]                                           # (1, D)
        cn = _layernorm(x_cls, h_lng[...], h_lnb[...])
        hc = jnp.tanh(jnp.dot(cn.astype(cdt), h_w1[...],
                              preferred_element_type=jnp.float32) + h_b1[...])
        out_ref[0] = jnp.dot(hc.astype(cdt), h_w2[...],
                             preferred_element_type=jnp.float32) + h_b2[...]


# ------------------------------- host-side glue --------------------------------

def extract_patches(images, patch_size):
    # Pure-JAX glue replicating torch.nn.Unfold(k, stride=k).transpose(1, 2).
    B, C, H, W = images.shape
    p = patch_size
    x = images.reshape(B, C, H // p, p, W // p, p)
    x = x.transpose(0, 2, 4, 1, 3, 5)            # [B, Hp, Wp, C, p, p]
    return x.reshape(B, (H // p) * (W // p), C * p * p)


def pack_layer_params(layer_params, compute_dtype=jnp.bfloat16):
    """Stack per-layer params on a leading L axis; matmul weights cast to bf16."""
    def stack(key, dt=jnp.float32):
        return jnp.stack([p[key] for p in layer_params]).astype(dt)
    return dict(
        ln1_g=stack("ln1_g"), ln1_b=stack("ln1_b"),
        wqkv=stack("wqkv", compute_dtype), bqkv=stack("bqkv"),
        wo=stack("wo", compute_dtype), bo=stack("bo"),
        ln2_g=stack("ln2_g"), ln2_b=stack("ln2_b"),
        w1=stack("w1", compute_dtype), b1=stack("b1"),
        w2=stack("w2", compute_dtype), b2=stack("b2"),
    )


def pack_embed_params(emb_params, compute_dtype=jnp.bfloat16):
    return dict(w=emb_params["w"].astype(compute_dtype), b=emb_params["b"],
                cls=emb_params["cls"], pos=emb_params["pos"])


def pack_head_params(head_params, num_labels, padded_labels=128,
                     compute_dtype=jnp.bfloat16):
    """Pad the classification head to a lane-dense (…, 128) output."""
    pad = padded_labels - num_labels
    return dict(
        lng=head_params["lng"], lnb=head_params["lnb"],
        w1=head_params["w1"].astype(compute_dtype), b1=head_params["b1"],
        w2=jnp.pad(head_params["w2"], ((0, 0), (0, pad))).astype(compute_dtype),
        b2=jnp.pad(head_params["b2"], ((0, 0), (0, pad))),
    )


def vit_forward_fused(images, emb, packed, head, *, patch_size, num_heads,
                      num_layers, num_labels):
    patches = extract_patches(images, patch_size)            # (B, N, P) f32
    B, N, P = patches.shape
    D = emb["pos"].shape[-1]
    S = N + 1
    L = num_layers
    LBLP = head["w2"].shape[1]                                # padded (lane-dense)

    def full(shape):
        n = len(shape)
        return pl.BlockSpec(shape, lambda b, l, n=n: (0,) * n)

    def per_layer(shape):
        k = len(shape) - 1
        return pl.BlockSpec((1,) + tuple(shape[1:]),
                            lambda b, l, k=k: (l,) + (0,) * k)

    in_specs = [pl.BlockSpec((1, N, P), lambda b, l: (b, 0, 0)),     # patches
                full(emb["w"].shape), full(emb["b"].shape),
                full(emb["cls"].shape), full(emb["pos"].shape)]
    args = [patches, emb["w"], emb["b"], emb["cls"], emb["pos"]]
    for key in ("ln1_g", "ln1_b", "wqkv", "bqkv", "wo", "bo",
                "ln2_g", "ln2_b", "w1", "b1", "w2", "b2"):
        in_specs.append(per_layer(packed[key].shape))
        args.append(packed[key])
    for key in ("lng", "lnb", "w1", "b1", "w2", "b2"):
        in_specs.append(full(head[key].shape))
        args.append(head[key])

    kernel = functools.partial(vit_kernel, num_heads=num_heads)
    out = pl.pallas_call(
        kernel,
        out_shape=jax.ShapeDtypeStruct((B, 1, LBLP), jnp.float32),
        grid=(B, L),
        in_specs=in_specs,
        out_specs=pl.BlockSpec((1, 1, LBLP), lambda b, l: (b, 0, 0)),
        scratch_shapes=[pltpu.VMEM((S, D), jnp.float32)],
        compiler_params=pltpu.CompilerParams(
            dimension_semantics=("parallel", "arbitrary")),
    )(*args)
    return out[:, 0, :num_labels]


# ------------------------------ pure-JAX reference -----------------------------

def vit_reference(images, emb_params, layer_params, head_params,
                  *, patch_size, num_heads):
    patches = extract_patches(images, patch_size)
    x = jnp.einsum("bnp,pd->bnd", patches, emb_params["w"]) + emb_params["b"]
    B = x.shape[0]
    D = x.shape[-1]
    cls = jnp.broadcast_to(emb_params["cls"][None], (B, 1, D))
    x = jnp.concatenate([cls, x], axis=1) + emb_params["pos"][None]
    hd = D // num_heads

    def ln(v, g, b):
        mu = v.mean(-1, keepdims=True)
        var = ((v - mu) ** 2).mean(-1, keepdims=True)
        return (v - mu) / jnp.sqrt(var + LN_EPS) * g + b

    for p in layer_params:
        xn = ln(x, p["ln1_g"], p["ln1_b"])
        qkv = xn @ p["wqkv"] + p["bqkv"]
        q, k, v = jnp.split(qkv, 3, axis=-1)
        S = q.shape[1]
        heads = lambda t: t.reshape(B, S, num_heads, hd).transpose(0, 2, 1, 3)
        qh, kh, vh = heads(q) / float(hd) ** 0.5, heads(k), heads(v)
        att = jax.nn.softmax(jnp.einsum("bhqe,bhke->bhqk", qh, kh), axis=-1)
        o = jnp.einsum("bhqk,bhke->bhqe", att, vh).transpose(0, 2, 1, 3).reshape(B, S, D)
        z = o @ p["wo"] + p["bo"] + x
        zn = ln(z, p["ln2_g"], p["ln2_b"])
        h1 = zn @ p["w1"] + p["b1"]
        h1 = 0.5 * h1 * (1.0 + jax.scipy.special.erf(h1 / jnp.sqrt(2.0)))
        x = h1 @ p["w2"] + p["b2"] + z
    xn = ln(x[:, 0, :], head_params["lng"], head_params["lnb"])
    h = jnp.tanh(xn @ head_params["w1"] + head_params["b1"])
    return h @ head_params["w2"] + head_params["b2"]


# ---------------------------------- driver -------------------------------------

if __name__ == "__main__":
    # Small, self-consistent ViT config (image 16x16, patch 4 -> 16 patches + CLS).
    B = 2          # batch
    C = 3          # colour channels
    IMG = 16       # image resolution
    PATCH = 4      # patch size
    D = 64         # latent_vector_size
    HEADS = 4      # num_MSA_heads (head_dim = 16)
    MLP = 128      # MLP_hidden_layer_size
    LAYERS = 2     # num_transformer_layers
    LABELS = 10    # num_labels
    LBL_PAD = 128  # lane-dense padded label width for the kernel output

    N = (IMG // PATCH) ** 2
    S = N + 1
    PF = C * PATCH * PATCH

    key = jax.random.PRNGKey(0)
    keys = iter(jax.random.split(key, 64))
    f32 = jnp.float32

    def rnd(shape, scale=0.02):
        return (scale * jax.random.normal(next(keys), shape)).astype(f32)

    images = jax.random.normal(next(keys), (B, C, IMG, IMG), dtype=f32)

    emb_params = dict(
        w=rnd((PF, D)), b=jnp.zeros((1, D), f32),
        cls=rnd((1, D), 1.0), pos=rnd((S, D), 1.0),
    )
    layer_params = []
    for _ in range(LAYERS):
        layer_params.append(dict(
            ln1_g=jnp.ones((1, D), f32), ln1_b=jnp.zeros((1, D), f32),
            wqkv=rnd((D, 3 * D)), bqkv=jnp.zeros((1, 3 * D), f32),
            wo=rnd((D, D)), bo=jnp.zeros((1, D), f32),
            ln2_g=jnp.ones((1, D), f32), ln2_b=jnp.zeros((1, D), f32),
            w1=rnd((D, MLP)), b1=jnp.zeros((1, MLP), f32),
            w2=rnd((MLP, D)), b2=jnp.zeros((1, D), f32),
        ))
    head_params = dict(
        lng=jnp.ones((1, D), f32), lnb=jnp.zeros((1, D), f32),
        w1=rnd((D, MLP)), b1=jnp.zeros((1, MLP), f32),
        w2=rnd((MLP, LABELS)), b2=jnp.zeros((1, LABELS), f32),
    )

    # Kernel-side packing: per-layer weights stacked on a leading L axis, matmul
    # weights cast to bf16, classification head padded to a lane-dense 128 output.
    packed = pack_layer_params(layer_params)
    emb_packed = pack_embed_params(emb_params)
    head_packed = pack_head_params(head_params, LABELS, LBL_PAD)

    @jax.jit
    def vit_forward(imgs):
        return vit_forward_fused(imgs, emb_packed, packed, head_packed,
                                 patch_size=PATCH, num_heads=HEADS,
                                 num_layers=LAYERS, num_labels=LABELS)

    y = vit_forward(images)
    jax.block_until_ready(y)
    assert y.shape == (B, LABELS) and y.dtype == jnp.float32

    # Sanity-check against a pure-JAX f32 reference.  Tolerance is loose because the
    # kernel uses bf16 MXU operands (f32 accumulation), an approx-erf GELU and the
    # EUP approx reciprocal in softmax.
    with jax.default_matmul_precision("float32"):
        y_ref = vit_reference(images, emb_params, layer_params, head_params,
                              patch_size=PATCH, num_heads=HEADS)
    max_err = float(jnp.max(jnp.abs(y - y_ref)))
    assert max_err < 2e-2, f"kernel/reference mismatch: max abs err = {max_err}"

    print("KERNEL_OK")
</pallas_src>

<mosaic_0001>
module attributes {stable_mosaic.version = 11 : i64} {
  func.func @vit_kernel(%arg0: i32, %arg1: i32, %arg2: memref<1x16x48xf32, #tpu.memory_space<vmem>>, %arg3: memref<48x64xbf16, #tpu.memory_space<vmem>>, %arg4: memref<1x64xf32, #tpu.memory_space<vmem>>, %arg5: memref<1x64xf32, #tpu.memory_space<vmem>>, %arg6: memref<17x64xf32, #tpu.memory_space<vmem>>, %arg7: memref<1x1x64xf32, #tpu.memory_space<vmem>>, %arg8: memref<1x1x64xf32, #tpu.memory_space<vmem>>, %arg9: memref<1x64x192xbf16, #tpu.memory_space<vmem>>, %arg10: memref<1x1x192xf32, #tpu.memory_space<vmem>>, %arg11: memref<1x64x64xbf16, #tpu.memory_space<vmem>>, %arg12: memref<1x1x64xf32, #tpu.memory_space<vmem>>, %arg13: memref<1x1x64xf32, #tpu.memory_space<vmem>>, %arg14: memref<1x1x64xf32, #tpu.memory_space<vmem>>, %arg15: memref<1x64x128xbf16, #tpu.memory_space<vmem>>, %arg16: memref<1x1x128xf32, #tpu.memory_space<vmem>>, %arg17: memref<1x128x64xbf16, #tpu.memory_space<vmem>>, %arg18: memref<1x1x64xf32, #tpu.memory_space<vmem>>, %arg19: memref<1x64xf32, #tpu.memory_space<vmem>>, %arg20: memref<1x64xf32, #tpu.memory_space<vmem>>, %arg21: memref<64x128xbf16, #tpu.memory_space<vmem>>, %arg22: memref<1x128xf32, #tpu.memory_space<vmem>>, %arg23: memref<128x128xbf16, #tpu.memory_space<vmem>>, %arg24: memref<1x128xf32, #tpu.memory_space<vmem>>, %arg25: memref<1x1x128xf32, #tpu.memory_space<vmem>>, %arg26: memref<17x64xf32, #tpu.memory_space<vmem>>) attributes {dimension_semantics = [#tpu.dimension_semantics<parallel>, #tpu.dimension_semantics<arbitrary>], iteration_bounds = array<i64: 2, 2>, scalar_prefetch = 0 : i64, scratch_operands = 1 : i64, tpu.core_type = #tpu.core_type<tc>, window_params = [{transform_indices = @transform_0, window_bounds = array<i64: 1, 16, 48>}, {pipeline_mode = #tpu.pipeline_mode<synchronous>, transform_indices = @transform_1, window_bounds = array<i64: 48, 64>}, {pipeline_mode = #tpu.pipeline_mode<synchronous>, transform_indices = @transform_2, window_bounds = array<i64: 1, 64>}, {pipeline_mode = #tpu.pipeline_mode<synchronous>, transform_indices = @transform_3, window_bounds = array<i64: 1, 64>}, {pipeline_mode = #tpu.pipeline_mode<synchronous>, transform_indices = @transform_4, window_bounds = array<i64: 17, 64>}, {transform_indices = @transform_5, window_bounds = array<i64: 1, 1, 64>}, {transform_indices = @transform_6, window_bounds = array<i64: 1, 1, 64>}, {transform_indices = @transform_7, window_bounds = array<i64: 1, 64, 192>}, {transform_indices = @transform_8, window_bounds = array<i64: 1, 1, 192>}, {transform_indices = @transform_9, window_bounds = array<i64: 1, 64, 64>}, {transform_indices = @transform_10, window_bounds = array<i64: 1, 1, 64>}, {transform_indices = @transform_11, window_bounds = array<i64: 1, 1, 64>}, {transform_indices = @transform_12, window_bounds = array<i64: 1, 1, 64>}, {transform_indices = @transform_13, window_bounds = array<i64: 1, 64, 128>}, {transform_indices = @transform_14, window_bounds = array<i64: 1, 1, 128>}, {transform_indices = @transform_15, window_bounds = array<i64: 1, 128, 64>}, {transform_indices = @transform_16, window_bounds = array<i64: 1, 1, 64>}, {pipeline_mode = #tpu.pipeline_mode<synchronous>, transform_indices = @transform_17, window_bounds = array<i64: 1, 64>}, {pipeline_mode = #tpu.pipeline_mode<synchronous>, transform_indices = @transform_18, window_bounds = array<i64: 1, 64>}, {pipeline_mode = #tpu.pipeline_mode<synchronous>, transform_indices = @transform_19, window_bounds = array<i64: 64, 128>}, {pipeline_mode = #tpu.pipeline_mode<synchronous>, transform_indices = @transform_20, window_bounds = array<i64: 1, 128>}, {pipeline_mode = #tpu.pipeline_mode<synchronous>, transform_indices = @transform_21, window_bounds = array<i64: 128, 128>}, {pipeline_mode = #tpu.pipeline_mode<synchronous>, transform_indices = @transform_22, window_bounds = array<i64: 1, 128>}, {transform_indices = @transform_23, window_bounds = array<i64: 1, 1, 128>}]} {
    %c0_i32 = arith.constant 0 : i32
    %0 = arith.cmpi eq, %arg1, %c0_i32 : i32
    %1 = arith.extui %0 : i1 to i32
    %c0_i32_0 = arith.constant 0 : i32
    %2 = arith.cmpi ne, %1, %c0_i32_0 : i32
    scf.if %2 {
      %c0_90 = arith.constant 0 : index
      %c0_91 = arith.constant 0 : index
      %c0_92 = arith.constant 0 : index
      %204 = vector.load %arg2[%c0_90, %c0_91, %c0_92] : memref<1x16x48xf32, #tpu.memory_space<vmem>>, vector<1x16x48xf32>
      %205 = vector.shape_cast %204 : vector<1x16x48xf32> to vector<16x48xf32>
      %206 = arith.truncf %205 : vector<16x48xf32> to vector<16x48xbf16>
      %c0_93 = arith.constant 0 : index
      %c0_94 = arith.constant 0 : index
      %207 = vector.load %arg3[%c0_93, %c0_94] : memref<48x64xbf16, #tpu.memory_space<vmem>>, vector<48x64xbf16>
      %cst_95 = arith.constant dense<0.000000e+00> : vector<16x64xf32>
      %208 = tpu.matmul %206, %207, %cst_95 {dimension_numbers = #tpu.dot_dimension_numbers<[1], [0], [0], [1], [0, 0, 1, 1], [], []>} : vector<16x48xbf16>, vector<48x64xbf16>, vector<16x64xf32> -> vector<16x64xf32>
      %c0_96 = arith.constant 0 : index
      %c0_97 = arith.constant 0 : index
      %209 = vector.load %arg4[%c0_96, %c0_97] : memref<1x64xf32, #tpu.memory_space<vmem>>, vector<1x64xf32>
      %210 = vector.broadcast %209 : vector<1x64xf32> to vector<16x64xf32>
      %211 = arith.addf %208, %210 : vector<16x64xf32>
      %c0_98 = arith.constant 0 : index
      %c0_99 = arith.constant 0 : index
      %212 = vector.load %arg5[%c0_98, %c0_99] : memref<1x64xf32, #tpu.memory_space<vmem>>, vector<1x64xf32>
      %c0_100 = arith.constant 0 : index
      %c0_101 = arith.constant 0 : index
      %213 = vector.load %arg6[%c0_100, %c0_101] : memref<17x64xf32, #tpu.memory_space<vmem>>, vector<1x64xf32>
      %214 = arith.addf %212, %213 : vector<1x64xf32>
      %c0_102 = arith.constant 0 : index
      %c0_103 = arith.constant 0 : index
      %215 = vector.load %arg26[%c0_102, %c0_103] : memref<17x64xf32, #tpu.memory_space<vmem>>, vector<1x64xf32>
      tpu.vector_store %arg26[%c0_102, %c0_103], %214 {strides = array<i32>} : memref<17x64xf32, #tpu.memory_space<vmem>>, vector<1x64xf32>,
      %c1 = arith.constant 1 : index
      %c0_104 = arith.constant 0 : index
      %216 = vector.load %arg6[%c1, %c0_104] : memref<17x64xf32, #tpu.memory_space<vmem>>, vector<16x64xf32>
      %217 = arith.addf %211, %216 : vector<16x64xf32>
      %c1_105 = arith.constant 1 : index
      %c0_106 = arith.constant 0 : index
      %218 = vector.load %arg26[%c1_105, %c0_106] : memref<17x64xf32, #tpu.memory_space<vmem>>, vector<16x64xf32>
      tpu.vector_store %arg26[%c1_105, %c0_106], %217 {strides = array<i32>} : memref<17x64xf32, #tpu.memory_space<vmem>>, vector<16x64xf32>,
    } else {
    }
    %c0 = arith.constant 0 : index
    %c0_1 = arith.constant 0 : index
    %3 = vector.load %arg26[%c0, %c0_1] : memref<17x64xf32, #tpu.memory_space<vmem>>, vector<17x64xf32>
    %c0_2 = arith.constant 0 : index
    %c0_3 = arith.constant 0 : index
    %c0_4 = arith.constant 0 : index
    %4 = vector.load %arg7[%c0_2, %c0_3, %c0_4] : memref<1x1x64xf32, #tpu.memory_space<vmem>>, vector<1x1x64xf32>
    %5 = vector.shape_cast %4 : vector<1x1x64xf32> to vector<1x64xf32>
    %c0_5 = arith.constant 0 : index
    %c0_6 = arith.constant 0 : index
    %c0_7 = arith.constant 0 : index
    %6 = vector.load %arg8[%c0_5, %c0_6, %c0_7] : memref<1x1x64xf32, #tpu.memory_space<vmem>>, vector<1x1x64xf32>
    %7 = vector.shape_cast %6 : vector<1x1x64xf32> to vector<1x64xf32>
    %cst = arith.constant dense<0.000000e+00> : vector<17xf32>
    %8 = vector.multi_reduction <add>, %3, %cst [1] : vector<17x64xf32> to vector<17xf32>
    %9 = vector.shape_cast %8 : vector<17xf32> to vector<17x1xf32>
    %cst_8 = arith.constant 6.400000e+01 : f32
    %10 = vector.broadcast %cst_8 : f32 to vector<17x1xf32>
    %11 = arith.divf %9, %10 : vector<17x1xf32>
    %12 = vector.broadcast %11 : vector<17x1xf32> to vector<17x64xf32>
    %13 = arith.subf %3, %12 : vector<17x64xf32>
    %14 = arith.mulf %13, %13 : vector<17x64xf32>
    %cst_9 = arith.constant dense<0.000000e+00> : vector<17xf32>
    %15 = vector.multi_reduction <add>, %14, %cst_9 [1] : vector<17x64xf32> to vector<17xf32>
    %16 = vector.shape_cast %15 : vector<17xf32> to vector<17x1xf32>
    %cst_10 = arith.constant 6.400000e+01 : f32
    %17 = vector.broadcast %cst_10 : f32 to vector<17x1xf32>
    %18 = arith.divf %16, %17 : vector<17x1xf32>
    %19 = vector.broadcast %11 : vector<17x1xf32> to vector<17x64xf32>
    %20 = arith.subf %3, %19 : vector<17x64xf32>
    %cst_11 = arith.constant 9.99999974E-6 : f32
    %21 = vector.broadcast %cst_11 : f32 to vector<17x1xf32>
    %22 = arith.addf %18, %21 : vector<17x1xf32>
    %23 = math.rsqrt %22 : vector<17x1xf32>
    %24 = vector.broadcast %23 : vector<17x1xf32> to vector<17x64xf32>
    %25 = arith.mulf %20, %24 : vector<17x64xf32>
    %26 = vector.broadcast %5 : vector<1x64xf32> to vector<17x64xf32>
    %27 = arith.mulf %25, %26 : vector<17x64xf32>
    %28 = vector.broadcast %7 : vector<1x64xf32> to vector<17x64xf32>
    %29 = arith.addf %27, %28 : vector<17x64xf32>
    %30 = arith.truncf %29 : vector<17x64xf32> to vector<17x64xbf16>
    %c0_12 = arith.constant 0 : index
    %c0_13 = arith.constant 0 : index
    %c0_14 = arith.constant 0 : index
    %31 = vector.load %arg9[%c0_12, %c0_13, %c0_14] : memref<1x64x192xbf16, #tpu.memory_space<vmem>>, vector<1x64x192xbf16>
    %32 = vector.shape_cast %31 : vector<1x64x192xbf16> to vector<64x192xbf16>
    %cst_15 = arith.constant dense<0.000000e+00> : vector<17x192xf32>
    %33 = tpu.matmul %30, %32, %cst_15 {dimension_numbers = #tpu.dot_dimension_numbers<[1], [0], [0], [1], [0, 0, 1, 1], [], []>} : vector<17x64xbf16>, vector<64x192xbf16>, vector<17x192xf32> -> vector<17x192xf32>
    %c0_16 = arith.constant 0 : index
    %c0_17 = arith.constant 0 : index
    %c0_18 = arith.constant 0 : index
    %34 = vector.load %arg10[%c0_16, %c0_17, %c0_18] : memref<1x1x192xf32, #tpu.memory_space<vmem>>, vector<1x1x192xf32>
    %35 = vector.shape_cast %34 : vector<1x1x192xf32> to vector<1x192xf32>
    %36 = vector.broadcast %35 : vector<1x192xf32> to vector<17x192xf32>
    %37 = arith.addf %33, %36 : vector<17x192xf32>
    %38 = vector.extract_strided_slice %37 {offsets = [0, 0], sizes = [17, 16], strides = [1, 1]} : vector<17x192xf32> to vector<17x16xf32>
    %cst_19 = arith.constant 2.500000e-01 : f32
    %39 = vector.broadcast %cst_19 : f32 to vector<17x16xf32>
    %40 = arith.mulf %38, %39 : vector<17x16xf32>
    %41 = vector.extract_strided_slice %37 {offsets = [0, 64], sizes = [17, 16], strides = [1, 1]} : vector<17x192xf32> to vector<17x16xf32>
    %42 = vector.extract_strided_slice %37 {offsets = [0, 128], sizes = [17, 16], strides = [1, 1]} : vector<17x192xf32> to vector<17x16xf32>
    %cst_20 = arith.constant dense<0.000000e+00> : vector<17x17xf32>
    %43 = tpu.matmul %40, %41, %cst_20 {dimension_numbers = #tpu.dot_dimension_numbers<[1], [1], [0], [0], [0, 0, 1, 0], [], []>} : vector<17x16xf32>, vector<17x16xf32>, vector<17x17xf32> -> vector<17x17xf32>
    %cst_21 = arith.constant dense<0xFF800000> : vector<17xf32>
    %44 = vector.multi_reduction <maximumf>, %43, %cst_21 [1] : vector<17x17xf32> to vector<17xf32>
    %45 = vector.shape_cast %44 : vector<17xf32> to vector<17x1xf32>
    %46 = vector.broadcast %45 : vector<17x1xf32> to vector<17x17xf32>
    %47 = arith.subf %43, %46 : vector<17x17xf32>
    %48 = math.exp %47 : vector<17x17xf32>
    %cst_22 = arith.constant dense<0.000000e+00> : vector<17xf32>
    %49 = vector.multi_reduction <add>, %48, %cst_22 [1] : vector<17x17xf32> to vector<17xf32>
    %50 = vector.shape_cast %49 : vector<17xf32> to vector<17x1xf32>
    %51 = tpu.reciprocal %50 {approx = true} : vector<17x1xf32> -> vector<17x1xf32>
    %52 = vector.broadcast %51 : vector<17x1xf32> to vector<17x17xf32>
    %53 = arith.mulf %48, %52 : vector<17x17xf32>
    %cst_23 = arith.constant dense<0.000000e+00> : vector<17x16xf32>
    %54 = tpu.matmul %53, %42, %cst_23 {dimension_numbers = #tpu.dot_dimension_numbers<[1], [0], [0], [1], [0, 0, 1, 1], [], []>} : vector<17x17xf32>, vector<17x16xf32>, vector<17x16xf32> -> vector<17x16xf32>
    %55 = vector.extract_strided_slice %37 {offsets = [0, 16], sizes = [17, 16], strides = [1, 1]} : vector<17x192xf32> to vector<17x16xf32>
    %cst_24 = arith.constant 2.500000e-01 : f32
    %56 = vector.broadcast %cst_24 : f32 to vector<17x16xf32>
    %57 = arith.mulf %55, %56 : vector<17x16xf32>
    %58 = vector.extract_strided_slice %37 {offsets = [0, 80], sizes = [17, 16], strides = [1, 1]} : vector<17x192xf32> to vector<17x16xf32>
    %59 = vector.extract_strided_slice %37 {offsets = [0, 144], sizes = [17, 16], strides = [1, 1]} : vector<17x192xf32> to vector<17x16xf32>
    %cst_25 = arith.constant dense<0.000000e+00> : vector<17x17xf32>
    %60 = tpu.matmul %57, %58, %cst_25 {dimension_numbers = #tpu.dot_dimension_numbers<[1], [1], [0], [0], [0, 0, 1, 0], [], []>} : vector<17x16xf32>, vector<17x16xf32>, vector<17x17xf32> -> vector<17x17xf32>
    %cst_26 = arith.constant dense<0xFF800000> : vector<17xf32>
    %61 = vector.multi_reduction <maximumf>, %60, %cst_26 [1] : vector<17x17xf32> to vector<17xf32>
    %62 = vector.shape_cast %61 : vector<17xf32> to vector<17x1xf32>
    %63 = vector.broadcast %62 : vector<17x1xf32> to vector<17x17xf32>
    %64 = arith.subf %60, %63 : vector<17x17xf32>
    %65 = math.exp %64 : vector<17x17xf32>
    %cst_27 = arith.constant dense<0.000000e+00> : vector<17xf32>
    %66 = vector.multi_reduction <add>, %65, %cst_27 [1] : vector<17x17xf32> to vector<17xf32>
    %67 = vector.shape_cast %66 : vector<17xf32> to vector<17x1xf32>
    %68 = tpu.reciprocal %67 {approx = true} : vector<17x1xf32> -> vector<17x1xf32>
    %69 = vector.broadcast %68 : vector<17x1xf32> to vector<17x17xf32>
    %70 = arith.mulf %65, %69 : vector<17x17xf32>
    %cst_28 = arith.constant dense<0.000000e+00> : vector<17x16xf32>
    %71 = tpu.matmul %70, %59, %cst_28 {dimension_numbers = #tpu.dot_dimension_numbers<[1], [0], [0], [1], [0, 0, 1, 1], [], []>} : vector<17x17xf32>, vector<17x16xf32>, vector<17x16xf32> -> vector<17x16xf32>
    %72 = vector.extract_strided_slice %37 {offsets = [0, 32], sizes = [17, 16], strides = [1, 1]} : vector<17x192xf32> to vector<17x16xf32>
    %cst_29 = arith.constant 2.500000e-01 : f32
    %73 = vector.broadcast %cst_29 : f32 to vector<17x16xf32>
    %74 = arith.mulf %72, %73 : vector<17x16xf32>
    %75 = vector.extract_strided_slice %37 {offsets = [0, 96], sizes = [17, 16], strides = [1, 1]} : vector<17x192xf32> to vector<17x16xf32>
    %76 = vector.extract_strided_slice %37 {offsets = [0, 160], sizes = [17, 16], strides = [1, 1]} : vector<17x192xf32> to vector<17x16xf32>
    %cst_30 = arith.constant dense<0.000000e+00> : vector<17x17xf32>
    %77 = tpu.matmul %74, %75, %cst_30 {dimension_numbers = #tpu.dot_dimension_numbers<[1], [1], [0], [0], [0, 0, 1, 0], [], []>} : vector<17x16xf32>, vector<17x16xf32>, vector<17x17xf32> -> vector<17x17xf32>
    %cst_31 = arith.constant dense<0xFF800000> : vector<17xf32>
    %78 = vector.multi_reduction <maximumf>, %77, %cst_31 [1] : vector<17x17xf32> to vector<17xf32>
    %79 = vector.shape_cast %78 : vector<17xf32> to vector<17x1xf32>
    %80 = vector.broadcast %79 : vector<17x1xf32> to vector<17x17xf32>
    %81 = arith.subf %77, %80 : vector<17x17xf32>
    %82 = math.exp %81 : vector<17x17xf32>
    %cst_32 = arith.constant dense<0.000000e+00> : vector<17xf32>
    %83 = vector.multi_reduction <add>, %82, %cst_32 [1] : vector<17x17xf32> to vector<17xf32>
    %84 = vector.shape_cast %83 : vector<17xf32> to vector<17x1xf32>
    %85 = tpu.reciprocal %84 {approx = true} : vector<17x1xf32> -> vector<17x1xf32>
    %86 = vector.broadcast %85 : vector<17x1xf32> to vector<17x17xf32>
    %87 = arith.mulf %82, %86 : vector<17x17xf32>
    %cst_33 = arith.constant dense<0.000000e+00> : vector<17x16xf32>
    %88 = tpu.matmul %87, %76, %cst_33 {dimension_numbers = #tpu.dot_dimension_numbers<[1], [0], [0], [1], [0, 0, 1, 1], [], []>} : vector<17x17xf32>, vector<17x16xf32>, vector<17x16xf32> -> vector<17x16xf32>
    %89 = vector.extract_strided_slice %37 {offsets = [0, 48], sizes = [17, 16], strides = [1, 1]} : vector<17x192xf32> to vector<17x16xf32>
    %cst_34 = arith.constant 2.500000e-01 : f32
    %90 = vector.broadcast %cst_34 : f32 to vector<17x16xf32>
    %91 = arith.mulf %89, %90 : vector<17x16xf32>
    %92 = vector.extract_strided_slice %37 {offsets = [0, 112], sizes = [17, 16], strides = [1, 1]} : vector<17x192xf32> to vector<17x16xf32>
    %93 = vector.extract_strided_slice %37 {offsets = [0, 176], sizes = [17, 16], strides = [1, 1]} : vector<17x192xf32> to vector<17x16xf32>
    %cst_35 = arith.constant dense<0.000000e+00> : vector<17x17xf32>
    %94 = tpu.matmul %91, %92, %cst_35 {dimension_numbers = #tpu.dot_dimension_numbers<[1], [1], [0], [0], [0, 0, 1, 0], [], []>} : vector<17x16xf32>, vector<17x16xf32>, vector<17x17xf32> -> vector<17x17xf32>
    %cst_36 = arith.constant dense<0xFF800000> : vector<17xf32>
    %95 = vector.multi_reduction <maximumf>, %94, %cst_36 [1] : vector<17x17xf32> to vector<17xf32>
    %96 = vector.shape_cast %95 : vector<17xf32> to vector<17x1xf32>
    %97 = vector.broadcast %96 : vector<17x1xf32> to vector<17x17xf32>
    %98 = arith.subf %94, %97 : vector<17x17xf32>
    %99 = math.exp %98 : vector<17x17xf32>
    %cst_37 = arith.constant dense<0.000000e+00> : vector<17xf32>
    %100 = vector.multi_reduction <add>, %99, %cst_37 [1] : vector<17x17xf32> to vector<17xf32>
    %101 = vector.shape_cast %100 : vector<17xf32> to vector<17x1xf32>
    %102 = tpu.reciprocal %101 {approx = true} : vector<17x1xf32> -> vector<17x1xf32>
    %103 = vector.broadcast %102 : vector<17x1xf32> to vector<17x17xf32>
    %104 = arith.mulf %99, %103 : vector<17x17xf32>
    %cst_38 = arith.constant dense<0.000000e+00> : vector<17x16xf32>
    %105 = tpu.matmul %104, %93, %cst_38 {dimension_numbers = #tpu.dot_dimension_numbers<[1], [0], [0], [1], [0, 0, 1, 1], [], []>} : vector<17x17xf32>, vector<17x16xf32>, vector<17x16xf32> -> vector<17x16xf32>
    %106 = tpu.concatenate %54, %71, %88, %105 in 1 : vector<17x16xf32>, vector<17x16xf32>, vector<17x16xf32>, vector<17x16xf32> -> vector<17x64xf32>
    %107 = arith.truncf %106 : vector<17x64xf32> to vector<17x64xbf16>
    %c0_39 = arith.constant 0 : index
    %c0_40 = arith.constant 0 : index
    %c0_41 = arith.constant 0 : index
    %108 = vector.load %arg11[%c0_39, %c0_40, %c0_41] : memref<1x64x64xbf16, #tpu.memory_space<vmem>>, vector<1x64x64xbf16>
    %109 = vector.shape_cast %108 : vector<1x64x64xbf16> to vector<64x64xbf16>
    %cst_42 = arith.constant dense<0.000000e+00> : vector<17x64xf32>
    %110 = tpu.matmul %107, %109, %cst_42 {dimension_numbers = #tpu.dot_dimension_numbers<[1], [0], [0], [1], [0, 0, 1, 1], [], []>} : vector<17x64xbf16>, vector<64x64xbf16>, vector<17x64xf32> -> vector<17x64xf32>
    %c0_43 = arith.constant 0 : index
    %c0_44 = arith.constant 0 : index
    %c0_45 = arith.constant 0 : index
    %111 = vector.load %arg12[%c0_43, %c0_44, %c0_45] : memref<1x1x64xf32, #tpu.memory_space<vmem>>, vector<1x1x64xf32>
    %112 = vector.shape_cast %111 : vector<1x1x64xf32> to vector<1x64xf32>
    %113 = vector.broadcast %112 : vector<1x64xf32> to vector<17x64xf32>
    %114 = arith.addf %110, %113 : vector<17x64xf32>
    %115 = arith.addf %114, %3 : vector<17x64xf32>
    %c0_46 = arith.constant 0 : index
    %c0_47 = arith.constant 0 : index
    %c0_48 = arith.constant 0 : index
    %116 = vector.load %arg13[%c0_46, %c0_47, %c0_48] : memref<1x1x64xf32, #tpu.memory_space<vmem>>, vector<1x1x64xf32>
    %117 = vector.shape_cast %116 : vector<1x1x64xf32> to vector<1x64xf32>
    %c0_49 = arith.constant 0 : index
    %c0_50 = arith.constant 0 : index
    %c0_51 = arith.constant 0 : index
    %118 = vector.load %arg14[%c0_49, %c0_50, %c0_51] : memref<1x1x64xf32, #tpu.memory_space<vmem>>, vector<1x1x64xf32>
    %119 = vector.shape_cast %118 : vector<1x1x64xf32> to vector<1x64xf32>
    %cst_52 = arith.constant dense<0.000000e+00> : vector<17xf32>
    %120 = vector.multi_reduction <add>, %115, %cst_52 [1] : vector<17x64xf32> to vector<17xf32>
    %121 = vector.shape_cast %120 : vector<17xf32> to vector<17x1xf32>
    %cst_53 = arith.constant 6.400000e+01 : f32
    %122 = vector.broadcast %cst_53 : f32 to vector<17x1xf32>
    %123 = arith.divf %121, %122 : vector<17x1xf32>
    %124 = vector.broadcast %123 : vector<17x1xf32> to vector<17x64xf32>
    %125 = arith.subf %115, %124 : vector<17x64xf32>
    %126 = arith.mulf %125, %125 : vector<17x64xf32>
    %cst_54 = arith.constant dense<0.000000e+00> : vector<17xf32>
    %127 = vector.multi_reduction <add>, %126, %cst_54 [1] : vector<17x64xf32> to vector<17xf32>
    %128 = vector.shape_cast %127 : vector<17xf32> to vector<17x1xf32>
    %cst_55 = arith.constant 6.400000e+01 : f32
    %129 = vector.broadcast %cst_55 : f32 to vector<17x1xf32>
    %130 = arith.divf %128, %129 : vector<17x1xf32>
    %131 = vector.broadcast %123 : vector<17x1xf32> to vector<17x64xf32>
    %132 = arith.subf %115, %131 : vector<17x64xf32>
    %cst_56 = arith.constant 9.99999974E-6 : f32
    %133 = vector.broadcast %cst_56 : f32 to vector<17x1xf32>
    %134 = arith.addf %130, %133 : vector<17x1xf32>
    %135 = math.rsqrt %134 : vector<17x1xf32>
    %136 = vector.broadcast %135 : vector<17x1xf32> to vector<17x64xf32>
    %137 = arith.mulf %132, %136 : vector<17x64xf32>
    %138 = vector.broadcast %117 : vector<1x64xf32> to vector<17x64xf32>
    %139 = arith.mulf %137, %138 : vector<17x64xf32>
    %140 = vector.broadcast %119 : vector<1x64xf32> to vector<17x64xf32>
    %141 = arith.addf %139, %140 : vector<17x64xf32>
    %142 = arith.truncf %141 : vector<17x64xf32> to vector<17x64xbf16>
    %c0_57 = arith.constant 0 : index
    %c0_58 = arith.constant 0 : index
    %c0_59 = arith.constant 0 : index
    %143 = vector.load %arg15[%c0_57, %c0_58, %c0_59] : memref<1x64x128xbf16, #tpu.memory_space<vmem>>, vector<1x64x128xbf16>
    %144 = vector.shape_cast %143 : vector<1x64x128xbf16> to vector<64x128xbf16>
    %cst_60 = arith.constant dense<0.000000e+00> : vector<17x128xf32>
    %145 = tpu.matmul %142, %144, %cst_60 {dimension_numbers = #tpu.dot_dimension_numbers<[1], [0], [0], [1], [0, 0, 1, 1], [], []>} : vector<17x64xbf16>, vector<64x128xbf16>, vector<17x128xf32> -> vector<17x128xf32>
    %c0_61 = arith.constant 0 : index
    %c0_62 = arith.constant 0 : index
    %c0_63 = arith.constant 0 : index
    %146 = vector.load %arg16[%c0_61, %c0_62, %c0_63] : memref<1x1x128xf32, #tpu.memory_space<vmem>>, vector<1x1x128xf32>
    %147 = vector.shape_cast %146 : vector<1x1x128xf32> to vector<1x128xf32>
    %148 = vector.broadcast %147 : vector<1x128xf32> to vector<17x128xf32>
    %149 = arith.addf %145, %148 : vector<17x128xf32>
    %cst_64 = arith.constant 5.000000e-01 : f32
    %150 = vector.broadcast %cst_64 : f32 to vector<17x128xf32>
    %151 = arith.mulf %150, %149 : vector<17x128xf32>
    %cst_65 = arith.constant 0.707106769 : f32
    %152 = vector.broadcast %cst_65 : f32 to vector<17x128xf32>
    %153 = arith.mulf %149, %152 : vector<17x128xf32>
    %cst_66 = arith.constant 0.000000e+00 : f32
    %154 = vector.broadcast %cst_66 : f32 to vector<17x128xf32>
    %155 = arith.cmpf oge, %153, %154 : vector<17x128xf32>
    %cst_67 = arith.constant 1.000000e+00 : f32
    %cst_68 = arith.constant -1.000000e+00 : f32
    %156 = vector.broadcast %cst_67 : f32 to vector<17x128xf32>
    %157 = vector.broadcast %cst_68 : f32 to vector<17x128xf32>
    %158 = arith.select %155, %156, %157 : vector<17x128xi1>, vector<17x128xf32>
    %159 = math.absf %153 : vector<17x128xf32>
    %cst_69 = arith.constant 0.327591091 : f32
    %160 = vector.broadcast %cst_69 : f32 to vector<17x128xf32>
    %161 = arith.mulf %160, %159 : vector<17x128xf32>
    %cst_70 = arith.constant 1.000000e+00 : f32
    %162 = vector.broadcast %cst_70 : f32 to vector<17x128xf32>
    %163 = arith.addf %162, %161 : vector<17x128xf32>
    %cst_71 = arith.constant 1.000000e+00 : f32
    %164 = vector.broadcast %cst_71 : f32 to vector<17x128xf32>
    %165 = arith.divf %164, %163 : vector<17x128xf32>
    %cst_72 = arith.constant 1.06140542 : f32
    %166 = vector.broadcast %cst_72 : f32 to vector<17x128xf32>
    %167 = arith.mulf %166, %165 : vector<17x128xf32>
    %cst_73 = arith.constant -1.45315206 : f32
    %168 = vector.broadcast %cst_73 : f32 to vector<17x128xf32>
    %169 = arith.addf %167, %168 : vector<17x128xf32>
    %170 = arith.mulf %169, %165 : vector<17x128xf32>
    %cst_74 = arith.constant 1.42141378 : f32
    %171 = vector.broadcast %cst_74 : f32 to vector<17x128xf32>
    %172 = arith.addf %170, %171 : vector<17x128xf32>
    %173 = arith.mulf %172, %165 : vector<17x128xf32>
    %cst_75 = arith.constant -0.284496725 : f32
    %174 = vector.broadcast %cst_75 : f32 to vector<17x128xf32>
    %175 = arith.addf %173, %174 : vector<17x128xf32>
    %176 = arith.mulf %175, %165 : vector<17x128xf32>
    %cst_76 = arith.constant 0.254829586 : f32
    %177 = vector.broadcast %cst_76 : f32 to vector<17x128xf32>
    %178 = arith.addf %176, %177 : vector<17x128xf32>
    %179 = arith.mulf %178, %165 : vector<17x128xf32>
    %cst_77 = arith.constant 0.000000e+00 : f32
    %180 = vector.broadcast %cst_77 : f32 to vector<17x128xf32>
    %181 = arith.subf %180, %159 : vector<17x128xf32>
    %182 = arith.mulf %181, %159 : vector<17x128xf32>
    %183 = math.exp %182 : vector<17x128xf32>
    %184 = arith.mulf %179, %183 : vector<17x128xf32>
    %cst_78 = arith.constant 1.000000e+00 : f32
    %185 = vector.broadcast %cst_78 : f32 to vector<17x128xf32>
    %186 = arith.subf %185, %184 : vector<17x128xf32>
    %187 = arith.mulf %158, %186 : vector<17x128xf32>
    %cst_79 = arith.constant 1.000000e+00 : f32
    %188 = vector.broadcast %cst_79 : f32 to vector<17x128xf32>
    %189 = arith.addf %188, %187 : vector<17x128xf32>
    %190 = arith.mulf %151, %189 : vector<17x128xf32>
    %191 = arith.truncf %190 : vector<17x128xf32> to vector<17x128xbf16>
    %c0_80 = arith.constant 0 : index
    %c0_81 = arith.constant 0 : index
    %c0_82 = arith.constant 0 : index
    %192 = vector.load %arg17[%c0_80, %c0_81, %c0_82] : memref<1x128x64xbf16, #tpu.memory_space<vmem>>, vector<1x128x64xbf16>
    %193 = vector.shape_cast %192 : vector<1x128x64xbf16> to vector<128x64xbf16>
    %cst_83 = arith.constant dense<0.000000e+00> : vector<17x64xf32>
    %194 = tpu.matmul %191, %193, %cst_83 {dimension_numbers = #tpu.dot_dimension_numbers<[1], [0], [0], [1], [0, 0, 1, 1], [], []>} : vector<17x128xbf16>, vector<128x64xbf16>, vector<17x64xf32> -> vector<17x64xf32>
    %c0_84 = arith.constant 0 : index
    %c0_85 = arith.constant 0 : index
    %c0_86 = arith.constant 0 : index
    %195 = vector.load %arg18[%c0_84, %c0_85, %c0_86] : memref<1x1x64xf32, #tpu.memory_space<vmem>>, vector<1x1x64xf32>
    %196 = vector.shape_cast %195 : vector<1x1x64xf32> to vector<1x64xf32>
    %197 = vector.broadcast %196 : vector<1x64xf32> to vector<17x64xf32>
    %198 = arith.addf %194, %197 : vector<17x64xf32>
    %199 = arith.addf %198, %115 : vector<17x64xf32>
    %c0_87 = arith.constant 0 : index
    %c0_88 = arith.constant 0 : index
    %200 = vector.load %arg26[%c0_87, %c0_88] : memref<17x64xf32, #tpu.memory_space<vmem>>, vector<17x64xf32>
    tpu.vector_store %arg26[%c0_87, %c0_88], %199 {strides = array<i32>} : memref<17x64xf32, #tpu.memory_space<vmem>>, vector<17x64xf32>,
    %c1_i32 = arith.constant 1 : i32
    %201 = arith.cmpi eq, %arg1, %c1_i32 : i32
    %202 = arith.extui %201 : i1 to i32
    %c0_i32_89 = arith.constant 0 : i32
    %203 = arith.cmpi ne, %202, %c0_i32_89 : i32
    scf.if %203 {
      %204 = vector.extract_strided_slice %199 {offsets = [0, 0], sizes = [1, 64], strides = [1, 1]} : vector<17x64xf32> to vector<1x64xf32>
      %c0_90 = arith.constant 0 : index
      %c0_91 = arith.constant 0 : index
      %205 = vector.load %arg19[%c0_90, %c0_91] : memref<1x64xf32, #tpu.memory_space<vmem>>, vector<1x64xf32>
      %c0_92 = arith.constant 0 : index
      %c0_93 = arith.constant 0 : index
      %206 = vector.load %arg20[%c0_92, %c0_93] : memref<1x64xf32, #tpu.memory_space<vmem>>, vector<1x64xf32>
      %cst_94 = arith.constant dense<0.000000e+00> : vector<1xf32>
      %207 = vector.multi_reduction <add>, %204, %cst_94 [1] : vector<1x64xf32> to vector<1xf32>
      %208 = vector.shape_cast %207 : vector<1xf32> to vector<1x1xf32>
      %cst_95 = arith.constant 6.400000e+01 : f32
      %209 = vector.broadcast %cst_95 : f32 to vector<1x1xf32>
      %210 = arith.divf %208, %209 : vector<1x1xf32>
      %211 = vector.broadcast %210 : vector<1x1xf32> to vector<1x64xf32>
      %212 = arith.subf %204, %211 : vector<1x64xf32>
      %213 = arith.mulf %212, %212 : vector<1x64xf32>
      %cst_96 = arith.constant dense<0.000000e+00> : vector<1xf32>
      %214 = vector.multi_reduction <add>, %213, %cst_96 [1] : vector<1x64xf32> to vector<1xf32>
      %215 = vector.shape_cast %214 : vector<1xf32> to vector<1x1xf32>
      %cst_97 = arith.constant 6.400000e+01 : f32
      %216 = vector.broadcast %cst_97 : f32 to vector<1x1xf32>
      %217 = arith.divf %215, %216 : vector<1x1xf32>
      %218 = vector.broadcast %210 : vector<1x1xf32> to vector<1x64xf32>
      %219 = arith.subf %204, %218 : vector<1x64xf32>
      %cst_98 = arith.constant 9.99999974E-6 : f32
      %220 = vector.broadcast %cst_98 : f32 to vector<1x1xf32>
      %221 = arith.addf %217, %220 : vector<1x1xf32>
      %222 = math.rsqrt %221 : vector<1x1xf32>
      %223 = vector.broadcast %222 : vector<1x1xf32> to vector<1x64xf32>
      %224 = arith.mulf %219, %223 : vector<1x64xf32>
      %225 = arith.mulf %224, %205 : vector<1x64xf32>
      %226 = arith.addf %225, %206 : vector<1x64xf32>
      %227 = arith.truncf %226 : vector<1x64xf32> to vector<1x64xbf16>
      %c0_99 = arith.constant 0 : index
      %c0_100 = arith.constant 0 : index
      %228 = vector.load %arg21[%c0_99, %c0_100] : memref<64x128xbf16, #tpu.memory_space<vmem>>, vector<64x128xbf16>
      %cst_101 = arith.constant dense<0.000000e+00> : vector<1x128xf32>
      %229 = tpu.matmul %227, %228, %cst_101 {dimension_numbers = #tpu.dot_dimension_numbers<[1], [0], [0], [1], [0, 0, 1, 1], [], []>} : vector<1x64xbf16>, vector<64x128xbf16>, vector<1x128xf32> -> vector<1x128xf32>
      %c0_102 = arith.constant 0 : index
      %c0_103 = arith.constant 0 : index
      %230 = vector.load %arg22[%c0_102, %c0_103] : memref<1x128xf32, #tpu.memory_space<vmem>>, vector<1x128xf32>
      %231 = arith.addf %229, %230 : vector<1x128xf32>
      %232 = math.tanh %231 : vector<1x128xf32>
      %233 = arith.truncf %232 : vector<1x128xf32> to vector<1x128xbf16>
      %c0_104 = arith.constant 0 : index
      %c0_105 = arith.constant 0 : index
      %234 = vector.load %arg23[%c0_104, %c0_105] : memref<128x128xbf16, #tpu.memory_space<vmem>>, vector<128x128xbf16>
      %cst_106 = arith.constant dense<0.000000e+00> : vector<1x128xf32>
      %235 = tpu.matmul %233, %234, %cst_106 {dimension_numbers = #tpu.dot_dimension_numbers<[1], [0], [0], [1], [0, 0, 1, 1], [], []>} : vector<1x128xbf16>, vector<128x128xbf16>, vector<1x128xf32> -> vector<1x128xf32>
      %c0_107 = arith.constant 0 : index
      %c0_108 = arith.constant 0 : index
      %236 = vector.load %arg24[%c0_107, %c0_108] : memref<1x128xf32, #tpu.memory_space<vmem>>, vector<1x128xf32>
      %237 = arith.addf %235, %236 : vector<1x128xf32>
      %c0_109 = arith.constant 0 : index
      %c0_110 = arith.constant 0 : index
      %c0_111 = arith.constant 0 : index
      %238 = vector.load %arg25[%c0_109, %c0_110, %c0_111] : memref<1x1x128xf32, #tpu.memory_space<vmem>>, vector<1x1x128xf32>
      %239 = vector.shape_cast %238 : vector<1x1x128xf32> to vector<1x128xf32>
      %240 = vector.shape_cast %237 : vector<1x128xf32> to vector<1x1x128xf32>
      tpu.vector_store %arg25[%c0_109, %c0_110, %c0_111], %240 {strides = array<i32>} : memref<1x1x128xf32, #tpu.memory_space<vmem>>, vector<1x1x128xf32>,
    } else {
    }
    return
  }
  func.func @transform_0(%arg0: i32, %arg1: i32) -> (i32, i32, i32) {
    %c0_i32 = arith.constant 0 : i32
    %c0_i32_0 = arith.constant 0 : i32
    %c0_i32_1 = arith.constant 0 : i32
    return %arg0, %c0_i32, %c0_i32_0 : i32, i32, i32
  }
  func.func @transform_1(%arg0: i32, %arg1: i32) -> (i32, i32) {
    %c0_i32 = arith.constant 0 : i32
    %c0_i32_0 = arith.constant 0 : i32
    %c0_i32_1 = arith.constant 0 : i32
    return %c0_i32, %c0_i32_0 : i32, i32
  }
  func.func @transform_2(%arg0: i32, %arg1: i32) -> (i32, i32) {
    %c0_i32 = arith.constant 0 : i32
    %c0_i32_0 = arith.constant 0 : i32
    %c0_i32_1 = arith.constant 0 : i32
    return %c0_i32, %c0_i32_0 : i32, i32
  }
  func.func @transform_3(%arg0: i32, %arg1: i32) -> (i32, i32) {
    %c0_i32 = arith.constant 0 : i32
    %c0_i32_0 = arith.constant 0 : i32
    %c0_i32_1 = arith.constant 0 : i32
    return %c0_i32, %c0_i32_0 : i32, i32
  }
  func.func @transform_4(%arg0: i32, %arg1: i32) -> (i32, i32) {
    %c0_i32 = arith.constant 0 : i32
    %c0_i32_0 = arith.constant 0 : i32
    %c0_i32_1 = arith.constant 0 : i32
    return %c0_i32, %c0_i32_0 : i32, i32
  }
  func.func @transform_5(%arg0: i32, %arg1: i32) -> (i32, i32, i32) {
    %c0_i32 = arith.constant 0 : i32
    %c0_i32_0 = arith.constant 0 : i32
    %c0_i32_1 = arith.constant 0 : i32
    return %arg1, %c0_i32, %c0_i32_0 : i32, i32, i32
  }
  func.func @transform_6(%arg0: i32, %arg1: i32) -> (i32, i32, i32) {
    %c0_i32 = arith.constant 0 : i32
    %c0_i32_0 = arith.constant 0 : i32
    %c0_i32_1 = arith.constant 0 : i32
    return %arg1, %c0_i32, %c0_i32_0 : i32, i32, i32
  }
  func.func @transform_7(%arg0: i32, %arg1: i32) -> (i32, i32, i32) {
    %c0_i32 = arith.constant 0 : i32
    %c0_i32_0 = arith.constant 0 : i32
    %c0_i32_1 = arith.constant 0 : i32
    return %arg1, %c0_i32, %c0_i32_0 : i32, i32, i32
  }
  func.func @transform_8(%arg0: i32, %arg1: i32) -> (i32, i32, i32) {
    %c0_i32 = arith.constant 0 : i32
    %c0_i32_0 = arith.constant 0 : i32
    %c0_i32_1 = arith.constant 0 : i32
    return %arg1, %c0_i32, %c0_i32_0 : i32, i32, i32
  }
  func.func @transform_9(%arg0: i32, %arg1: i32) -> (i32, i32, i32) {
    %c0_i32 = arith.constant 0 : i32
    %c0_i32_0 = arith.constant 0 : i32
    %c0_i32_1 = arith.constant 0 : i32
    return %arg1, %c0_i32, %c0_i32_0 : i32, i32, i32
  }
  func.func @transform_10(%arg0: i32, %arg1: i32) -> (i32, i32, i32) {
    %c0_i32 = arith.constant 0 : i32
    %c0_i32_0 = arith.constant 0 : i32
    %c0_i32_1 = arith.constant 0 : i32
    return %arg1, %c0_i32, %c0_i32_0 : i32, i32, i32
  }
  func.func @transform_11(%arg0: i32, %arg1: i32) -> (i32, i32, i32) {
    %c0_i32 = arith.constant 0 : i32
    %c0_i32_0 = arith.constant 0 : i32
    %c0_i32_1 = arith.constant 0 : i32
    return %arg1, %c0_i32, %c0_i32_0 : i32, i32, i32
  }
  func.func @transform_12(%arg0: i32, %arg1: i32) -> (i32, i32, i32) {
    %c0_i32 = arith.constant 0 : i32
    %c0_i32_0 = arith.constant 0 : i32
    %c0_i32_1 = arith.constant 0 : i32
    return %arg1, %c0_i32, %c0_i32_0 : i32, i32, i32
  }
  func.func @transform_13(%arg0: i32, %arg1: i32) -> (i32, i32, i32) {
    %c0_i32 = arith.constant 0 : i32
    %c0_i32_0 = arith.constant 0 : i32
    %c0_i32_1 = arith.constant 0 : i32
    return %arg1, %c0_i32, %c0_i32_0 : i32, i32, i32
  }
  func.func @transform_14(%arg0: i32, %arg1: i32) -> (i32, i32, i32) {
    %c0_i32 = arith.constant 0 : i32
    %c0_i32_0 = arith.constant 0 : i32
    %c0_i32_1 = arith.constant 0 : i32
    return %arg1, %c0_i32, %c0_i32_0 : i32, i32, i32
  }
  func.func @transform_15(%arg0: i32, %arg1: i32) -> (i32, i32, i32) {
    %c0_i32 = arith.constant 0 : i32
    %c0_i32_0 = arith.constant 0 : i32
    %c0_i32_1 = arith.constant 0 : i32
    return %arg1, %c0_i32, %c0_i32_0 : i32, i32, i32
  }
  func.func @transform_16(%arg0: i32, %arg1: i32) -> (i32, i32, i32) {
    %c0_i32 = arith.constant 0 : i32
    %c0_i32_0 = arith.constant 0 : i32
    %c0_i32_1 = arith.constant 0 : i32
    return %arg1, %c0_i32, %c0_i32_0 : i32, i32, i32
  }
  func.func @transform_17(%arg0: i32, %arg1: i32) -> (i32, i32) {
    %c0_i32 = arith.constant 0 : i32
    %c0_i32_0 = arith.constant 0 : i32
    %c0_i32_1 = arith.constant 0 : i32
    return %c0_i32, %c0_i32_0 : i32, i32
  }
  func.func @transform_18(%arg0: i32, %arg1: i32) -> (i32, i32) {
    %c0_i32 = arith.constant 0 : i32
    %c0_i32_0 = arith.constant 0 : i32
    %c0_i32_1 = arith.constant 0 : i32
    return %c0_i32, %c0_i32_0 : i32, i32
  }
  func.func @transform_19(%arg0: i32, %arg1: i32) -> (i32, i32) {
    %c0_i32 = arith.constant 0 : i32
    %c0_i32_0 = arith.constant 0 : i32
    %c0_i32_1 = arith.constant 0 : i32
    return %c0_i32, %c0_i32_0 : i32, i32
  }
  func.func @transform_20(%arg0: i32, %arg1: i32) -> (i32, i32) {
    %c0_i32 = arith.constant 0 : i32
    %c0_i32_0 = arith.constant 0 : i32
    %c0_i32_1 = arith.constant 0 : i32
    return %c0_i32, %c0_i32_0 : i32, i32
  }
  func.func @transform_21(%arg0: i32, %arg1: i32) -> (i32, i32) {
    %c0_i32 = arith.constant 0 : i32
    %c0_i32_0 = arith.constant 0 : i32
    %c0_i32_1 = arith.constant 0 : i32
    return %c0_i32, %c0_i32_0 : i32, i32
  }
  func.func @transform_22(%arg0: i32, %arg1: i32) -> (i32, i32) {
    %c0_i32 = arith.constant 0 : i32
    %c0_i32_0 = arith.constant 0 : i32
    %c0_i32_1 = arith.constant 0 : i32
    return %c0_i32, %c0_i32_0 : i32, i32
  }
  func.func @transform_23(%arg0: i32, %arg1: i32) -> (i32, i32, i32) {
    %c0_i32 = arith.constant 0 : i32
    %c0_i32_0 = arith.constant 0 : i32
    %c0_i32_1 = arith.constant 0 : i32
    return %arg0, %c0_i32, %c0_i32_0 : i32, i32, i32
  }
}

</mosaic_0001>

<llo_original>
// kernel: vit_forward.1
$region0: #{vit_forward.1}
  #allocation0 [shape = 'u32[]', space=smem, size = 0x4, offset = 0x4, fixed_abs, tag = 'smem constant byte address 0x4 - core index']
  #allocation1 [shape = 'u32[144,128]{1,0:T(1,128)}', space=vmem, size = 0x12000, scoped, tag = 'internal scratch']
  #allocation2 [shape = 'f32[17,64]{1,0:T(8,128)}', space=vmem, size = 0x3000, scoped, tag = 'scratch operand']
  %s0 = inlined_call_operand.vmem [shape: f32[2,16,48], index: 0, kind: input, shape index: {}]
  %s1 = inlined_call_operand.vmem [shape: bf16[48,64], index: 1, kind: input, shape index: {}]
  %s2 = inlined_call_operand.vmem [shape: f32[1,64], index: 2, kind: input, shape index: {}, may-alias: {2,18}]
  %s3 = inlined_call_operand.vmem [shape: f32[1,64], index: 3, kind: input, shape index: {}]
  %s4 = inlined_call_operand.vmem [shape: f32[17,64], index: 4, kind: input, shape index: {}]
  %s5 = inlined_call_operand.vmem [shape: f32[2,1,64], index: 5, kind: input, shape index: {}, may-alias: {5,11}]
  %s6 = inlined_call_operand.vmem [shape: f32[2,1,64], index: 6, kind: input, shape index: {}, may-alias: {6,10,12,16}]
  %s7 = inlined_call_operand.vmem [shape: bf16[2,64,192], index: 7, kind: input, shape index: {}]
  %s8 = inlined_call_operand.vmem [shape: f32[2,1,192], index: 8, kind: input, shape index: {}]
  %s9 = inlined_call_operand.vmem [shape: bf16[2,64,64], index: 9, kind: input, shape index: {}]
  %s10 = inlined_call_operand.vmem [shape: f32[2,1,64], index: 10, kind: input, shape index: {}, may-alias: {6,10,12,16}]
  %s11 = inlined_call_operand.vmem [shape: f32[2,1,64], index: 11, kind: input, shape index: {}, may-alias: {5,11}]
  %s12 = inlined_call_operand.vmem [shape: f32[2,1,64], index: 12, kind: input, shape index: {}, may-alias: {6,10,12,16}]
  %s13 = inlined_call_operand.vmem [shape: bf16[2,64,128], index: 13, kind: input, shape index: {}]
  %s14 = inlined_call_operand.vmem [shape: f32[2,1,128], index: 14, kind: input, shape index: {}]
  %s15 = inlined_call_operand.vmem [shape: bf16[2,128,64], index: 15, kind: input, shape index: {}]
  %s16 = inlined_call_operand.vmem [shape: f32[2,1,64], index: 16, kind: input, shape index: {}, may-alias: {6,10,12,16}]
  %s17 = inlined_call_operand.vmem [shape: f32[1,64], index: 17, kind: input, shape index: {}]
  %s18 = inlined_call_operand.vmem [shape: f32[1,64], index: 18, kind: input, shape index: {}, may-alias: {2,18}]
  %s19 = inlined_call_operand.vmem [shape: bf16[64,128], index: 19, kind: input, shape index: {}]
  %s20 = inlined_call_operand.vmem [shape: f32[1,128], index: 20, kind: input, shape index: {}, may-alias: {20,22}]
  %s21 = inlined_call_operand.vmem [shape: bf16[128,128], index: 21, kind: input, shape index: {}]
  %s22 = inlined_call_operand.vmem [shape: f32[1,128], index: 22, kind: input, shape index: {}, may-alias: {20,22}]
  %s23 = inlined_call_operand.hbm [shape: f32[2,1,128], index: 23, kind: output, shape index: {}]
  %s24 = sld [smem:[#allocation0]]
  $region133: #{vit_forward.1} parent=0
    _
  %s26 = ssub.s32 1, %s24
  %s27 = scalar_select 0, %s26, %s24
  $region1: #{vit_forward.1} parent=0
    #allocation3 [shape = 'u8[1024]{0}', space=vmem, size = 0x400, scoped, tag = 'output window, operand 0']
    #allocation4 [shape = 's32[2]{0}', space=sflag, size = 0x8, scoped, tag = 'scoped memory for vit_forward.1']
    %28 = vsyncpa [#allocation4], 0
    %s29 = scalar_lea.sflag [#allocation4], 1
    %30 = vsyncpa %s29, 0
    loop: start=0, step=1, limit=6
    $region2: #{vit_forward.1} parent=1 // loop_pre_header
      _
    $region3: #{vit_forward.1} parent=1 // loop_header
      %s32 = sphi 0, %s36
      %p33 = scmp.ge.s32.totalorder %s32, 6
      %s39 = sphi 0, %s51
      %s40 = sphi 0, %s47
      %s41 = sphi 0, %s39
      %s42 = sphi 0, %s40
      %s43 = sphi 0, %s41
      %s44 = sphi 0, %s42
      %s54 = sphi 0, %s56
      %s57 = sphi 0, %s54
      %s58 = sphi 0, %s57
      %s74 = sphi 0, %s58
      %s78 = sphi 0, %s78
      %s80 = sphi 0, %s78
      %s81 = sphi 0, %s80
      %s95 = sphi 0, %s81
      %s99 = sphi 0, %s99
      %s101 = sphi 0, %s99
      %s102 = sphi 0, %s101
      %s116 = sphi 0, %s102
      %s120 = sphi 0, %s120
      %s122 = sphi 0, %s120
      %s123 = sphi 0, %s122
      %s137 = sphi 0, %s123
      %s141 = sphi 0, %s141
      %s143 = sphi 0, %s141
      %s144 = sphi 0, %s143
      %s158 = sphi 0, %s144
      %s164 = sphi 0, %s166
      %s167 = sphi 0, %s164
      %s168 = sphi 0, %s167
      %s184 = sphi 0, %s168
      %s190 = sphi 0, %s192
      %s193 = sphi 0, %s190
      %s194 = sphi 0, %s193
      %s210 = sphi 0, %s194
      %s216 = sphi 0, %s218
      %s219 = sphi 0, %s216
      %s220 = sphi 0, %s219
      %s236 = sphi 0, %s220
      %s242 = sphi 0, %s244
      %s245 = sphi 0, %s242
      %s246 = sphi 0, %s245
      %s262 = sphi 0, %s246
      %s268 = sphi 0, %s270
      %s271 = sphi 0, %s268
      %s272 = sphi 0, %s271
      %s288 = sphi 0, %s272
      %s294 = sphi 0, %s296
      %s297 = sphi 0, %s294
      %s298 = sphi 0, %s297
      %s314 = sphi 0, %s298
      %s320 = sphi 0, %s322
      %s323 = sphi 0, %s320
      %s324 = sphi 0, %s323
      %s340 = sphi 0, %s324
      %s346 = sphi 0, %s348
      %s349 = sphi 0, %s346
      %s350 = sphi 0, %s349
      %s366 = sphi 0, %s350
      %s372 = sphi 0, %s374
      %s375 = sphi 0, %s372
      %s376 = sphi 0, %s375
      %s392 = sphi 0, %s376
      %s398 = sphi 0, %s400
      %s401 = sphi 0, %s398
      %s402 = sphi 0, %s401
      %s418 = sphi 0, %s402
      %s424 = sphi 0, %s426
      %s427 = sphi 0, %s424
      %s428 = sphi 0, %s427
      %s444 = sphi 0, %s428
      %s450 = sphi 0, %s452
      %s453 = sphi 0, %s450
      %s454 = sphi 0, %s453
      %s470 = sphi 0, %s454
      %s474 = sphi 0, %s474
      %s476 = sphi 0, %s474
      %s477 = sphi 0, %s476
      %s491 = sphi 0, %s477
      %s495 = sphi 0, %s495
      %s497 = sphi 0, %s495
      %s498 = sphi 0, %s497
      %s512 = sphi 0, %s498
      %s516 = sphi 0, %s516
      %s518 = sphi 0, %s516
      %s519 = sphi 0, %s518
      %s533 = sphi 0, %s519
      %s537 = sphi 0, %s537
      %s539 = sphi 0, %s537
      %s540 = sphi 0, %s539
      %s554 = sphi 0, %s540
      %s558 = sphi 0, %s558
      %s560 = sphi 0, %s558
      %s561 = sphi 0, %s560
      %s575 = sphi 0, %s561
      %s579 = sphi 0, %s579
      %s581 = sphi 0, %s579
      %s582 = sphi 0, %s581
      %s596 = sphi 0, %s582
      %s602 = sphi 0, %s604
      %s605 = sphi 0, %s602
      %s606 = sphi 0, %s605
      %s622 = sphi 0, %s606
    $region4: #{vit_forward.1} parent=1 // loop_header_branch
      %35 = sbr.rel (%p33) target = $region8
    $region5: #{vit_forward.1} parent=1 // loop_body
      %s37 = ssub.s32 %s32, 1
      %s38 = ssub.s32 %s32, 2
      %s45 = sadd.s32 1, %s40
      %p46 = scmp.ge.s32.totalorder %s45, 2
      %s47 = scalar_select %p46, 0, %s45
      %s48 = sadd.s32 1, %s39
      %s49 = scalar_select %p46, %s48, %s39
      %p50 = scmp.ge.s32.totalorder %s49, 2
      %s51 = scalar_select %p50, 0, %s49
      %s52 = ssub.s32 %s39, %s51
      %p53 = scmp.eq.s32.totalorder %s52, 0
      %s55 = sadd.s32 %s54, 1
      %s56 = scalar_select %p53, %s54, %s55
      %p59 = pneg %p53
      %p60 = scmp.eq.s32.totalorder %s32, 3
      %p61 = por %p59, %p60
      %p62 = scmp.ne.s32.totalorder %s54, %s57
      %p63 = scmp.eq.s32.totalorder %s32, 0
      %p64 = por %p62, %p63
      %p65 = scmp.ne.s32.totalorder %s54, %s57
      %p66 = scmp.eq.s32.totalorder %s37, 3
      %p67 = por %p65, %p66
      %p68 = scmp.ne.s32.totalorder %s57, %s58
      %p69 = scmp.eq.s32.totalorder %s37, 0
      %p70 = por %p68, %p69
      %p71 = scmp.ne.s32.totalorder %s57, %s58
      %p72 = scmp.eq.s32.totalorder %s38, 3
      %p73 = por %p71, %p72
      %p75 = scmp.ne.s32.totalorder %s58, %s74
      %p76 = scmp.eq.s32.totalorder %s38, 0
      %p77 = por %p75, %p76
      %s79 = sadd.s32 %s78, 1
      %p82 = scmp.eq.s32.totalorder %s32, 3
      %p83 = scmp.ne.s32.totalorder %s78, %s80
      %p84 = scmp.eq.s32.totalorder %s32, 0
      %p85 = por %p83, %p84
      %p86 = scmp.ne.s32.totalorder %s78, %s80
      %p87 = scmp.eq.s32.totalorder %s37, 3
      %p88 = por %p86, %p87
      %p89 = scmp.ne.s32.totalorder %s80, %s81
      %p90 = scmp.eq.s32.totalorder %s37, 0
      %p91 = por %p89, %p90
      %p92 = scmp.ne.s32.totalorder %s80, %s81
      %p93 = scmp.eq.s32.totalorder %s38, 3
      %p94 = por %p92, %p93
      %p96 = scmp.ne.s32.totalorder %s81, %s95
      %p97 = scmp.eq.s32.totalorder %s38, 0
      %p98 = por %p96, %p97
      %s100 = sadd.s32 %s99, 1
      %p103 = scmp.eq.s32.totalorder %s32, 3
      %p104 = scmp.ne.s32.totalorder %s99, %s101
      %p105 = scmp.eq.s32.totalorder %s32, 0
      %p106 = por %p104, %p105
      %p107 = scmp.ne.s32.totalorder %s99, %s101
      %p108 = scmp.eq.s32.totalorder %s37, 3
      %p109 = por %p107, %p108
      %p110 = scmp.ne.s32.totalorder %s101, %s102
      %p111 = scmp.eq.s32.totalorder %s37, 0
      %p112 = por %p110, %p111
      %p113 = scmp.ne.s32.totalorder %s101, %s102
      %p114 = scmp.eq.s32.totalorder %s38, 3
      %p115 = por %p113, %p114
      %p117 = scmp.ne.s32.totalorder %s102, %s116
      %p118 = scmp.eq.s32.totalorder %s38, 0
      %p119 = por %p117, %p118
      %s121 = sadd.s32 %s120, 1
      %p124 = scmp.eq.s32.totalorder %s32, 3
      %p125 = scmp.ne.s32.totalorder %s120, %s122
      %p126 = scmp.eq.s32.totalorder %s32, 0
      %p127 = por %p125, %p126
      %p128 = scmp.ne.s32.totalorder %s120, %s122
      %p129 = scmp.eq.s32.totalorder %s37, 3
      %p130 = por %p128, %p129
      %p131 = scmp.ne.s32.totalorder %s122, %s123
      %p132 = scmp.eq.s32.totalorder %s37, 0
      %p133 = por %p131, %p132
      %p134 = scmp.ne.s32.totalorder %s122, %s123
      %p135 = scmp.eq.s32.totalorder %s38, 3
      %p136 = por %p134, %p135
      %p138 = scmp.ne.s32.totalorder %s123, %s137
      %p139 = scmp.eq.s32.totalorder %s38, 0
      %p140 = por %p138, %p139
      %s142 = sadd.s32 %s141, 1
      %p145 = scmp.eq.s32.totalorder %s32, 3
      %p146 = scmp.ne.s32.totalorder %s141, %s143
      %p147 = scmp.eq.s32.totalorder %s32, 0
      %p148 = por %p146, %p147
      %p149 = scmp.ne.s32.totalorder %s141, %s143
      %p150 = scmp.eq.s32.totalorder %s37, 3
      %p151 = por %p149, %p150
      %p152 = scmp.ne.s32.totalorder %s143, %s144
      %p153 = scmp.eq.s32.totalorder %s37, 0
      %p154 = por %p152, %p153
      %p155 = scmp.ne.s32.totalorder %s143, %s144
      %p156 = scmp.eq.s32.totalorder %s38, 3
      %p157 = por %p155, %p156
      %p159 = scmp.ne.s32.totalorder %s144, %s158
      %p160 = scmp.eq.s32.totalorder %s38, 0
      %p161 = por %p159, %p160
      %s162 = ssub.s32 %s40, %s47
      %p163 = scmp.eq.s32.totalorder %s162, 0
      %s165 = sadd.s32 %s164, 1
      %s166 = scalar_select %p163, %s164, %s165
      %p169 = pneg %p163
      %p170 = scmp.eq.s32.totalorder %s32, 3
      %p171 = por %p169, %p170
      %p172 = scmp.ne.s32.totalorder %s164, %s167
      %p173 = scmp.eq.s32.totalorder %s32, 0
      %p174 = por %p172, %p173
      %p175 = scmp.ne.s32.totalorder %s164, %s167
      %p176 = scmp.eq.s32.totalorder %s37, 3
      %p177 = por %p175, %p176
      %p178 = scmp.ne.s32.totalorder %s167, %s168
      %p179 = scmp.eq.s32.totalorder %s37, 0
      %p180 = por %p178, %p179
      %p181 = scmp.ne.s32.totalorder %s167, %s168
      %p182 = scmp.eq.s32.totalorder %s38, 3
      %p183 = por %p181, %p182
      %p185 = scmp.ne.s32.totalorder %s168, %s184
      %p186 = scmp.eq.s32.totalorder %s38, 0
      %p187 = por %p185, %p186
      %s188 = ssub.s32 %s40, %s47
      %p189 = scmp.eq.s32.totalorder %s188, 0
      %s191 = sadd.s32 %s190, 1
      %s192 = scalar_select %p189, %s190, %s191
      %p195 = pneg %p189
      %p196 = scmp.eq.s32.totalorder %s32, 3
      %p197 = por %p195, %p196
      %p198 = scmp.ne.s32.totalorder %s190, %s193
      %p199 = scmp.eq.s32.totalorder %s32, 0
      %p200 = por %p198, %p199
      %p201 = scmp.ne.s32.totalorder %s190, %s193
      %p202 = scmp.eq.s32.totalorder %s37, 3
      %p203 = por %p201, %p202
      %p204 = scmp.ne.s32.totalorder %s193, %s194
      %p205 = scmp.eq.s32.totalorder %s37, 0
      %p206 = por %p204, %p205
      %p207 = scmp.ne.s32.totalorder %s193, %s194
      %p208 = scmp.eq.s32.totalorder %s38, 3
      %p209 = por %p207, %p208
      %p211 = scmp.ne.s32.totalorder %s194, %s210
      %p212 = scmp.eq.s32.totalorder %s38, 0
      %p213 = por %p211, %p212
      %s214 = ssub.s32 %s40, %s47
      %p215 = scmp.eq.s32.totalorder %s214, 0
      %s217 = sadd.s32 %s216, 1
      %s218 = scalar_select %p215, %s216, %s217
      %p221 = pneg %p215
      %p222 = scmp.eq.s32.totalorder %s32, 3
      %p223 = por %p221, %p222
      %p224 = scmp.ne.s32.totalorder %s216, %s219
      %p225 = scmp.eq.s32.totalorder %s32, 0
      %p226 = por %p224, %p225
      %p227 = scmp.ne.s32.totalorder %s216, %s219
      %p228 = scmp.eq.s32.totalorder %s37, 3
      %p229 = por %p227, %p228
      %p230 = scmp.ne.s32.totalorder %s219, %s220
      %p231 = scmp.eq.s32.totalorder %s37, 0
      %p232 = por %p230, %p231
      %p233 = scmp.ne.s32.totalorder %s219, %s220
      %p234 = scmp.eq.s32.totalorder %s38, 3
      %p235 = por %p233, %p234
      %p237 = scmp.ne.s32.totalorder %s220, %s236
      %p238 = scmp.eq.s32.totalorder %s38, 0
      %p239 = por %p237, %p238
      %s240 = ssub.s32 %s40, %s47
      %p241 = scmp.eq.s32.totalorder %s240, 0
      %s243 = sadd.s32 %s242, 1
      %s244 = scalar_select %p241, %s242, %s243
      %p247 = pneg %p241
      %p248 = scmp.eq.s32.totalorder %s32, 3
      %p249 = por %p247, %p248
      %p250 = scmp.ne.s32.totalorder %s242, %s245
      %p251 = scmp.eq.s32.totalorder %s32, 0
      %p252 = por %p250, %p251
      %p253 = scmp.ne.s32.totalorder %s242, %s245
      %p254 = scmp.eq.s32.totalorder %s37, 3
      %p255 = por %p253, %p254
      %p256 = scmp.ne.s32.totalorder %s245, %s246
      %p257 = scmp.eq.s32.totalorder %s37, 0
      %p258 = por %p256, %p257
      %p259 = scmp.ne.s32.totalorder %s245, %s246
      %p260 = scmp.eq.s32.totalorder %s38, 3
      %p261 = por %p259, %p260
      %p263 = scmp.ne.s32.totalorder %s246, %s262
      %p264 = scmp.eq.s32.totalorder %s38, 0
      %p265 = por %p263, %p264
      %s266 = ssub.s32 %s40, %s47
      %p267 = scmp.eq.s32.totalorder %s266, 0
      %s269 = sadd.s32 %s268, 1
      %s270 = scalar_select %p267, %s268, %s269
      %p273 = pneg %p267
      %p274 = scmp.eq.s32.totalorder %s32, 3
      %p275 = por %p273, %p274
      %p276 = scmp.ne.s32.totalorder %s268, %s271
      %p277 = scmp.eq.s32.totalorder %s32, 0
      %p278 = por %p276, %p277
      %p279 = scmp.ne.s32.totalorder %s268, %s271
      %p280 = scmp.eq.s32.totalorder %s37, 3
      %p281 = por %p279, %p280
      %p282 = scmp.ne.s32.totalorder %s271, %s272
      %p283 = scmp.eq.s32.totalorder %s37, 0
      %p284 = por %p282, %p283
      %p285 = scmp.ne.s32.totalorder %s271, %s272
      %p286 = scmp.eq.s32.totalorder %s38, 3
      %p287 = por %p285, %p286
      %p289 = scmp.ne.s32.totalorder %s272, %s288
      %p290 = scmp.eq.s32.totalorder %s38, 0
      %p291 = por %p289, %p290
      %s292 = ssub.s32 %s40, %s47
      %p293 = scmp.eq.s32.totalorder %s292, 0
      %s295 = sadd.s32 %s294, 1
      %s296 = scalar_select %p293, %s294, %s295
      %p299 = pneg %p293
      %p300 = scmp.eq.s32.totalorder %s32, 3
      %p301 = por %p299, %p300
      %p302 = scmp.ne.s32.totalorder %s294, %s297
      %p303 = scmp.eq.s32.totalorder %s32, 0
      %p304 = por %p302, %p303
      %p305 = scmp.ne.s32.totalorder %s294, %s297
      %p306 = scmp.eq.s32.totalorder %s37, 3
      %p307 = por %p305, %p306
      %p308 = scmp.ne.s32.totalorder %s297, %s298
      %p309 = scmp.eq.s32.totalorder %s37, 0
      %p310 = por %p308, %p309
      %p311 = scmp.ne.s32.totalorder %s297, %s298
      %p312 = scmp.eq.s32.totalorder %s38, 3
      %p313 = por %p311, %p312
      %p315 = scmp.ne.s32.totalorder %s298, %s314
      %p316 = scmp.eq.s32.totalorder %s38, 0
      %p317 = por %p315, %p316
      %s318 = ssub.s32 %s40, %s47
      %p319 = scmp.eq.s32.totalorder %s318, 0
      %s321 = sadd.s32 %s320, 1
      %s322 = scalar_select %p319, %s320, %s321
      %p325 = pneg %p319
      %p326 = scmp.eq.s32.totalorder %s32, 3
      %p327 = por %p325, %p326
      %p328 = scmp.ne.s32.totalorder %s320, %s323
      %p329 = scmp.eq.s32.totalorder %s32, 0
      %p330 = por %p328, %p329
      %p331 = scmp.ne.s32.totalorder %s320, %s323
      %p332 = scmp.eq.s32.totalorder %s37, 3
      %p333 = por %p331, %p332
      %p334 = scmp.ne.s32.totalorder %s323, %s324
      %p335 = scmp.eq.s32.totalorder %s37, 0
      %p336 = por %p334, %p335
      %p337 = scmp.ne.s32.totalorder %s323, %s324
      %p338 = scmp.eq.s32.totalorder %s38, 3
      %p339 = por %p337, %p338
      %p341 = scmp.ne.s32.totalorder %s324, %s340
      %p342 = scmp.eq.s32.totalorder %s38, 0
      %p343 = por %p341, %p342
      %s344 = ssub.s32 %s40, %s47
      %p345 = scmp.eq.s32.totalorder %s344, 0
      %s347 = sadd.s32 %s346, 1
      %s348 = scalar_select %p345, %s346, %s347
      %p351 = pneg %p345
      %p352 = scmp.eq.s32.totalorder %s32, 3
      %p353 = por %p351, %p352
      %p354 = scmp.ne.s32.totalorder %s346, %s349
      %p355 = scmp.eq.s32.totalorder %s32, 0
      %p356 = por %p354, %p355
      %p357 = scmp.ne.s32.totalorder %s346, %s349
      %p358 = scmp.eq.s32.totalorder %s37, 3
      %p359 = por %p357, %p358
      %p360 = scmp.ne.s32.totalorder %s349, %s350
      %p361 = scmp.eq.s32.totalorder %s37, 0
      %p362 = por %p360, %p361
      %p363 = scmp.ne.s32.totalorder %s349, %s350
      %p364 = scmp.eq.s32.totalorder %s38, 3
      %p365 = por %p363, %p364
      %p367 = scmp.ne.s32.totalorder %s350, %s366
      %p368 = scmp.eq.s32.totalorder %s38, 0
      %p369 = por %p367, %p368
      %s370 = ssub.s32 %s40, %s47
      %p371 = scmp.eq.s32.totalorder %s370, 0
      %s373 = sadd.s32 %s372, 1
      %s374 = scalar_select %p371, %s372, %s373
      %p377 = pneg %p371
      %p378 = scmp.eq.s32.totalorder %s32, 3
      %p379 = por %p377, %p378
      %p380 = scmp.ne.s32.totalorder %s372, %s375
      %p381 = scmp.eq.s32.totalorder %s32, 0
      %p382 = por %p380, %p381
      %p383 = scmp.ne.s32.totalorder %s372, %s375
      %p384 = scmp.eq.s32.totalorder %s37, 3
      %p385 = por %p383, %p384
      %p386 = scmp.ne.s32.totalorder %s375, %s376
      %p387 = scmp.eq.s32.totalorder %s37, 0
      %p388 = por %p386, %p387
      %p389 = scmp.ne.s32.totalorder %s375, %s376
      %p390 = scmp.eq.s32.totalorder %s38, 3
      %p391 = por %p389, %p390
      %p393 = scmp.ne.s32.totalorder %s376, %s392
      %p394 = scmp.eq.s32.totalorder %s38, 0
      %p395 = por %p393, %p394
      %s396 = ssub.s32 %s40, %s47
      %p397 = scmp.eq.s32.totalorder %s396, 0
      %s399 = sadd.s32 %s398, 1
      %s400 = scalar_select %p397, %s398, %s399
      %p403 = pneg %p397
      %p404 = scmp.eq.s32.totalorder %s32, 3
      %p405 = por %p403, %p404
      %p406 = scmp.ne.s32.totalorder %s398, %s401
      %p407 = scmp.eq.s32.totalorder %s32, 0
      %p408 = por %p406, %p407
      %p409 = scmp.ne.s32.totalorder %s398, %s401
      %p410 = scmp.eq.s32.totalorder %s37, 3
      %p411 = por %p409, %p410
      %p412 = scmp.ne.s32.totalorder %s401, %s402
      %p413 = scmp.eq.s32.totalorder %s37, 0
      %p414 = por %p412, %p413
      %p415 = scmp.ne.s32.totalorder %s401, %s402
      %p416 = scmp.eq.s32.totalorder %s38, 3
      %p417 = por %p415, %p416
      %p419 = scmp.ne.s32.totalorder %s402, %s418
      %p420 = scmp.eq.s32.totalorder %s38, 0
      %p421 = por %p419, %p420
      %s422 = ssub.s32 %s40, %s47
      %p423 = scmp.eq.s32.totalorder %s422, 0
      %s425 = sadd.s32 %s424, 1
      %s426 = scalar_select %p423, %s424, %s425
      %p429 = pneg %p423
      %p430 = scmp.eq.s32.totalorder %s32, 3
      %p431 = por %p429, %p430
      %p432 = scmp.ne.s32.totalorder %s424, %s427
      %p433 = scmp.eq.s32.totalorder %s32, 0
      %p434 = por %p432, %p433
      %p435 = scmp.ne.s32.totalorder %s424, %s427
      %p436 = scmp.eq.s32.totalorder %s37, 3
      %p437 = por %p435, %p436
      %p438 = scmp.ne.s32.totalorder %s427, %s428
      %p439 = scmp.eq.s32.totalorder %s37, 0
      %p440 = por %p438, %p439
      %p441 = scmp.ne.s32.totalorder %s427, %s428
      %p442 = scmp.eq.s32.totalorder %s38, 3
      %p443 = por %p441, %p442
      %p445 = scmp.ne.s32.totalorder %s428, %s444
      %p446 = scmp.eq.s32.totalorder %s38, 0
      %p447 = por %p445, %p446
      %s448 = ssub.s32 %s40, %s47
      %p449 = scmp.eq.s32.totalorder %s448, 0
      %s451 = sadd.s32 %s450, 1
      %s452 = scalar_select %p449, %s450, %s451
      %p455 = pneg %p449
      %p456 = scmp.eq.s32.totalorder %s32, 3
      %p457 = por %p455, %p456
      %p458 = scmp.ne.s32.totalorder %s450, %s453
      %p459 = scmp.eq.s32.totalorder %s32, 0
      %p460 = por %p458, %p459
      %p461 = scmp.ne.s32.totalorder %s450, %s453
      %p462 = scmp.eq.s32.totalorder %s37, 3
      %p463 = por %p461, %p462
      %p464 = scmp.ne.s32.totalorder %s453, %s454
      %p465 = scmp.eq.s32.totalorder %s37, 0
      %p466 = por %p464, %p465
      %p467 = scmp.ne.s32.totalorder %s453, %s454
      %p468 = scmp.eq.s32.totalorder %s38, 3
      %p469 = por %p467, %p468
      %p471 = scmp.ne.s32.totalorder %s454, %s470
      %p472 = scmp.eq.s32.totalorder %s38, 0
      %p473 = por %p471, %p472
      %s475 = sadd.s32 %s474, 1
      %p478 = scmp.eq.s32.totalorder %s32, 3
      %p479 = scmp.ne.s32.totalorder %s474, %s476
      %p480 = scmp.eq.s32.totalorder %s32, 0
      %p481 = por %p479, %p480
      %p482 = scmp.ne.s32.totalorder %s474, %s476
      %p483 = scmp.eq.s32.totalorder %s37, 3
      %p484 = por %p482, %p483
      %p485 = scmp.ne.s32.totalorder %s476, %s477
      %p486 = scmp.eq.s32.totalorder %s37, 0
      %p487 = por %p485, %p486
      %p488 = scmp.ne.s32.totalorder %s476, %s477
      %p489 = scmp.eq.s32.totalorder %s38, 3
      %p490 = por %p488, %p489
      %p492 = scmp.ne.s32.totalorder %s477, %s491
      %p493 = scmp.eq.s32.totalorder %s38, 0
      %p494 = por %p492, %p493
      %s496 = sadd.s32 %s495, 1
      %p499 = scmp.eq.s32.totalorder %s32, 3
      %p500 = scmp.ne.s32.totalorder %s495, %s497
      %p501 = scmp.eq.s32.totalorder %s32, 0
      %p502 = por %p500, %p501
      %p503 = scmp.ne.s32.totalorder %s495, %s497
      %p504 = scmp.eq.s32.totalorder %s37, 3
      %p505 = por %p503, %p504
      %p506 = scmp.ne.s32.totalorder %s497, %s498
      %p507 = scmp.eq.s32.totalorder %s37, 0
      %p508 = por %p506, %p507
      %p509 = scmp.ne.s32.totalorder %s497, %s498
      %p510 = scmp.eq.s32.totalorder %s38, 3
      %p511 = por %p509, %p510
      %p513 = scmp.ne.s32.totalorder %s498, %s512
      %p514 = scmp.eq.s32.totalorder %s38, 0
      %p515 = por %p513, %p514
      %s517 = sadd.s32 %s516, 1
      %p520 = scmp.eq.s32.totalorder %s32, 3
      %p521 = scmp.ne.s32.totalorder %s516, %s518
      %p522 = scmp.eq.s32.totalorder %s32, 0
      %p523 = por %p521, %p522
      %p524 = scmp.ne.s32.totalorder %s516, %s518
      %p525 = scmp.eq.s32.totalorder %s37, 3
      %p526 = por %p524, %p525
      %p527 = scmp.ne.s32.totalorder %s518, %s519
      %p528 = scmp.eq.s32.totalorder %s37, 0
      %p529 = por %p527, %p528
      %p530 = scmp.ne.s32.totalorder %s518, %s519
      %p531 = scmp.eq.s32.totalorder %s38, 3
      %p532 = por %p530, %p531
      %p534 = scmp.ne.s32.totalorder %s519, %s533
      %p535 = scmp.eq.s32.totalorder %s38, 0
      %p536 = por %p534, %p535
      %s538 = sadd.s32 %s537, 1
      %p541 = scmp.eq.s32.totalorder %s32, 3
      %p542 = scmp.ne.s32.totalorder %s537, %s539
      %p543 = scmp.eq.s32.totalorder %s32, 0
      %p544 = por %p542, %p543
      %p545 = scmp.ne.s32.totalorder %s537, %s539
      %p546 = scmp.eq.s32.totalorder %s37, 3
      %p547 = por %p545, %p546
      %p548 = scmp.ne.s32.totalorder %s539, %s540
      %p549 = scmp.eq.s32.totalorder %s37, 0
      %p550 = por %p548, %p549
      %p551 = scmp.ne.s32.totalorder %s539, %s540
      %p552 = scmp.eq.s32.totalorder %s38, 3
      %p553 = por %p551, %p552
      %p555 = scmp.ne.s32.totalorder %s540, %s554
      %p556 = scmp.eq.s32.totalorder %s38, 0
      %p557 = por %p555, %p556
      %s559 = sadd.s32 %s558, 1
      %p562 = scmp.eq.s32.totalorder %s32, 3
      %p563 = scmp.ne.s32.totalorder %s558, %s560
      %p564 = scmp.eq.s32.totalorder %s32, 0
      %p565 = por %p563, %p564
      %p566 = scmp.ne.s32.totalorder %s558, %s560
      %p567 = scmp.eq.s32.totalorder %s37, 3
      %p568 = por %p566, %p567
      %p569 = scmp.ne.s32.totalorder %s560, %s561
      %p570 = scmp.eq.s32.totalorder %s37, 0
      %p571 = por %p569, %p570
      %p572 = scmp.ne.s32.totalorder %s560, %s561
      %p573 = scmp.eq.s32.totalorder %s38, 3
      %p574 = por %p572, %p573
      %p576 = scmp.ne.s32.totalorder %s561, %s575
      %p577 = scmp.eq.s32.totalorder %s38, 0
      %p578 = por %p576, %p577
      %s580 = sadd.s32 %s579, 1
      %p583 = scmp.eq.s32.totalorder %s32, 3
      %p584 = scmp.ne.s32.totalorder %s579, %s581
      %p585 = scmp.eq.s32.totalorder %s32, 0
      %p586 = por %p584, %p585
      %p587 = scmp.ne.s32.totalorder %s579, %s581
      %p588 = scmp.eq.s32.totalorder %s37, 3
      %p589 = por %p587, %p588
      %p590 = scmp.ne.s32.totalorder %s581, %s582
      %p591 = scmp.eq.s32.totalorder %s37, 0
      %p592 = por %p590, %p591
      %p593 = scmp.ne.s32.totalorder %s581, %s582
      %p594 = scmp.eq.s32.totalorder %s38, 3
      %p595 = por %p593, %p594
      %p597 = scmp.ne.s32.totalorder %s582, %s596
      %p598 = scmp.eq.s32.totalorder %s38, 0
      %p599 = por %p597, %p598
      %s600 = ssub.s32 %s39, %s51
      %p601 = scmp.eq.s32.totalorder %s600, 0
      %s603 = sadd.s32 %s602, 1
      %s604 = scalar_select %p601, %s602, %s603
      %p607 = pneg %p601
      %p608 = scmp.eq.s32.totalorder %s32, 3
      %p609 = por %p607, %p608
      %p610 = scmp.ne.s32.totalorder %s602, %s605
      %p611 = scmp.eq.s32.totalorder %s32, 0
      %p612 = por %p610, %p611
      %p613 = scmp.ne.s32.totalorder %s602, %s605
      %p614 = scmp.eq.s32.totalorder %s37, 3
      %p615 = por %p613, %p614
      %p616 = scmp.ne.s32.totalorder %s605, %s606
      %p617 = scmp.eq.s32.totalorder %s37, 0
      %p618 = por %p616, %p617
      %p619 = scmp.ne.s32.totalorder %s605, %s606
      %p620 = scmp.eq.s32.totalorder %s38, 3
      %p621 = por %p619, %p620
      %p623 = scmp.ne.s32.totalorder %s606, %s622
      %p624 = scmp.eq.s32.totalorder %s38, 0
      %p625 = por %p623, %p624
      %p626 = scmp.le.s32.totalorder 1, %s32
      %p627 = scmp.lt.s32.totalorder %s32, 5
      %p628 = pnand %p626, %p627
      %p629 = pneg %p628
      // Predicated region
      $region9: #{vit_forward.1} parent=5 // pred_check
        _
      $region10: #{vit_forward.1} parent=5 // pred_check_branch
        %631 = sbr.rel (%p628) target = $region12
      $region11: #{vit_forward.1} parent=5 // pred_region
        %s632 = ssub.s32 %s32, 1
        // Predicated region
        $region13: #{vit_forward.1} parent=11 // pred_check
          %p633 = pneg %p91
        $region14: #{vit_forward.1} parent=11 // pred_check_branch
          %635 = sbr.rel (%p633) target = $region16
        $region15: #{vit_forward.1} parent=11 // pred_region
          _
        $region16: #{vit_forward.1} parent=11 // pred_fallthru
          _
        // Predicated region
        $region17: #{vit_forward.1} parent=11 // pred_check
          %p636 = pneg %p112
        $region18: #{vit_forward.1} parent=11 // pred_check_branch
          %638 = sbr.rel (%p636) target = $region20
        $region19: #{vit_forward.1} parent=11 // pred_region
          _
        $region20: #{vit_forward.1} parent=11 // pred_fallthru
          _
        // Predicated region
        $region21: #{vit_forward.1} parent=11 // pred_check
          %p639 = pneg %p133
        $region22: #{vit_forward.1} parent=11 // pred_check_branch
          %641 = sbr.rel (%p639) target = $region24
        $region23: #{vit_forward.1} parent=11 // pred_region
          _
        $region24: #{vit_forward.1} parent=11 // pred_fallthru
          _
        // Predicated region
        $region25: #{vit_forward.1} parent=11 // pred_check
          %p642 = pneg %p154
        $region26: #{vit_forward.1} parent=11 // pred_check_branch
          %644 = sbr.rel (%p642) target = $region28
        $region27: #{vit_forward.1} parent=11 // pred_region
          _
        $region28: #{vit_forward.1} parent=11 // pred_fallthru
          _
        // Predicated region
        $region29: #{vit_forward.1} parent=11 // pred_check
          %p645 = pneg %p487
        $region30: #{vit_forward.1} parent=11 // pred_check_branch
          %647 = sbr.rel (%p645) target = $region32
        $region31: #{vit_forward.1} parent=11 // pred_region
          _
        $region32: #{vit_forward.1} parent=11 // pred_fallthru
          _
        // Predicated region
        $region33: #{vit_forward.1} parent=11 // pred_check
          %p648 = pneg %p508
        $region34: #{vit_forward.1} parent=11 // pred_check_branch
          %650 = sbr.rel (%p648) target = $region36
        $region35: #{vit_forward.1} parent=11 // pred_region
          _
        $region36: #{vit_forward.1} parent=11 // pred_fallthru
          _
        // Predicated region
        $region37: #{vit_forward.1} parent=11 // pred_check
          %p651 = pneg %p529
        $region38: #{vit_forward.1} parent=11 // pred_check_branch
          %653 = sbr.rel (%p651) target = $region40
        $region39: #{vit_forward.1} parent=11 // pred_region
          _
        $region40: #{vit_forward.1} parent=11 // pred_fallthru
          _
        // Predicated region
        $region41: #{vit_forward.1} parent=11 // pred_check
          %p654 = pneg %p550
        $region42: #{vit_forward.1} parent=11 // pred_check_branch
          %656 = sbr.rel (%p654) target = $region44
        $region43: #{vit_forward.1} parent=11 // pred_region
          _
        $region44: #{vit_forward.1} parent=11 // pred_fallthru
          _
        // Predicated region
        $region45: #{vit_forward.1} parent=11 // pred_check
          %p657 = pneg %p571
        $region46: #{vit_forward.1} parent=11 // pred_check_branch
          %659 = sbr.rel (%p657) target = $region48
        $region47: #{vit_forward.1} parent=11 // pred_region
          _
        $region48: #{vit_forward.1} parent=11 // pred_fallthru
          _
        // Predicated region
        $region49: #{vit_forward.1} parent=11 // pred_check
          %p660 = pneg %p592
        $region50: #{vit_forward.1} parent=11 // pred_check_branch
          %662 = sbr.rel (%p660) target = $region52
        $region51: #{vit_forward.1} parent=11 // pred_region
          _
        $region52: #{vit_forward.1} parent=11 // pred_fallthru
          _
      $region12: #{vit_forward.1} parent=5 // pred_fallthru
        _
      %p663 = scmp.lt.s32.totalorder %s32, 4
      // Predicated region
      $region53: #{vit_forward.1} parent=5 // pred_check
        %p664 = pneg %p663
      $region54: #{vit_forward.1} parent=5 // pred_check_branch
        %666 = sbr.rel (%p664) target = $region56
      $region55: #{vit_forward.1} parent=5 // pred_region
        // Predicated region
        $region57: #{vit_forward.1} parent=55 // pred_check
          %p667 = pneg %p64
        $region58: #{vit_forward.1} parent=55 // pred_check_branch
          %669 = sbr.rel (%p667) target = $region60
        $region59: #{vit_forward.1} parent=55 // pred_region
          %p670 = scmp.lt.s32.totalorder %s39, 1
          %s671 = scalar_select %p670, %s39, 1
          %s672 = smul.addr %s671, 2
          %s673 = smul.addr %s672, 8
          %s674 = scalar_lea.vmem %s0, %s673
        $region60: #{vit_forward.1} parent=55 // pred_fallthru
          _
        // Predicated region
        $region61: #{vit_forward.1} parent=55 // pred_check
          %p675 = pneg %p174
        $region62: #{vit_forward.1} parent=55 // pred_check_branch
          %677 = sbr.rel (%p675) target = $region64
        $region63: #{vit_forward.1} parent=55 // pred_region
          %p678 = scmp.lt.s32.totalorder %s40, 1
          %s679 = scalar_select %p678, %s40, 1
          %s680 = scalar_lea.vmem %s5, %s679
        $region64: #{vit_forward.1} parent=55 // pred_fallthru
          _
        // Predicated region
        $region65: #{vit_forward.1} parent=55 // pred_check
          %p681 = pneg %p200
        $region66: #{vit_forward.1} parent=55 // pred_check_branch
          %683 = sbr.rel (%p681) target = $region68
        $region67: #{vit_forward.1} parent=55 // pred_region
          %p684 = scmp.lt.s32.totalorder %s40, 1
          %s685 = scalar_select %p684, %s40, 1
          %s686 = scalar_lea.vmem %s6, %s685
        $region68: #{vit_forward.1} parent=55 // pred_fallthru
          _
        // Predicated region
        $region69: #{vit_forward.1} parent=55 // pred_check
          %p687 = pneg %p226
        $region70: #{vit_forward.1} parent=55 // pred_check_branch
          %689 = sbr.rel (%p687) target = $region72
        $region71: #{vit_forward.1} parent=55 // pred_region
          %p690 = scmp.lt.s32.totalorder %s40, 1
          %s691 = scalar_select %p690, %s40, 1
          %s692 = smul.addr %s691, 16
          %s693 = smul.addr %s692, 4
          %s694 = scalar_lea.vmem %s7, %s693
        $region72: #{vit_forward.1} parent=55 // pred_fallthru
          _
        // Predicated region
        $region73: #{vit_forward.1} parent=55 // pred_check
          %p695 = pneg %p252
        $region74: #{vit_forward.1} parent=55 // pred_check_branch
          %697 = sbr.rel (%p695) target = $region76
        $region75: #{vit_forward.1} parent=55 // pred_region
          %p698 = scmp.lt.s32.totalorder %s40, 1
          %s699 = scalar_select %p698, %s40, 1
          %s700 = smul.addr %s699, 2
          %s701 = scalar_lea.vmem %s8, %s700
        $region76: #{vit_forward.1} parent=55 // pred_fallthru
          _
        // Predicated region
        $region77: #{vit_forward.1} parent=55 // pred_check
          %p702 = pneg %p278
        $region78: #{vit_forward.1} parent=55 // pred_check_branch
          %704 = sbr.rel (%p702) target = $region80
        $region79: #{vit_forward.1} parent=55 // pred_region
          %p705 = scmp.lt.s32.totalorder %s40, 1
          %s706 = scalar_select %p705, %s40, 1
          %s707 = smul.addr %s706, 8
          %s708 = smul.addr %s707, 4
          %s709 = scalar_lea.vmem %s9, %s708
        $region80: #{vit_forward.1} parent=55 // pred_fallthru
          _
        // Predicated region
        $region81: #{vit_forward.1} parent=55 // pred_check
          %p710 = pneg %p304
        $region82: #{vit_forward.1} parent=55 // pred_check_branch
          %712 = sbr.rel (%p710) target = $region84
        $region83: #{vit_forward.1} parent=55 // pred_region
          %p713 = scmp.lt.s32.totalorder %s40, 1
          %s714 = scalar_select %p713, %s40, 1
          %s715 = scalar_lea.vmem %s10, %s714
        $region84: #{vit_forward.1} parent=55 // pred_fallthru
          _
        // Predicated region
        $region85: #{vit_forward.1} parent=55 // pred_check
          %p716 = pneg %p330
        $region86: #{vit_forward.1} parent=55 // pred_check_branch
          %718 = sbr.rel (%p716) target = $region88
        $region87: #{vit_forward.1} parent=55 // pred_region
          %p719 = scmp.lt.s32.totalorder %s40, 1
          %s720 = scalar_select %p719, %s40, 1
          %s721 = scalar_lea.vmem %s11, %s720
        $region88: #{vit_forward.1} parent=55 // pred_fallthru
          _
        // Predicated region
        $region89: #{vit_forward.1} parent=55 // pred_check
          %p722 = pneg %p356
        $region90: #{vit_forward.1} parent=55 // pred_check_branch
          %724 = sbr.rel (%p722) target = $region92
        $region91: #{vit_forward.1} parent=55 // pred_region
          %p725 = scmp.lt.s32.totalorder %s40, 1
          %s726 = scalar_select %p725, %s40, 1
          %s727 = scalar_lea.vmem %s12, %s726
        $region92: #{vit_forward.1} parent=55 // pred_fallthru
          _
        // Predicated region
        $region93: #{vit_forward.1} parent=55 // pred_check
          %p728 = pneg %p382
        $region94: #{vit_forward.1} parent=55 // pred_check_branch
          %730 = sbr.rel (%p728) target = $region96
        $region95: #{vit_forward.1} parent=55 // pred_region
          %p731 = scmp.lt.s32.totalorder %s40, 1
          %s732 = scalar_select %p731, %s40, 1
          %s733 = smul.addr %s732, 8
          %s734 = smul.addr %s733, 4
          %s735 = scalar_lea.vmem %s13, %s734
        $region96: #{vit_forward.1} parent=55 // pred_fallthru
          _
        // Predicated region
        $region97: #{vit_forward.1} parent=55 // pred_check
          %p736 = pneg %p408
        $region98: #{vit_forward.1} parent=55 // pred_check_branch
          %738 = sbr.rel (%p736) target = $region100
        $region99: #{vit_forward.1} parent=55 // pred_region
          %p739 = scmp.lt.s32.totalorder %s40, 1
          %s740 = scalar_select %p739, %s40, 1
          %s741 = scalar_lea.vmem %s14, %s740
        $region100: #{vit_forward.1} parent=55 // pred_fallthru
          _
        // Predicated region
        $region101: #{vit_forward.1} parent=55 // pred_check
          %p742 = pneg %p434
        $region102: #{vit_forward.1} parent=55 // pred_check_branch
          %744 = sbr.rel (%p742) target = $region104
        $region103: #{vit_forward.1} parent=55 // pred_region
          %p745 = scmp.lt.s32.totalorder %s40, 1
          %s746 = scalar_select %p745, %s40, 1
          %s747 = smul.addr %s746, 16
          %s748 = smul.addr %s747, 4
          %s749 = scalar_lea.vmem %s15, %s748
        $region104: #{vit_forward.1} parent=55 // pred_fallthru
          _
        // Predicated region
        $region105: #{vit_forward.1} parent=55 // pred_check
          %p750 = pneg %p460
        $region106: #{vit_forward.1} parent=55 // pred_check_branch
          %752 = sbr.rel (%p750) target = $region108
        $region107: #{vit_forward.1} parent=55 // pred_region
          %p753 = scmp.lt.s32.totalorder %s40, 1
          %s754 = scalar_select %p753, %s40, 1
          %s755 = scalar_lea.vmem %s16, %s754
        $region108: #{vit_forward.1} parent=55 // pred_fallthru
          _
      $region56: #{vit_forward.1} parent=5 // pred_fallthru
        _
      %p756 = scmp.le.s32.totalorder 1, %s32
      %p757 = scmp.lt.s32.totalorder %s32, 5
      %p758 = pnand %p756, %p757
      %p759 = pneg %p758
      // Predicated region
      $region109: #{vit_forward.1} parent=5 // pred_check
        _
      $region110: #{vit_forward.1} parent=5 // pred_check_branch
        %761 = sbr.rel (%p758) target = $region112
      $region111: #{vit_forward.1} parent=5 // pred_region
        %s762 = ssub.s32 %s32, 1
        %p763 = scmp.lt.s32.totalorder %s41, 1
        %s764 = scalar_select %p763, %s41, 1
        %s765 = smul.addr %s764, 2
        %s766 = smul.addr %s765, 8
        %s767 = scalar_lea.vmem %s0, %s766
        %p768 = pneg %p70
        %p769 = pneg %p67
        %p770 = pneg %p91
        %p771 = pneg %p88
        %p772 = pneg %p112
        %p773 = pneg %p109
        %p774 = pneg %p133
        %p775 = pneg %p130
        %p776 = pneg %p154
        %p777 = pneg %p151
        %p778 = scmp.lt.s32.totalorder %s42, 1
        %s779 = scalar_select %p778, %s42, 1
        %s780 = scalar_lea.vmem %s5, %s779
        %p781 = pneg %p180
        %p782 = pneg %p177
        %p783 = scmp.lt.s32.totalorder %s42, 1
        %s784 = scalar_select %p783, %s42, 1
        %s785 = scalar_lea.vmem %s6, %s784
        %p786 = pneg %p206
        %p787 = pneg %p203
        %p788 = scmp.lt.s32.totalorder %s42, 1
        %s789 = scalar_select %p788, %s42, 1
        %s790 = smul.addr %s789, 16
        %s791 = smul.addr %s790, 4
        %s792 = scalar_lea.vmem %s7, %s791
        %p793 = pneg %p232
        %p794 = pneg %p229
        %p795 = scmp.lt.s32.totalorder %s42, 1
        %s796 = scalar_select %p795, %s42, 1
        %s797 = smul.addr %s796, 2
        %s798 = scalar_lea.vmem %s8, %s797
        %p799 = pneg %p258
        %p800 = pneg %p255
        %p801 = scmp.lt.s32.totalorder %s42, 1
        %s802 = scalar_select %p801, %s42, 1
        %s803 = smul.addr %s802, 8
        %s804 = smul.addr %s803, 4
        %s805 = scalar_lea.vmem %s9, %s804
        %p806 = pneg %p284
        %p807 = pneg %p281
        %p808 = scmp.lt.s32.totalorder %s42, 1
        %s809 = scalar_select %p808, %s42, 1
        %s810 = scalar_lea.vmem %s10, %s809
        %p811 = pneg %p310
        %p812 = pneg %p307
        %p813 = scmp.lt.s32.totalorder %s42, 1
        %s814 = scalar_select %p813, %s42, 1
        %s815 = scalar_lea.vmem %s11, %s814
        %p816 = pneg %p336
        %p817 = pneg %p333
        %p818 = scmp.lt.s32.totalorder %s42, 1
        %s819 = scalar_select %p818, %s42, 1
        %s820 = scalar_lea.vmem %s12, %s819
        %p821 = pneg %p362
        %p822 = pneg %p359
        %p823 = scmp.lt.s32.totalorder %s42, 1
        %s824 = scalar_select %p823, %s42, 1
        %s825 = smul.addr %s824, 8
        %s826 = smul.addr %s825, 4
        %s827 = scalar_lea.vmem %s13, %s826
        %p828 = pneg %p388
        %p829 = pneg %p385
        %p830 = scmp.lt.s32.totalorder %s42, 1
        %s831 = scalar_select %p830, %s42, 1
        %s832 = scalar_lea.vmem %s14, %s831
        %p833 = pneg %p414
        %p834 = pneg %p411
        %p835 = scmp.lt.s32.totalorder %s42, 1
        %s836 = scalar_select %p835, %s42, 1
        %s837 = smul.addr %s836, 16
        %s838 = smul.addr %s837, 4
        %s839 = scalar_lea.vmem %s15, %s838
        %p840 = pneg %p440
        %p841 = pneg %p437
        %p842 = scmp.lt.s32.totalorder %s42, 1
        %s843 = scalar_select %p842, %s42, 1
        %s844 = scalar_lea.vmem %s16, %s843
        %p845 = pneg %p466
        %p846 = pneg %p463
        %p847 = pneg %p487
        %p848 = pneg %p484
        %p849 = pneg %p508
        %p850 = pneg %p505
        %p851 = pneg %p529
        %p852 = pneg %p526
        %p853 = pneg %p550
        %p854 = pneg %p547
        %p855 = pneg %p571
        %p856 = pneg %p568
        %p857 = pneg %p592
        %p858 = pneg %p589
        %p859 = pneg %p618
        %p860 = pneg %p615
        %s861 = sand.u32 %s605, 1
        %s862 = scalar_lea.sflag [#allocation4], %s861
        %s863 = sand.u32 %s605, 1
        %s864 = scalar_lea.vmem [#allocation3], %s863
        %p865 = scmp.lt.s32.totalorder %s41, 1
        %s866 = scalar_select %p865, %s41, 1
        %s867 = smul.addr %s866, 2
        %s868 = smul.addr %s867, 8
        %s869 = scalar_lea.vmem %s0, %s868
        %p870 = scmp.lt.s32.totalorder %s42, 1
        %s871 = scalar_select %p870, %s42, 1
        %s872 = scalar_lea.vmem %s5, %s871
        %p873 = scmp.lt.s32.totalorder %s42, 1
        %s874 = scalar_select %p873, %s42, 1
        %s875 = scalar_lea.vmem %s6, %s874
        %p876 = scmp.lt.s32.totalorder %s42, 1
        %s877 = scalar_select %p876, %s42, 1
        %s878 = smul.addr %s877, 16
        %s879 = smul.addr %s878, 4
        %s880 = scalar_lea.vmem %s7, %s879
        %p881 = scmp.lt.s32.totalorder %s42, 1
        %s882 = scalar_select %p881, %s42, 1
        %s883 = smul.addr %s882, 2
        %s884 = scalar_lea.vmem %s8, %s883
        %p885 = scmp.lt.s32.totalorder %s42, 1
        %s886 = scalar_select %p885, %s42, 1
        %s887 = smul.addr %s886, 8
        %s888 = smul.addr %s887, 4
        %s889 = scalar_lea.vmem %s9, %s888
        %p890 = scmp.lt.s32.totalorder %s42, 1
        %s891 = scalar_select %p890, %s42, 1
        %s892 = scalar_lea.vmem %s10, %s891
        %p893 = scmp.lt.s32.totalorder %s42, 1
        %s894 = scalar_select %p893, %s42, 1
        %s895 = scalar_lea.vmem %s11, %s894
        %p896 = scmp.lt.s32.totalorder %s42, 1
        %s897 = scalar_select %p896, %s42, 1
        %s898 = scalar_lea.vmem %s12, %s897
        %p899 = scmp.lt.s32.totalorder %s42, 1
        %s900 = scalar_select %p899, %s42, 1
        %s901 = smul.addr %s900, 8
        %s902 = smul.addr %s901, 4
        %s903 = scalar_lea.vmem %s13, %s902
        %p904 = scmp.lt.s32.totalorder %s42, 1
        %s905 = scalar_select %p904, %s42, 1
        %s906 = scalar_lea.vmem %s14, %s905
        %p907 = scmp.lt.s32.totalorder %s42, 1
        %s908 = scalar_select %p907, %s42, 1
        %s909 = smul.addr %s908, 16
        %s910 = smul.addr %s909, 4
        %s911 = scalar_lea.vmem %s15, %s910
        %p912 = scmp.lt.s32.totalorder %s42, 1
        %s913 = scalar_select %p912, %s42, 1
        %s914 = scalar_lea.vmem %s16, %s913
        %p916 = scmp.eq.s32.totalorder %s42, 0
        // Predicated region
        $region113: #{vit_forward.1} parent=111 // pred_check
          %p917 = pneg %p916
        $region114: #{vit_forward.1} parent=111 // pred_check_branch
          %919 = sbr.rel (%p917) target = $region116
        $region115: #{vit_forward.1} parent=111 // pred_region
          %v920 = vld [vmem:[%s869] sm:$0xff]
          %v921 = vld [vmem:[%s869 + $0x8] sm:$0xff]
          %v922 = vpack.c.bf16 %v921, %v920
          %v923 = vld [vmem:[%s1] sm:$0xf]
          %v924 = vld [vmem:[%s1 + $0x4] sm:$0xf]
          %v925 = vld [vmem:[%s1 + $0x8] sm:$0xf]
          %v926 = vld [vmem:[%s1 + $0xc] sm:$0xf]
          %v927 = vld [vmem:[%s1 + $0x10] sm:$0xf]
          %v928 = vld [vmem:[%s1 + $0x14] sm:$0xf]
          %v929 = vld [vmem:[%s2] sm:$0x1]
          %v931 = vlaneseq
          %v932 = vshrl.u32 %v931, 7
          %v933 = vsub.s32 0, %v932
          %v934 = vrot.slane %v929, %v933
          %v942 = vunpack.c.l.b16 %v923
          %v943 = vunpack.c.l.b16 %v924
          %v944 = vunpack.c.l.b16 %v925
          %v945 = vunpack.c.l.b16 %v926
          %v946 = vunpack.c.l.b16 %v927
          %v947 = vunpack.c.l.b16 %v928
          %v948 = vpack.c.b16 %v943, %v942
          %v949 = vpack.c.b16 %v945, %v944
          %v950 = vpack.c.b16 %v947, %v946
          %vm954 = vcmask 392192
          %v956 = vsel %vm954, %v922, 0
          %958 = vmatprep.subr.bf16.mxu0 0
          %959 = vmatpush1.bf16.msra.mxu0 %v948
          %960 = vmatprep.subr.bf16.mxu0 0
          %961 = vmatpush1.bf16.msra.mxu0 %v949
          %962 = vmatprep.subr.bf16.mxu0 0
          %963 = vmatpush1.bf16.msra.mxu0 %v950
          %964 = vmatprep.subr.bf16.mxu0 0
          %965 = vmatpush1.bf16.msra.mxu0 0
          %966 = vmatprep.subr.bf16.mxu0 0
          %967 = vmatpush1.bf16.msra.mxu0 0
          %968 = vmatprep.subr.bf16.mxu0 0
          %969 = vmatpush1.bf16.msra.mxu0 0
          %970 = vmatprep.subr.bf16.mxu0 0
          %971 = vmatpush1.bf16.msra.mxu0 0
          %972 = vmatprep.subr.bf16.mxu0 0
          %973 = vmatpush1.bf16.msra.mxu0 0
          %974 = vmatprep.subr.bf16.mxu0 0
          %975 = vmatpush1.bf16.msra.mxu0 0
          %976 = vmatprep.subr.bf16.mxu0 0
          %977 = vmatpush1.bf16.msra.mxu0 0
          %978 = vmatprep.subr.bf16.mxu0 0
          %979 = vmatpush1.bf16.msra.mxu0 0
          %980 = vmatprep.subr.bf16.mxu0 0
          %981 = vmatpush1.bf16.msra.mxu0 0
          %982 = vmatprep.subr.bf16.mxu0 0
          %983 = vmatpush1.bf16.msra.mxu0 0
          %984 = vmatprep.subr.bf16.mxu0 0
          %985 = vmatpush1.bf16.msra.mxu0 0
          %986 = vmatprep.subr.bf16.mxu0 0
          %987 = vmatpush1.bf16.msra.mxu0 0
          %988 = vmatprep.subr.bf16.mxu0 0
          %989 = vmatpush1.bf16.msra.mxu0 0
          %990 = vmatprep.mubr.bf16.mxu0 0
          %991 = vmatmul.mubr.bf16.gmra.mrb[0].mxu0 %v956
          %v992 = vpop.f32.mrb[0].mxu0
          %v993 = vadd.f32 %v934, %v992
          %v994 = vpop.f32.mrb[0].mxu0
          %v995 = vpop.f32.mrb[0].mxu0
          %v996 = vadd.f32 %v934, %v995
          %v997 = vpop.f32.mrb[0].mxu0
          %998 = vdwg.mxu0
          %v999 = vld [vmem:[%s3] sm:$0x1]
          %v1000 = vld [vmem:[%s4] sm:$0x1]
          %v1001 = vadd.f32 %v999, %v1000
          %vm1002 = vcmask 516096
          %1003 = vst.msk [vmem:[#allocation2] sm:$0x1] %vm1002, %v1001
          %v1004 = vld [vmem:[%s4 + $0x1] sm:$0xff]
          %v1005 = vld [vmem:[%s4 + $0x9] sm:$0xff]
          %v1006 = vadd.f32 %v993, %v1004
          %v1007 = vadd.f32 %v996, %v1005
          %vm1008 = vcmask 523264
          %1009 = vst.msk [vmem:[#allocation2 + $0x1] sm:$0xff] %vm1008, %v1006
          %1010 = vst.msk [vmem:[#allocation2 + $0x9] sm:$0xff] %vm1008, %v1007
        $region116: #{vit_forward.1} parent=111 // pred_fallthru
          _
        %v1011 = vld [vmem:[#allocation2] sm:$0xff]
        %v1012 = vld [vmem:[#allocation2 + $0x8] sm:$0xff]
        %v1013 = vld [vmem:[#allocation2 + $0x10] sm:$0x1]
        %v1014 = vld [vmem:[%s872] sm:$0x1]
        %v1015 = vld [vmem:[%s875] sm:$0x1]
        %vm1016 = vcmask 523264
        %v1017 = vsel %vm1016, %v1011, 0.0
        %1018 = vadd.xlane.f32.xlu0 %v1017
        %v1019 = vpop.xlane.xlu0 %1018
        %v1020 = vsel %vm1016, %v1012, 0.0
        %1021 = vadd.xlane.f32.xlu0 %v1020
        %v1022 = vpop.xlane.xlu0 %1021
        %vm1023 = vcmask 516096
        %v1024 = vsel %vm1023, %v1013, 0.0
        %1025 = vadd.xlane.f32.xlu0 %v1024
        %v1026 = vpop.xlane.xlu0 %1025
        %v1027 = vrcp.pop 64.0
        %v1028 = vmul.f32 %v1019, %v1027
        %v1029 = vmul.f32 %v1022, %v1027
        %v1030 = vmul.f32 %v1026, %v1027
        %v1031 = vsub.f32 %v1011, %v1028
        %v1032 = vsub.f32 %v1012, %v1029
        %v1033 = vsub.f32 %v1013, %v1030
        %v1034 = vmul.f32 %v1031, %v1031
        %v1035 = vmul.f32 %v1032, %v1032
        %v1036 = vmul.f32 %v1033, %v1033
        %v1037 = vsel %vm1016, %v1034, 0.0
        %1038 = vadd.xlane.f32.xlu0 %v1037
        %v1039 = vpop.xlane.xlu0 %1038
        %v1040 = vsel %vm1016, %v1035, 0.0
        %1041 = vadd.xlane.f32.xlu0 %v1040
        %v1042 = vpop.xlane.xlu0 %1041
        %v1043 = vsel %vm1023, %v1036, 0.0
        %1044 = vadd.xlane.f32.xlu0 %v1043
        %v1045 = vpop.xlane.xlu0 %1044
        %v1046 = vmul.f32 %v1039, %v1027
        %v1047 = vmul.f32 %v1042, %v1027
        %v1048 = vmul.f32 %v1045, %v1027
        %v1049 = vadd.f32 %v1046, 1e-05
        %v1050 = vadd.f32 %v1047, 1e-05
        %v1051 = vadd.f32 %v1048, 1e-05
        %v1052 = vrsqrt.pop %v1049
        %v1053 = vrsqrt.pop %v1050
        %v1054 = vrsqrt.pop %v1051
        %v1055 = vmul.f32 %v1031, %v1052
        %v1056 = vmul.f32 %v1032, %v1053
        %v1057 = vmul.f32 %v1033, %v1054
        %v1059 = vlaneseq
        %v1060 = vshrl.u32 %v1059, 7
        %v1061 = vsub.s32 0, %v1060
        %v1062 = vrot.slane %v1014, %v1061
        %v1064 = vmul.f32 %v1055, %v1062
        %v1065 = vmul.f32 %v1056, %v1062
        %v1066 = vmul.f32 %v1057, %v1062
        %v1068 = vlaneseq
        %v1069 = vshrl.u32 %v1068, 7
        %v1070 = vsub.s32 0, %v1069
        %v1071 = vrot.slane %v1015, %v1070
        %v1073 = vadd.f32 %v1064, %v1071
        %v1074 = vadd.f32 %v1065, %v1071
        %v1075 = vadd.f32 %v1066, %v1071
        %v1076 = vpack.c.bf16 %v1074, %v1073
        %v1077 = vpack.c.bf16 %v1075, %v1075
        %v1078 = vld [vmem:[%s880] sm:$0xff]
        %v1079 = vld [vmem:[%s880 + $0x8] sm:$0xff]
        %v1080 = vld [vmem:[%s880 + $0x10] sm:$0xff]
        %v1081 = vld [vmem:[%s880 + $0x18] sm:$0xff]
        %v1082 = vld [vmem:[%s880 + $0x20] sm:$0xff]
        %v1083 = vld [vmem:[%s880 + $0x28] sm:$0xff]
        %v1084 = vld [vmem:[%s880 + $0x30] sm:$0xff]
        %v1085 = vld [vmem:[%s880 + $0x38] sm:$0xff]
        %v1086 = vld [vmem:[%s884] sm:$0x3]
        %v1088 = vlaneseq
        %v1089 = vshrl.u32 %v1088, 7
        %v1090 = vsub.s32 0, %v1089
        %v1091 = vrot.slane %v1086, %v1090
        %v1092 = vlaneseq
        %v1093 = vshrl.u32 %v1092, 7
        %v1094 = vsub.s32 1, %v1093
        %v1095 = vrot.slane %v1086, %v1094
        %v1106 = vunpack.c.l.b16 %v1078
        %v1107 = vunpack.c.h.b16 %v1078
        %v1108 = vunpack.c.l.b16 %v1079
        %v1109 = vunpack.c.h.b16 %v1079
        %v1110 = vunpack.c.l.b16 %v1080
        %v1111 = vunpack.c.h.b16 %v1080
        %v1112 = vunpack.c.l.b16 %v1081
        %v1113 = vunpack.c.h.b16 %v1081
        %v1114 = vunpack.c.l.b16 %v1082
        %v1115 = vunpack.c.h.b16 %v1082
        %v1116 = vunpack.c.l.b16 %v1083
        %v1117 = vunpack.c.h.b16 %v1083
        %v1118 = vunpack.c.l.b16 %v1084
        %v1119 = vunpack.c.h.b16 %v1084
        %v1120 = vunpack.c.l.b16 %v1085
        %v1121 = vunpack.c.h.b16 %v1085
        %v1122 = vpack.c.b16 %v1108, %v1106
        %v1123 = vpack.c.b16 %v1109, %v1107
        %v1124 = vpack.c.b16 %v1112, %v1110
        %v1125 = vpack.c.b16 %v1113, %v1111
        %v1126 = vpack.c.b16 %v1116, %v1114
        %v1127 = vpack.c.b16 %v1117, %v1115
        %v1128 = vpack.c.b16 %v1120, %v1118
        %v1129 = vpack.c.b16 %v1121, %v1119
        %v1139 = vsel %vm1016, %v1076, 0
        %v1142 = vsel %vm1016, %v1077, 0
        %1144 = vmatprep.subr.bf16.mxu0 %v1123
        %1145 = vmatpush1.bf16.msra.mxu0 %v1122
        %1146 = vmatprep.subr.bf16.mxu0 %v1125
        %1147 = vmatpush1.bf16.msra.mxu0 %v1124
        %1148 = vmatprep.subr.bf16.mxu0 %v1127
        %1149 = vmatpush1.bf16.msra.mxu0 %v1126
        %1150 = vmatprep.subr.bf16.mxu0 %v1129
        %1151 = vmatpush1.bf16.msra.mxu0 %v1128
        %1152 = vmatprep.subr.bf16.mxu0 0
        %1153 = vmatpush1.bf16.msra.mxu0 0
        %1154 = vmatprep.subr.bf16.mxu0 0
        %1155 = vmatpush1.bf16.msra.mxu0 0
        %1156 = vmatprep.subr.bf16.mxu0 0
        %1157 = vmatpush1.bf16.msra.mxu0 0
        %1158 = vmatprep.subr.bf16.mxu0 0
        %1159 = vmatpush1.bf16.msra.mxu0 0
        %1160 = vmatprep.subr.bf16.mxu0 0
        %1161 = vmatpush1.bf16.msra.mxu0 0
        %1162 = vmatprep.subr.bf16.mxu0 0
        %1163 = vmatpush1.bf16.msra.mxu0 0
        %1164 = vmatprep.subr.bf16.mxu0 0
        %1165 = vmatpush1.bf16.msra.mxu0 0
        %1166 = vmatprep.subr.bf16.mxu0 0
        %1167 = vmatpush1.bf16.msra.mxu0 0
        %1168 = vmatprep.subr.bf16.mxu0 0
        %1169 = vmatpush1.bf16.msra.mxu0 0
        %1170 = vmatprep.subr.bf16.mxu0 0
        %1171 = vmatpush1.bf16.msra.mxu0 0
        %1172 = vmatprep.subr.bf16.mxu0 0
        %1173 = vmatpush1.bf16.msra.mxu0 0
        %1174 = vmatprep.subr.bf16.mxu0 0
        %1175 = vmatpush1.bf16.msra.mxu0 0
        %1176 = vmatprep.mubr.bf16.mxu0 0
        %1177 = vmatmul.mubr.bf16.gmra.mrb[0].mxu0 %v1139
        %v1178 = vpop.f32.mrb[0].mxu0
        %v1179 = vadd.f32 %v1091, %v1178
        %v1180 = vpop.f32.mrb[0].mxu0
        %v1181 = vadd.f32 %v1095, %v1180
        %v1182 = vpop.f32.mrb[0].mxu0
        %v1183 = vadd.f32 %v1091, %v1182
        %v1184 = vpop.f32.mrb[0].mxu0
        %v1185 = vadd.f32 %v1095, %v1184
        %1186 = vmatprep.mubr.bf16.mxu0 0
        %1187 = vmatmul.mubr.bf16.gmra.mrb[0].mxu0 %v1142
        %v1188 = vpop.f32.mrb[0].mxu0
        %v1189 = vadd.f32 %v1091, %v1188
        %v1190 = vpop.f32.mrb[0].mxu0
        %v1191 = vadd.f32 %v1095, %v1190
        %v1192 = vpop.f32.mrb[0].mxu0
        %v1193 = vpop.f32.mrb[0].mxu0
        %1194 = vdwg.mxu0
        %v1195 = vmul.f32 %v1179, 0.25
        %v1196 = vmul.f32 %v1183, 0.25
        %v1197 = vmul.f32 %v1189, 0.25
        %1201 = vrot.lane.b32.xlu0 %v1179, 64
        %v1202 = vpop.permute.xlu0 %1201
        %1203 = vrot.lane.b32.xlu0 %v1183, 64
        %v1204 = vpop.permute.xlu0 %1203
        %1205 = vrot.lane.b32.xlu0 %v1189, 64
        %v1206 = vpop.permute.xlu0 %1205
        %vm1207 = vcmask 130048
        %v1209 = vsel %vm1207, %v1195, 0
        %v1212 = vsel %vm1207, %v1196, 0
        %v1215 = vsel %vm1207, %v1197, 0
        %v1217 = vsel %vm1207, %v1202, 0
        %v1219 = vsel %vm1207, %v1204, 0
        %v1221 = vsel %vm1207, %v1206, 0
        %1223 = vmatprep.subr.mxu0 0.0
        %1224 = vmatpush1.xpose.msra.mxu0 %v1217
        %1225 = vmatprep.subr.mxu0 0.0
        %1226 = vmatpush1.xpose.msra.mxu0 %v1219
        %1227 = vmatprep.subr.mxu0 0.0
        %1228 = vmatpush1.xpose.msra.mxu0 %v1221
        %1229 = vmatprep.subr.mxu0 0.0
        %1230 = vmatpush1.xpose.msra.mxu0 0.0
        %1231 = vmatprep.subr.mxu0 0.0
        %1232 = vmatpush1.xpose.msra.mxu0 0.0
        %1233 = vmatprep.subr.mxu0 0.0
        %1234 = vmatpush1.xpose.msra.mxu0 0.0
        %1235 = vmatprep.subr.mxu0 0.0
        %1236 = vmatpush1.xpose.msra.mxu0 0.0
        %1237 = vmatprep.subr.mxu0 0.0
        %1238 = vmatpush1.xpose.msra.mxu0 0.0
        %1239 = vmatprep.subr.mxu0 0.0
        %1240 = vmatpush1.xpose.msra.mxu0 0.0
        %1241 = vmatprep.subr.mxu0 0.0
        %1242 = vmatpush1.xpose.msra.mxu0 0.0
        %1243 = vmatprep.subr.mxu0 0.0
        %1244 = vmatpush1.xpose.msra.mxu0 0.0
        %1245 = vmatprep.subr.mxu0 0.0
        %1246 = vmatpush1.xpose.msra.mxu0 0.0
        %1247 = vmatprep.subr.mxu0 0.0
        %1248 = vmatpush1.xpose.msra.mxu0 0.0
        %1249 = vmatprep.subr.mxu0 0.0
        %1250 = vmatpush1.xpose.msra.mxu0 0.0
        %1251 = vmatprep.subr.mxu0 0.0
        %1252 = vmatpush1.xpose.msra.mxu0 0.0
        %1253 = vmatprep.subr.mxu0 0.0
        %1254 = vmatpush1.xpose.msra.mxu0 0.0
        %1255 = vmatprep.subr.mxu0 0.0
        %1256 = vmatpush1.xpose.msra.mxu0 0.0
        %1257 = vmatprep.subr.mxu0 0.0
        %1258 = vmatpush1.xpose.msra.mxu0 0.0
        %1259 = vmatprep.subr.mxu0 0.0
        %1260 = vmatpush1.xpose.msra.mxu0 0.0
        %1261 = vmatprep.subr.mxu0 0.0
        %1262 = vmatpush1.xpose.msra.mxu0 0.0
        %1263 = vmatprep.subr.mxu0 0.0
        %1264 = vmatpush1.xpose.msra.mxu0 0.0
        %1265 = vmatprep.subr.mxu0 0.0
        %1266 = vmatpush1.xpose.msra.mxu0 0.0
        %1267 = vmatprep.subr.mxu0 0.0
        %1268 = vmatpush1.xpose.msra.mxu0 0.0
        %1269 = vmatprep.subr.mxu0 0.0
        %1270 = vmatpush1.xpose.msra.mxu0 0.0
        %1271 = vmatprep.subr.mxu0 0.0
        %1272 = vmatpush1.xpose.msra.mxu0 0.0
        %1273 = vmatprep.subr.mxu0 0.0
        %1274 = vmatpush1.xpose.msra.mxu0 0.0
        %1275 = vmatprep.subr.mxu0 0.0
        %1276 = vmatpush1.xpose.msra.mxu0 0.0
        %1277 = vmatprep.subr.mxu0 0.0
        %1278 = vmatpush1.xpose.msra.mxu0 0.0
        %1279 = vmatprep.subr.mxu0 0.0
        %1280 = vmatpush1.xpose.msra.mxu0 0.0
        %1281 = vmatprep.subr.mxu0 0.0
        %1282 = vmatpush1.xpose.msra.mxu0 0.0
        %1283 = vmatprep.subr.mxu0 0.0
        %1284 = vmatpush1.xpose.msra.mxu0 0.0
        %1285 = vmatprep.subr.mxu0 0.0
        %1286 = vmatpush1.xpose.msra.mxu0 0.0
        %1287 = vmatprep.mubr.f32.mxu0 0.0
        %1288 = vmatmul.mubr.f32.gmra.mrb[0].mxu0 %v1209
        %v1289 = vpop.f32.mrb[0].mxu0
        %v1290 = vadd.f32 0.0, %v1289
        %v1291 = vpop.f32.mrb[0].mxu0
        %1292 = vmatprep.mubr.f32.mxu0 0.0
        %1293 = vmatmul.mubr.f32.gmra.mrb[0].mxu0 %v1212
        %v1294 = vpop.f32.mrb[0].mxu0
        %v1295 = vadd.f32 0.0, %v1294
        %v1296 = vpop.f32.mrb[0].mxu0
        %1297 = vmatprep.mubr.f32.mxu0 0.0
        %1298 = vmatmul.mubr.f32.gmra.mrb[0].mxu0 %v1215
        %v1299 = vpop.f32.mrb[0].mxu0
        %v1300 = vadd.f32 0.0, %v1299
        %v1301 = vpop.f32.mrb[0].mxu0
        %1302 = vdwg.mxu0
        %vm1303 = vcmask 138240
        %v1304 = vsel %vm1303, %v1290, -inf
        %1305 = vmax.xlane.f32.xlu0 %v1304
        %v1306 = vpop.xlane.xlu0 %1305
        %v1307 = vsel %vm1303, %v1295, -inf
        %1308 = vmax.xlane.f32.xlu0 %v1307
        %v1309 = vpop.xlane.xlu0 %1308
        %vm1310 = vcmask 131072
        %v1311 = vsel %vm1310, %v1300, -inf
        %1312 = vmax.xlane.f32.xlu0 %v1311
        %v1313 = vpop.xlane.xlu0 %1312
        %v1314 = vsub.f32 %v1290, %v1306
        %v1315 = vsub.f32 %v1295, %v1309
        %v1316 = vsub.f32 %v1300, %v1313
        %v1317 = vmul.f32 %v1314, 1.442695
        %v1318 = vpow.pop %v1317
        %v1319 = vmul.f32 %v1315, 1.442695
        %v1320 = vpow.pop %v1319
        %v1321 = vmul.f32 %v1316, 1.442695
        %v1322 = vpow.pop %v1321
        %v1323 = vsel %vm1303, %v1318, 0.0
        %1324 = vadd.xlane.f32.xlu0 %v1323
        %v1325 = vpop.xlane.xlu0 %1324
        %v1326 = vsel %vm1303, %v1320, 0.0
        %1327 = vadd.xlane.f32.xlu0 %v1326
        %v1328 = vpop.xlane.xlu0 %1327
        %v1329 = vsel %vm1310, %v1322, 0.0
        %1330 = vadd.xlane.f32.xlu0 %v1329
        %v1331 = vpop.xlane.xlu0 %1330
        %v1332 = vrcp.pop %v1325
        %v1333 = vrcp.pop %v1328
        %v1334 = vrcp.pop %v1331
        %v1335 = vmul.f32 %v1318, %v1332
        %v1336 = vmul.f32 %v1320, %v1333
        %v1337 = vmul.f32 %v1322, %v1334
        %v1339 = vsel %vm1303, %v1335, 0
        %v1342 = vsel %vm1303, %v1336, 0
        %v1345 = vsel %vm1303, %v1337, 0
        %vm1347 = vcmask 1040384
        %v1349 = vsel %vm1347, %v1191, 0
        %1351 = vmatprep.subr.mxu0 0.0
        %1352 = vmatpush1.msra.mxu0 %v1181
        %1353 = vmatprep.subr.mxu0 0.0
        %1354 = vmatpush1.msra.mxu0 %v1185
        %1355 = vmatprep.subr.mxu0 0.0
        %1356 = vmatpush1.msra.mxu0 %v1349
        %1357 = vmatprep.subr.mxu0 0.0
        %1358 = vmatpush1.msra.mxu0 0.0
        %1359 = vmatprep.subr.mxu0 0.0
        %1360 = vmatpush1.msra.mxu0 0.0
        %1361 = vmatprep.subr.mxu0 0.0
        %1362 = vmatpush1.msra.mxu0 0.0
        %1363 = vmatprep.subr.mxu0 0.0
        %1364 = vmatpush1.msra.mxu0 0.0
        %1365 = vmatprep.subr.mxu0 0.0
        %1366 = vmatpush1.msra.mxu0 0.0
        %1367 = vmatprep.subr.mxu0 0.0
        %1368 = vmatpush1.msra.mxu0 0.0
        %1369 = vmatprep.subr.mxu0 0.0
        %1370 = vmatpush1.msra.mxu0 0.0
        %1371 = vmatprep.subr.mxu0 0.0
        %1372 = vmatpush1.msra.mxu0 0.0
        %1373 = vmatprep.subr.mxu0 0.0
        %1374 = vmatpush1.msra.mxu0 0.0
        %1375 = vmatprep.subr.mxu0 0.0
        %1376 = vmatpush1.msra.mxu0 0.0
        %1377 = vmatprep.subr.mxu0 0.0
        %1378 = vmatpush1.msra.mxu0 0.0
        %1379 = vmatprep.subr.mxu0 0.0
        %1380 = vmatpush1.msra.mxu0 0.0
        %1381 = vmatprep.subr.mxu0 0.0
        %1382 = vmatpush1.msra.mxu0 0.0
        %1383 = vmatprep.subr.mxu0 0.0
        %1384 = vmatpush1.msra.mxu0 0.0
        %1385 = vmatprep.subr.mxu0 0.0
        %1386 = vmatpush1.msra.mxu0 0.0
        %1387 = vmatprep.subr.mxu0 0.0
        %1388 = vmatpush1.msra.mxu0 0.0
        %1389 = vmatprep.subr.mxu0 0.0
        %1390 = vmatpush1.msra.mxu0 0.0
        %1391 = vmatprep.subr.mxu0 0.0
        %1392 = vmatpush1.msra.mxu0 0.0
        %1393 = vmatprep.subr.mxu0 0.0
        %1394 = vmatpush1.msra.mxu0 0.0
        %1395 = vmatprep.subr.mxu0 0.0
        %1396 = vmatpush1.msra.mxu0 0.0
        %1397 = vmatprep.subr.mxu0 0.0
        %1398 = vmatpush1.msra.mxu0 0.0
        %1399 = vmatprep.subr.mxu0 0.0
        %1400 = vmatpush1.msra.mxu0 0.0
        %1401 = vmatprep.subr.mxu0 0.0
        %1402 = vmatpush1.msra.mxu0 0.0
        %1403 = vmatprep.subr.mxu0 0.0
        %1404 = vmatpush1.msra.mxu0 0.0
        %1405 = vmatprep.subr.mxu0 0.0
        %1406 = vmatpush1.msra.mxu0 0.0
        %1407 = vmatprep.subr.mxu0 0.0
        %1408 = vmatpush1.msra.mxu0 0.0
        %1409 = vmatprep.subr.mxu0 0.0
        %1410 = vmatpush1.msra.mxu0 0.0
        %1411 = vmatprep.subr.mxu0 0.0
        %1412 = vmatpush1.msra.mxu0 0.0
        %1413 = vmatprep.subr.mxu0 0.0
        %1414 = vmatpush1.msra.mxu0 0.0
        %1415 = vmatprep.mubr.f32.mxu0 0.0
        %1416 = vmatmul.mubr.f32.gmra.mrb[0].mxu0 %v1339
        %v1417 = vpop.f32.mrb[0].mxu0
        %v1418 = vadd.f32 0.0, %v1417
        %v1419 = vpop.f32.mrb[0].mxu0
        %1420 = vmatprep.mubr.f32.mxu0 0.0
        %1421 = vmatmul.mubr.f32.gmra.mrb[0].mxu0 %v1342
        %v1422 = vpop.f32.mrb[0].mxu0
        %v1423 = vadd.f32 0.0, %v1422
        %v1424 = vpop.f32.mrb[0].mxu0
        %1425 = vmatprep.mubr.f32.mxu0 0.0
        %1426 = vmatmul.mubr.f32.gmra.mrb[0].mxu0 %v1345
        %v1427 = vpop.f32.mrb[0].mxu0
        %v1428 = vadd.f32 0.0, %v1427
        %v1429 = vpop.f32.mrb[0].mxu0
        %1430 = vdwg.mxu0
        %1431 = vrot.lane.b32.xlu0 %v1195, 112
        %v1432 = vpop.permute.xlu0 %1431
        %1433 = vrot.lane.b32.xlu0 %v1196, 112
        %v1434 = vpop.permute.xlu0 %1433
        %1435 = vrot.lane.b32.xlu0 %v1197, 112
        %v1436 = vpop.permute.xlu0 %1435
        %1437 = vrot.lane.b32.xlu0 %v1179, 48
        %v1438 = vpop.permute.xlu0 %1437
        %1439 = vrot.lane.b32.xlu0 %v1183, 48
        %v1440 = vpop.permute.xlu0 %1439
        %1441 = vrot.lane.b32.xlu0 %v1189, 48
        %v1442 = vpop.permute.xlu0 %1441
        %v1443 = vsel %vm1207, %v1432, 0
        %v1445 = vsel %vm1207, %v1434, 0
        %v1447 = vsel %vm1207, %v1436, 0
        %v1449 = vsel %vm1207, %v1438, 0
        %v1451 = vsel %vm1207, %v1440, 0
        %v1453 = vsel %vm1207, %v1442, 0
        %1455 = vmatprep.subr.mxu0 0.0
        %1456 = vmatpush1.xpose.msra.mxu0 %v1449
        %1457 = vmatprep.subr.mxu0 0.0
        %1458 = vmatpush1.xpose.msra.mxu0 %v1451
        %1459 = vmatprep.subr.mxu0 0.0
        %1460 = vmatpush1.xpose.msra.mxu0 %v1453
        %1461 = vmatprep.subr.mxu0 0.0
        %1462 = vmatpush1.xpose.msra.mxu0 0.0
        %1463 = vmatprep.subr.mxu0 0.0
        %1464 = vmatpush1.xpose.msra.mxu0 0.0
        %1465 = vmatprep.subr.mxu0 0.0
        %1466 = vmatpush1.xpose.msra.mxu0 0.0
        %1467 = vmatprep.subr.mxu0 0.0
        %1468 = vmatpush1.xpose.msra.mxu0 0.0
        %1469 = vmatprep.subr.mxu0 0.0
        %1470 = vmatpush1.xpose.msra.mxu0 0.0
        %1471 = vmatprep.subr.mxu0 0.0
        %1472 = vmatpush1.xpose.msra.mxu0 0.0
        %1473 = vmatprep.subr.mxu0 0.0
        %1474 = vmatpush1.xpose.msra.mxu0 0.0
        %1475 = vmatprep.subr.mxu0 0.0
        %1476 = vmatpush1.xpose.msra.mxu0 0.0
        %1477 = vmatprep.subr.mxu0 0.0
        %1478 = vmatpush1.xpose.msra.mxu0 0.0
        %1479 = vmatprep.subr.mxu0 0.0
        %1480 = vmatpush1.xpose.msra.mxu0 0.0
        %1481 = vmatprep.subr.mxu0 0.0
        %1482 = vmatpush1.xpose.msra.mxu0 0.0
        %1483 = vmatprep.subr.mxu0 0.0
        %1484 = vmatpush1.xpose.msra.mxu0 0.0
        %1485 = vmatprep.subr.mxu0 0.0
        %1486 = vmatpush1.xpose.msra.mxu0 0.0
        %1487 = vmatprep.subr.mxu0 0.0
        %1488 = vmatpush1.xpose.msra.mxu0 0.0
        %1489 = vmatprep.subr.mxu0 0.0
        %1490 = vmatpush1.xpose.msra.mxu0 0.0
        %1491 = vmatprep.subr.mxu0 0.0
        %1492 = vmatpush1.xpose.msra.mxu0 0.0
        %1493 = vmatprep.subr.mxu0 0.0
        %1494 = vmatpush1.xpose.msra.mxu0 0.0
        %1495 = vmatprep.subr.mxu0 0.0
        %1496 = vmatpush1.xpose.msra.mxu0 0.0
        %1497 = vmatprep.subr.mxu0 0.0
        %1498 = vmatpush1.xpose.msra.mxu0 0.0
        %1499 = vmatprep.subr.mxu0 0.0
        %1500 = vmatpush1.xpose.msra.mxu0 0.0
        %1501 = vmatprep.subr.mxu0 0.0
        %1502 = vmatpush1.xpose.msra.mxu0 0.0
        %1503 = vmatprep.subr.mxu0 0.0
        %1504 = vmatpush1.xpose.msra.mxu0 0.0
        %1505 = vmatprep.subr.mxu0 0.0
        %1506 = vmatpush1.xpose.msra.mxu0 0.0
        %1507 = vmatprep.subr.mxu0 0.0
        %1508 = vmatpush1.xpose.msra.mxu0 0.0
        %1509 = vmatprep.subr.mxu0 0.0
        %1510 = vmatpush1.xpose.msra.mxu0 0.0
        %1511 = vmatprep.subr.mxu0 0.0
        %1512 = vmatpush1.xpose.msra.mxu0 0.0
        %1513 = vmatprep.subr.mxu0 0.0
        %1514 = vmatpush1.xpose.msra.mxu0 0.0
        %1515 = vmatprep.subr.mxu0 0.0
        %1516 = vmatpush1.xpose.msra.mxu0 0.0
        %1517 = vmatprep.subr.mxu0 0.0
        %1518 = vmatpush1.xpose.msra.mxu0 0.0
        %1519 = vmatprep.mubr.f32.mxu0 0.0
        %1520 = vmatmul.mubr.f32.gmra.mrb[0].mxu0 %v1443
        %v1521 = vpop.f32.mrb[0].mxu0
        %v1522 = vadd.f32 0.0, %v1521
        %v1523 = vpop.f32.mrb[0].mxu0
        %1524 = vmatprep.mubr.f32.mxu0 0.0
        %1525 = vmatmul.mubr.f32.gmra.mrb[0].mxu0 %v1445
        %v1526 = vpop.f32.mrb[0].mxu0
        %v1527 = vadd.f32 0.0, %v1526
        %v1528 = vpop.f32.mrb[0].mxu0
        %1529 = vmatprep.mubr.f32.mxu0 0.0
        %1530 = vmatmul.mubr.f32.gmra.mrb[0].mxu0 %v1447
        %v1531 = vpop.f32.mrb[0].mxu0
        %v1532 = vadd.f32 0.0, %v1531
        %v1533 = vpop.f32.mrb[0].mxu0
        %1534 = vdwg.mxu0
        %v1535 = vsel %vm1303, %v1522, -inf
        %1536 = vmax.xlane.f32.xlu0 %v1535
        %v1537 = vpop.xlane.xlu0 %1536
        %v1538 = vsel %vm1303, %v1527, -inf
        %1539 = vmax.xlane.f32.xlu0 %v1538
        %v1540 = vpop.xlane.xlu0 %1539
        %v1541 = vsel %vm1310, %v1532, -inf
        %1542 = vmax.xlane.f32.xlu0 %v1541
        %v1543 = vpop.xlane.xlu0 %1542
        %v1544 = vsub.f32 %v1522, %v1537
        %v1545 = vsub.f32 %v1527, %v1540
        %v1546 = vsub.f32 %v1532, %v1543
        %v1547 = vmul.f32 %v1544, 1.442695
        %v1548 = vpow.pop %v1547
        %v1549 = vmul.f32 %v1545, 1.442695
        %v1550 = vpow.pop %v1549
        %v1551 = vmul.f32 %v1546, 1.442695
        %v1552 = vpow.pop %v1551
        %v1553 = vsel %vm1303, %v1548, 0.0
        %1554 = vadd.xlane.f32.xlu0 %v1553
        %v1555 = vpop.xlane.xlu0 %1554
        %v1556 = vsel %vm1303, %v1550, 0.0
        %1557 = vadd.xlane.f32.xlu0 %v1556
        %v1558 = vpop.xlane.xlu0 %1557
        %v1559 = vsel %vm1310, %v1552, 0.0
        %1560 = vadd.xlane.f32.xlu0 %v1559
        %v1561 = vpop.xlane.xlu0 %1560
        %v1562 = vrcp.pop %v1555
        %v1563 = vrcp.pop %v1558
        %v1564 = vrcp.pop %v1561
        %v1565 = vmul.f32 %v1548, %v1562
        %v1566 = vmul.f32 %v1550, %v1563
        %v1567 = vmul.f32 %v1552, %v1564
        %1570 = vrot.lane.b32.xlu0 %v1181, 112
        %v1571 = vpop.permute.xlu0 %1570
        %1572 = vrot.lane.b32.xlu0 %v1185, 112
        %v1573 = vpop.permute.xlu0 %1572
        %1574 = vrot.lane.b32.xlu0 %v1191, 112
        %v1575 = vpop.permute.xlu0 %1574
        %v1579 = vsel %vm1303, %v1565, 0
        %v1582 = vsel %vm1303, %v1566, 0
        %v1585 = vsel %vm1303, %v1567, 0
        %v1587 = vsel %vm1347, %v1575, 0
        %1589 = vmatprep.subr.mxu0 0.0
        %1590 = vmatpush1.msra.mxu0 %v1571
        %1591 = vmatprep.subr.mxu0 0.0
        %1592 = vmatpush1.msra.mxu0 %v1573
        %1593 = vmatprep.subr.mxu0 0.0
        %1594 = vmatpush1.msra.mxu0 %v1587
        %1595 = vmatprep.subr.mxu0 0.0
        %1596 = vmatpush1.msra.mxu0 0.0
        %1597 = vmatprep.subr.mxu0 0.0
        %1598 = vmatpush1.msra.mxu0 0.0
        %1599 = vmatprep.subr.mxu0 0.0
        %1600 = vmatpush1.msra.mxu0 0.0
        %1601 = vmatprep.subr.mxu0 0.0
        %1602 = vmatpush1.msra.mxu0 0.0
        %1603 = vmatprep.subr.mxu0 0.0
        %1604 = vmatpush1.msra.mxu0 0.0
        %1605 = vmatprep.subr.mxu0 0.0
        %1606 = vmatpush1.msra.mxu0 0.0
        %1607 = vmatprep.subr.mxu0 0.0
        %1608 = vmatpush1.msra.mxu0 0.0
        %1609 = vmatprep.subr.mxu0 0.0
        %1610 = vmatpush1.msra.mxu0 0.0
        %1611 = vmatprep.subr.mxu0 0.0
        %1612 = vmatpush1.msra.mxu0 0.0
        %1613 = vmatprep.subr.mxu0 0.0
        %1614 = vmatpush1.msra.mxu0 0.0
        %1615 = vmatprep.subr.mxu0 0.0
        %1616 = vmatpush1.msra.mxu0 0.0
        %1617 = vmatprep.subr.mxu0 0.0
        %1618 = vmatpush1.msra.mxu0 0.0
        %1619 = vmatprep.subr.mxu0 0.0
        %1620 = vmatpush1.msra.mxu0 0.0
        %1621 = vmatprep.subr.mxu0 0.0
        %1622 = vmatpush1.msra.mxu0 0.0
        %1623 = vmatprep.subr.mxu0 0.0
        %1624 = vmatpush1.msra.mxu0 0.0
        %1625 = vmatprep.subr.mxu0 0.0
        %1626 = vmatpush1.msra.mxu0 0.0
        %1627 = vmatprep.subr.mxu0 0.0
        %1628 = vmatpush1.msra.mxu0 0.0
        %1629 = vmatprep.subr.mxu0 0.0
        %1630 = vmatpush1.msra.mxu0 0.0
        %1631 = vmatprep.subr.mxu0 0.0
        %1632 = vmatpush1.msra.mxu0 0.0
        %1633 = vmatprep.subr.mxu0 0.0
        %1634 = vmatpush1.msra.mxu0 0.0
        %1635 = vmatprep.subr.mxu0 0.0
        %1636 = vmatpush1.msra.mxu0 0.0
        %1637 = vmatprep.subr.mxu0 0.0
        %1638 = vmatpush1.msra.mxu0 0.0
        %1639 = vmatprep.subr.mxu0 0.0
        %1640 = vmatpush1.msra.mxu0 0.0
        %1641 = vmatprep.subr.mxu0 0.0
        %1642 = vmatpush1.msra.mxu0 0.0
        %1643 = vmatprep.subr.mxu0 0.0
        %1644 = vmatpush1.msra.mxu0 0.0
        %1645 = vmatprep.subr.mxu0 0.0
        %1646 = vmatpush1.msra.mxu0 0.0
        %1647 = vmatprep.subr.mxu0 0.0
        %1648 = vmatpush1.msra.mxu0 0.0
        %1649 = vmatprep.subr.mxu0 0.0
        %1650 = vmatpush1.msra.mxu0 0.0
        %1651 = vmatprep.subr.mxu0 0.0
        %1652 = vmatpush1.msra.mxu0 0.0
        %1653 = vmatprep.mubr.f32.mxu0 0.0
        %1654 = vmatmul.mubr.f32.gmra.mrb[0].mxu0 %v1579
        %v1655 = vpop.f32.mrb[0].mxu0
        %v1656 = vadd.f32 0.0, %v1655
        %v1657 = vpop.f32.mrb[0].mxu0
        %1658 = vmatprep.mubr.f32.mxu0 0.0
        %1659 = vmatmul.mubr.f32.gmra.mrb[0].mxu0 %v1582
        %v1660 = vpop.f32.mrb[0].mxu0
        %v1661 = vadd.f32 0.0, %v1660
        %v1662 = vpop.f32.mrb[0].mxu0
        %1663 = vmatprep.mubr.f32.mxu0 0.0
        %1664 = vmatmul.mubr.f32.gmra.mrb[0].mxu0 %v1585
        %v1665 = vpop.f32.mrb[0].mxu0
        %v1666 = vadd.f32 0.0, %v1665
        %v1667 = vpop.f32.mrb[0].mxu0
        %1668 = vdwg.mxu0
        %1669 = vrot.lane.b32.xlu0 %v1195, 96
        %v1670 = vpop.permute.xlu0 %1669
        %1671 = vrot.lane.b32.xlu0 %v1196, 96
        %v1672 = vpop.permute.xlu0 %1671
        %1673 = vrot.lane.b32.xlu0 %v1197, 96
        %v1674 = vpop.permute.xlu0 %1673
        %1675 = vrot.lane.b32.xlu0 %v1179, 32
        %v1676 = vpop.permute.xlu0 %1675
        %1677 = vrot.lane.b32.xlu0 %v1183, 32
        %v1678 = vpop.permute.xlu0 %1677
        %1679 = vrot.lane.b32.xlu0 %v1189, 32
        %v1680 = vpop.permute.xlu0 %1679
        %v1681 = vsel %vm1207, %v1670, 0
        %v1683 = vsel %vm1207, %v1672, 0
        %v1685 = vsel %vm1207, %v1674, 0
        %v1687 = vsel %vm1207, %v1676, 0
        %v1689 = vsel %vm1207, %v1678, 0
        %v1691 = vsel %vm1207, %v1680, 0
        %1693 = vmatprep.subr.mxu0 0.0
        %1694 = vmatpush1.xpose.msra.mxu0 %v1687
        %1695 = vmatprep.subr.mxu0 0.0
        %1696 = vmatpush1.xpose.msra.mxu0 %v1689
        %1697 = vmatprep.subr.mxu0 0.0
        %1698 = vmatpush1.xpose.msra.mxu0 %v1691
        %1699 = vmatprep.subr.mxu0 0.0
        %1700 = vmatpush1.xpose.msra.mxu0 0.0
        %1701 = vmatprep.subr.mxu0 0.0
        %1702 = vmatpush1.xpose.msra.mxu0 0.0
        %1703 = vmatprep.subr.mxu0 0.0
        %1704 = vmatpush1.xpose.msra.mxu0 0.0
        %1705 = vmatprep.subr.mxu0 0.0
        %1706 = vmatpush1.xpose.msra.mxu0 0.0
        %1707 = vmatprep.subr.mxu0 0.0
        %1708 = vmatpush1.xpose.msra.mxu0 0.0
        %1709 = vmatprep.subr.mxu0 0.0
        %1710 = vmatpush1.xpose.msra.mxu0 0.0
        %1711 = vmatprep.subr.mxu0 0.0
        %1712 = vmatpush1.xpose.msra.mxu0 0.0
        %1713 = vmatprep.subr.mxu0 0.0
        %1714 = vmatpush1.xpose.msra.mxu0 0.0
        %1715 = vmatprep.subr.mxu0 0.0
        %1716 = vmatpush1.xpose.msra.mxu0 0.0
        %1717 = vmatprep.subr.mxu0 0.0
        %1718 = vmatpush1.xpose.msra.mxu0 0.0
        %1719 = vmatprep.subr.mxu0 0.0
        %1720 = vmatpush1.xpose.msra.mxu0 0.0
        %1721 = vmatprep.subr.mxu0 0.0
        %1722 = vmatpush1.xpose.msra.mxu0 0.0
        %1723 = vmatprep.subr.mxu0 0.0
        %1724 = vmatpush1.xpose.msra.mxu0 0.0
        %1725 = vmatprep.subr.mxu0 0.0
        %1726 = vmatpush1.xpose.msra.mxu0 0.0
        %1727 = vmatprep.subr.mxu0 0.0
        %1728 = vmatpush1.xpose.msra.mxu0 0.0
        %1729 = vmatprep.subr.mxu0 0.0
        %1730 = vmatpush1.xpose.msra.mxu0 0.0
        %1731 = vmatprep.subr.mxu0 0.0
        %1732 = vmatpush1.xpose.msra.mxu0 0.0
        %1733 = vmatprep.subr.mxu0 0.0
        %1734 = vmatpush1.xpose.msra.mxu0 0.0
        %1735 = vmatprep.subr.mxu0 0.0
        %1736 = vmatpush1.xpose.msra.mxu0 0.0
        %1737 = vmatprep.subr.mxu0 0.0
        %1738 = vmatpush1.xpose.msra.mxu0 0.0
        %1739 = vmatprep.subr.mxu0 0.0
        %1740 = vmatpush1.xpose.msra.mxu0 0.0
        %1741 = vmatprep.subr.mxu0 0.0
        %1742 = vmatpush1.xpose.msra.mxu0 0.0
        %1743 = vmatprep.subr.mxu0 0.0
        %1744 = vmatpush1.xpose.msra.mxu0 0.0
        %1745 = vmatprep.subr.mxu0 0.0
        %1746 = vmatpush1.xpose.msra.mxu0 0.0
        %1747 = vmatprep.subr.mxu0 0.0
        %1748 = vmatpush1.xpose.msra.mxu0 0.0
        %1749 = vmatprep.subr.mxu0 0.0
        %1750 = vmatpush1.xpose.msra.mxu0 0.0
        %1751 = vmatprep.subr.mxu0 0.0
        %1752 = vmatpush1.xpose.msra.mxu0 0.0
        %1753 = vmatprep.subr.mxu0 0.0
        %1754 = vmatpush1.xpose.msra.mxu0 0.0
        %1755 = vmatprep.subr.mxu0 0.0
        %1756 = vmatpush1.xpose.msra.mxu0 0.0
        %1757 = vmatprep.mubr.f32.mxu0 0.0
        %1758 = vmatmul.mubr.f32.gmra.mrb[0].mxu0 %v1681
        %v1759 = vpop.f32.mrb[0].mxu0
        %v1760 = vadd.f32 0.0, %v1759
        %v1761 = vpop.f32.mrb[0].mxu0
        %1762 = vmatprep.mubr.f32.mxu0 0.0
        %1763 = vmatmul.mubr.f32.gmra.mrb[0].mxu0 %v1683
        %v1764 = vpop.f32.mrb[0].mxu0
        %v1765 = vadd.f32 0.0, %v1764
        %v1766 = vpop.f32.mrb[0].mxu0
        %1767 = vmatprep.mubr.f32.mxu0 0.0
        %1768 = vmatmul.mubr.f32.gmra.mrb[0].mxu0 %v1685
        %v1769 = vpop.f32.mrb[0].mxu0
        %v1770 = vadd.f32 0.0, %v1769
        %v1771 = vpop.f32.mrb[0].mxu0
        %1772 = vdwg.mxu0
        %v1773 = vsel %vm1303, %v1760, -inf
        %1774 = vmax.xlane.f32.xlu0 %v1773
        %v1775 = vpop.xlane.xlu0 %1774
        %v1776 = vsel %vm1303, %v1765, -inf
        %1777 = vmax.xlane.f32.xlu0 %v1776
        %v1778 = vpop.xlane.xlu0 %1777
        %v1779 = vsel %vm1310, %v1770, -inf
        %1780 = vmax.xlane.f32.xlu0 %v1779
        %v1781 = vpop.xlane.xlu0 %1780
        %v1782 = vsub.f32 %v1760, %v1775
        %v1783 = vsub.f32 %v1765, %v1778
        %v1784 = vsub.f32 %v1770, %v1781
        %v1785 = vmul.f32 %v1782, 1.442695
        %v1786 = vpow.pop %v1785
        %v1787 = vmul.f32 %v1783, 1.442695
        %v1788 = vpow.pop %v1787
        %v1789 = vmul.f32 %v1784, 1.442695
        %v1790 = vpow.pop %v1789
        %v1791 = vsel %vm1303, %v1786, 0.0
        %1792 = vadd.xlane.f32.xlu0 %v1791
        %v1793 = vpop.xlane.xlu0 %1792
        %v1794 = vsel %vm1303, %v1788, 0.0
        %1795 = vadd.xlane.f32.xlu0 %v1794
        %v1796 = vpop.xlane.xlu0 %1795
        %v1797 = vsel %vm1310, %v1790, 0.0
        %1798 = vadd.xlane.f32.xlu0 %v1797
        %v1799 = vpop.xlane.xlu0 %1798
        %v1800 = vrcp.pop %v1793
        %v1801 = vrcp.pop %v1796
        %v1802 = vrcp.pop %v1799
        %v1803 = vmul.f32 %v1786, %v1800
        %v1804 = vmul.f32 %v1788, %v1801
        %v1805 = vmul.f32 %v1790, %v1802
        %1806 = vrot.lane.b32.xlu0 %v1181, 96
        %v1807 = vpop.permute.xlu0 %1806
        %1808 = vrot.lane.b32.xlu0 %v1185, 96
        %v1809 = vpop.permute.xlu0 %1808
        %1810 = vrot.lane.b32.xlu0 %v1191, 96
        %v1811 = vpop.permute.xlu0 %1810
        %v1815 = vsel %vm1303, %v1803, 0
        %v1818 = vsel %vm1303, %v1804, 0
        %v1821 = vsel %vm1303, %v1805, 0
        %v1823 = vsel %vm1347, %v1811, 0
        %1825 = vmatprep.subr.mxu0 0.0
        %1826 = vmatpush1.msra.mxu0 %v1807
        %1827 = vmatprep.subr.mxu0 0.0
        %1828 = vmatpush1.msra.mxu0 %v1809
        %1829 = vmatprep.subr.mxu0 0.0
        %1830 = vmatpush1.msra.mxu0 %v1823
        %1831 = vmatprep.subr.mxu0 0.0
        %1832 = vmatpush1.msra.mxu0 0.0
        %1833 = vmatprep.subr.mxu0 0.0
        %1834 = vmatpush1.msra.mxu0 0.0
        %1835 = vmatprep.subr.mxu0 0.0
        %1836 = vmatpush1.msra.mxu0 0.0
        %1837 = vmatprep.subr.mxu0 0.0
        %1838 = vmatpush1.msra.mxu0 0.0
        %1839 = vmatprep.subr.mxu0 0.0
        %1840 = vmatpush1.msra.mxu0 0.0
        %1841 = vmatprep.subr.mxu0 0.0
        %1842 = vmatpush1.msra.mxu0 0.0
        %1843 = vmatprep.subr.mxu0 0.0
        %1844 = vmatpush1.msra.mxu0 0.0
        %1845 = vmatprep.subr.mxu0 0.0
        %1846 = vmatpush1.msra.mxu0 0.0
        %1847 = vmatprep.subr.mxu0 0.0
        %1848 = vmatpush1.msra.mxu0 0.0
        %1849 = vmatprep.subr.mxu0 0.0
        %1850 = vmatpush1.msra.mxu0 0.0
        %1851 = vmatprep.subr.mxu0 0.0
        %1852 = vmatpush1.msra.mxu0 0.0
        %1853 = vmatprep.subr.mxu0 0.0
        %1854 = vmatpush1.msra.mxu0 0.0
        %1855 = vmatprep.subr.mxu0 0.0
        %1856 = vmatpush1.msra.mxu0 0.0
        %1857 = vmatprep.subr.mxu0 0.0
        %1858 = vmatpush1.msra.mxu0 0.0
        %1859 = vmatprep.subr.mxu0 0.0
        %1860 = vmatpush1.msra.mxu0 0.0
        %1861 = vmatprep.subr.mxu0 0.0
        %1862 = vmatpush1.msra.mxu0 0.0
        %1863 = vmatprep.subr.mxu0 0.0
        %1864 = vmatpush1.msra.mxu0 0.0
        %1865 = vmatprep.subr.mxu0 0.0
        %1866 = vmatpush1.msra.mxu0 0.0
        %1867 = vmatprep.subr.mxu0 0.0
        %1868 = vmatpush1.msra.mxu0 0.0
        %1869 = vmatprep.subr.mxu0 0.0
        %1870 = vmatpush1.msra.mxu0 0.0
        %1871 = vmatprep.subr.mxu0 0.0
        %1872 = vmatpush1.msra.mxu0 0.0
        %1873 = vmatprep.subr.mxu0 0.0
        %1874 = vmatpush1.msra.mxu0 0.0
        %1875 = vmatprep.subr.mxu0 0.0
        %1876 = vmatpush1.msra.mxu0 0.0
        %1877 = vmatprep.subr.mxu0 0.0
        %1878 = vmatpush1.msra.mxu0 0.0
        %1879 = vmatprep.subr.mxu0 0.0
        %1880 = vmatpush1.msra.mxu0 0.0
        %1881 = vmatprep.subr.mxu0 0.0
        %1882 = vmatpush1.msra.mxu0 0.0
        %1883 = vmatprep.subr.mxu0 0.0
        %1884 = vmatpush1.msra.mxu0 0.0
        %1885 = vmatprep.subr.mxu0 0.0
        %1886 = vmatpush1.msra.mxu0 0.0
        %1887 = vmatprep.subr.mxu0 0.0
        %1888 = vmatpush1.msra.mxu0 0.0
        %1889 = vmatprep.mubr.f32.mxu0 0.0
        %1890 = vmatmul.mubr.f32.gmra.mrb[0].mxu0 %v1815
        %v1891 = vpop.f32.mrb[0].mxu0
        %v1892 = vadd.f32 0.0, %v1891
        %v1893 = vpop.f32.mrb[0].mxu0
        %1894 = vmatprep.mubr.f32.mxu0 0.0
        %1895 = vmatmul.mubr.f32.gmra.mrb[0].mxu0 %v1818
        %v1896 = vpop.f32.mrb[0].mxu0
        %v1897 = vadd.f32 0.0, %v1896
        %v1898 = vpop.f32.mrb[0].mxu0
        %1899 = vmatprep.mubr.f32.mxu0 0.0
        %1900 = vmatmul.mubr.f32.gmra.mrb[0].mxu0 %v1821
        %v1901 = vpop.f32.mrb[0].mxu0
        %v1902 = vadd.f32 0.0, %v1901
        %v1903 = vpop.f32.mrb[0].mxu0
        %1904 = vdwg.mxu0
        %1905 = vrot.lane.b32.xlu0 %v1195, 80
        %v1906 = vpop.permute.xlu0 %1905
        %1907 = vrot.lane.b32.xlu0 %v1196, 80
        %v1908 = vpop.permute.xlu0 %1907
        %1909 = vrot.lane.b32.xlu0 %v1197, 80
        %v1910 = vpop.permute.xlu0 %1909
        %1911 = vrot.lane.b32.xlu0 %v1179, 16
        %v1912 = vpop.permute.xlu0 %1911
        %1913 = vrot.lane.b32.xlu0 %v1183, 16
        %v1914 = vpop.permute.xlu0 %1913
        %1915 = vrot.lane.b32.xlu0 %v1189, 16
        %v1916 = vpop.permute.xlu0 %1915
        %v1917 = vsel %vm1207, %v1906, 0
        %v1919 = vsel %vm1207, %v1908, 0
        %v1921 = vsel %vm1207, %v1910, 0
        %v1923 = vsel %vm1207, %v1912, 0
        %v1925 = vsel %vm1207, %v1914, 0
        %v1927 = vsel %vm1207, %v1916, 0
        %1929 = vmatprep.subr.mxu0 0.0
        %1930 = vmatpush1.xpose.msra.mxu0 %v1923
        %1931 = vmatprep.subr.mxu0 0.0
        %1932 = vmatpush1.xpose.msra.mxu0 %v1925
        %1933 = vmatprep.subr.mxu0 0.0
        %1934 = vmatpush1.xpose.msra.mxu0 %v1927
        %1935 = vmatprep.subr.mxu0 0.0
        %1936 = vmatpush1.xpose.msra.mxu0 0.0
        %1937 = vmatprep.subr.mxu0 0.0
        %1938 = vmatpush1.xpose.msra.mxu0 0.0
        %1939 = vmatprep.subr.mxu0 0.0
        %1940 = vmatpush1.xpose.msra.mxu0 0.0
        %1941 = vmatprep.subr.mxu0 0.0
        %1942 = vmatpush1.xpose.msra.mxu0 0.0
        %1943 = vmatprep.subr.mxu0 0.0
        %1944 = vmatpush1.xpose.msra.mxu0 0.0
        %1945 = vmatprep.subr.mxu0 0.0
        %1946 = vmatpush1.xpose.msra.mxu0 0.0
        %1947 = vmatprep.subr.mxu0 0.0
        %1948 = vmatpush1.xpose.msra.mxu0 0.0
        %1949 = vmatprep.subr.mxu0 0.0
        %1950 = vmatpush1.xpose.msra.mxu0 0.0
        %1951 = vmatprep.subr.mxu0 0.0
        %1952 = vmatpush1.xpose.msra.mxu0 0.0
        %1953 = vmatprep.subr.mxu0 0.0
        %1954 = vmatpush1.xpose.msra.mxu0 0.0
        %1955 = vmatprep.subr.mxu0 0.0
        %1956 = vmatpush1.xpose.msra.mxu0 0.0
        %1957 = vmatprep.subr.mxu0 0.0
        %1958 = vmatpush1.xpose.msra.mxu0 0.0
        %1959 = vmatprep.subr.mxu0 0.0
        %1960 = vmatpush1.xpose.msra.mxu0 0.0
        %1961 = vmatprep.subr.mxu0 0.0
        %1962 = vmatpush1.xpose.msra.mxu0 0.0
        %1963 = vmatprep.subr.mxu0 0.0
        %1964 = vmatpush1.xpose.msra.mxu0 0.0
        %1965 = vmatprep.subr.mxu0 0.0
        %1966 = vmatpush1.xpose.msra.mxu0 0.0
        %1967 = vmatprep.subr.mxu0 0.0
        %1968 = vmatpush1.xpose.msra.mxu0 0.0
        %1969 = vmatprep.subr.mxu0 0.0
        %1970 = vmatpush1.xpose.msra.mxu0 0.0
        %1971 = vmatprep.subr.mxu0 0.0
        %1972 = vmatpush1.xpose.msra.mxu0 0.0
        %1973 = vmatprep.subr.mxu0 0.0
        %1974 = vmatpush1.xpose.msra.mxu0 0.0
        %1975 = vmatprep.subr.mxu0 0.0
        %1976 = vmatpush1.xpose.msra.mxu0 0.0
        %1977 = vmatprep.subr.mxu0 0.0
        %1978 = vmatpush1.xpose.msra.mxu0 0.0
        %1979 = vmatprep.subr.mxu0 0.0
        %1980 = vmatpush1.xpose.msra.mxu0 0.0
        %1981 = vmatprep.subr.mxu0 0.0
        %1982 = vmatpush1.xpose.msra.mxu0 0.0
        %1983 = vmatprep.subr.mxu0 0.0
        %1984 = vmatpush1.xpose.msra.mxu0 0.0
        %1985 = vmatprep.subr.mxu0 0.0
        %1986 = vmatpush1.xpose.msra.mxu0 0.0
        %1987 = vmatprep.subr.mxu0 0.0
        %1988 = vmatpush1.xpose.msra.mxu0 0.0
        %1989 = vmatprep.subr.mxu0 0.0
        %1990 = vmatpush1.xpose.msra.mxu0 0.0
        %1991 = vmatprep.subr.mxu0 0.0
        %1992 = vmatpush1.xpose.msra.mxu0 0.0
        %1993 = vmatprep.mubr.f32.mxu0 0.0
        %1994 = vmatmul.mubr.f32.gmra.mrb[0].mxu0 %v1917
        %v1995 = vpop.f32.mrb[0].mxu0
        %v1996 = vadd.f32 0.0, %v1995
        %v1997 = vpop.f32.mrb[0].mxu0
        %1998 = vmatprep.mubr.f32.mxu0 0.0
        %1999 = vmatmul.mubr.f32.gmra.mrb[0].mxu0 %v1919
        %v2000 = vpop.f32.mrb[0].mxu0
        %v2001 = vadd.f32 0.0, %v2000
        %v2002 = vpop.f32.mrb[0].mxu0
        %2003 = vmatprep.mubr.f32.mxu0 0.0
        %2004 = vmatmul.mubr.f32.gmra.mrb[0].mxu0 %v1921
        %v2005 = vpop.f32.mrb[0].mxu0
        %v2006 = vadd.f32 0.0, %v2005
        %v2007 = vpop.f32.mrb[0].mxu0
        %2008 = vdwg.mxu0
        %v2009 = vsel %vm1303, %v1996, -inf
        %2010 = vmax.xlane.f32.xlu0 %v2009
        %v2011 = vpop.xlane.xlu0 %2010
        %v2012 = vsel %vm1303, %v2001, -inf
        %2013 = vmax.xlane.f32.xlu0 %v2012
        %v2014 = vpop.xlane.xlu0 %2013
        %v2015 = vsel %vm1310, %v2006, -inf
        %2016 = vmax.xlane.f32.xlu0 %v2015
        %v2017 = vpop.xlane.xlu0 %2016
        %v2018 = vsub.f32 %v1996, %v2011
        %v2019 = vsub.f32 %v2001, %v2014
        %v2020 = vsub.f32 %v2006, %v2017
        %v2021 = vmul.f32 %v2018, 1.442695
        %v2022 = vpow.pop %v2021
        %v2023 = vmul.f32 %v2019, 1.442695
        %v2024 = vpow.pop %v2023
        %v2025 = vmul.f32 %v2020, 1.442695
        %v2026 = vpow.pop %v2025
        %v2027 = vsel %vm1303, %v2022, 0.0
        %2028 = vadd.xlane.f32.xlu0 %v2027
        %v2029 = vpop.xlane.xlu0 %2028
        %v2030 = vsel %vm1303, %v2024, 0.0
        %2031 = vadd.xlane.f32.xlu0 %v2030
        %v2032 = vpop.xlane.xlu0 %2031
        %v2033 = vsel %vm1310, %v2026, 0.0
        %2034 = vadd.xlane.f32.xlu0 %v2033
        %v2035 = vpop.xlane.xlu0 %2034
        %v2036 = vrcp.pop %v2029
        %v2037 = vrcp.pop %v2032
        %v2038 = vrcp.pop %v2035
        %v2039 = vmul.f32 %v2022, %v2036
        %v2040 = vmul.f32 %v2024, %v2037
        %v2041 = vmul.f32 %v2026, %v2038
        %2042 = vrot.lane.b32.xlu0 %v1181, 80
        %v2043 = vpop.permute.xlu0 %2042
        %2044 = vrot.lane.b32.xlu0 %v1185, 80
        %v2045 = vpop.permute.xlu0 %2044
        %2046 = vrot.lane.b32.xlu0 %v1191, 80
        %v2047 = vpop.permute.xlu0 %2046
        %v2051 = vsel %vm1303, %v2039, 0
        %v2054 = vsel %vm1303, %v2040, 0
        %v2057 = vsel %vm1303, %v2041, 0
        %v2059 = vsel %vm1347, %v2047, 0
        %2061 = vmatprep.subr.mxu0 0.0
        %2062 = vmatpush1.msra.mxu0 %v2043
        %2063 = vmatprep.subr.mxu0 0.0
        %2064 = vmatpush1.msra.mxu0 %v2045
        %2065 = vmatprep.subr.mxu0 0.0
        %2066 = vmatpush1.msra.mxu0 %v2059
        %2067 = vmatprep.subr.mxu0 0.0
        %2068 = vmatpush1.msra.mxu0 0.0
        %2069 = vmatprep.subr.mxu0 0.0
        %2070 = vmatpush1.msra.mxu0 0.0
        %2071 = vmatprep.subr.mxu0 0.0
        %2072 = vmatpush1.msra.mxu0 0.0
        %2073 = vmatprep.subr.mxu0 0.0
        %2074 = vmatpush1.msra.mxu0 0.0
        %2075 = vmatprep.subr.mxu0 0.0
        %2076 = vmatpush1.msra.mxu0 0.0
        %2077 = vmatprep.subr.mxu0 0.0
        %2078 = vmatpush1.msra.mxu0 0.0
        %2079 = vmatprep.subr.mxu0 0.0
        %2080 = vmatpush1.msra.mxu0 0.0
        %2081 = vmatprep.subr.mxu0 0.0
        %2082 = vmatpush1.msra.mxu0 0.0
        %2083 = vmatprep.subr.mxu0 0.0
        %2084 = vmatpush1.msra.mxu0 0.0
        %2085 = vmatprep.subr.mxu0 0.0
        %2086 = vmatpush1.msra.mxu0 0.0
        %2087 = vmatprep.subr.mxu0 0.0
        %2088 = vmatpush1.msra.mxu0 0.0
        %2089 = vmatprep.subr.mxu0 0.0
        %2090 = vmatpush1.msra.mxu0 0.0
        %2091 = vmatprep.subr.mxu0 0.0
        %2092 = vmatpush1.msra.mxu0 0.0
        %2093 = vmatprep.subr.mxu0 0.0
        %2094 = vmatpush1.msra.mxu0 0.0
        %2095 = vmatprep.subr.mxu0 0.0
        %2096 = vmatpush1.msra.mxu0 0.0
        %2097 = vmatprep.subr.mxu0 0.0
        %2098 = vmatpush1.msra.mxu0 0.0
        %2099 = vmatprep.subr.mxu0 0.0
        %2100 = vmatpush1.msra.mxu0 0.0
        %2101 = vmatprep.subr.mxu0 0.0
        %2102 = vmatpush1.msra.mxu0 0.0
        %2103 = vmatprep.subr.mxu0 0.0
        %2104 = vmatpush1.msra.mxu0 0.0
        %2105 = vmatprep.subr.mxu0 0.0
        %2106 = vmatpush1.msra.mxu0 0.0
        %2107 = vmatprep.subr.mxu0 0.0
        %2108 = vmatpush1.msra.mxu0 0.0
        %2109 = vmatprep.subr.mxu0 0.0
        %2110 = vmatpush1.msra.mxu0 0.0
        %2111 = vmatprep.subr.mxu0 0.0
        %2112 = vmatpush1.msra.mxu0 0.0
        %2113 = vmatprep.subr.mxu0 0.0
        %2114 = vmatpush1.msra.mxu0 0.0
        %2115 = vmatprep.subr.mxu0 0.0
        %2116 = vmatpush1.msra.mxu0 0.0
        %2117 = vmatprep.subr.mxu0 0.0
        %2118 = vmatpush1.msra.mxu0 0.0
        %2119 = vmatprep.subr.mxu0 0.0
        %2120 = vmatpush1.msra.mxu0 0.0
        %2121 = vmatprep.subr.mxu0 0.0
        %2122 = vmatpush1.msra.mxu0 0.0
        %2123 = vmatprep.subr.mxu0 0.0
        %2124 = vmatpush1.msra.mxu0 0.0
        %2125 = vmatprep.mubr.f32.mxu0 0.0
        %2126 = vmatmul.mubr.f32.gmra.mrb[0].mxu0 %v2051
        %v2127 = vpop.f32.mrb[0].mxu0
        %v2128 = vadd.f32 0.0, %v2127
        %v2129 = vpop.f32.mrb[0].mxu0
        %2130 = vmatprep.mubr.f32.mxu0 0.0
        %2131 = vmatmul.mubr.f32.gmra.mrb[0].mxu0 %v2054
        %v2132 = vpop.f32.mrb[0].mxu0
        %v2133 = vadd.f32 0.0, %v2132
        %v2134 = vpop.f32.mrb[0].mxu0
        %2135 = vmatprep.mubr.f32.mxu0 0.0
        %2136 = vmatmul.mubr.f32.gmra.mrb[0].mxu0 %v2057
        %v2137 = vpop.f32.mrb[0].mxu0
        %v2138 = vadd.f32 0.0, %v2137
        %v2139 = vpop.f32.mrb[0].mxu0
        %2140 = vdwg.mxu0
        %2144 = vrot.lane.b32.xlu0 %v1656, 16
        %v2145 = vpop.permute.xlu0 %2144
        %2146 = vrot.lane.b32.xlu0 %v1661, 16
        %v2147 = vpop.permute.xlu0 %2146
        %2148 = vrot.lane.b32.xlu0 %v1666, 16
        %v2149 = vpop.permute.xlu0 %2148
        %2156 = vrot.lane.b32.xlu0 %v1892, 32
        %v2157 = vpop.permute.xlu0 %2156
        %2158 = vrot.lane.b32.xlu0 %v1897, 32
        %v2159 = vpop.permute.xlu0 %2158
        %2160 = vrot.lane.b32.xlu0 %v1902, 32
        %v2161 = vpop.permute.xlu0 %2160
        %2168 = vrot.lane.b32.xlu0 %v2128, 48
        %v2169 = vpop.permute.xlu0 %2168
        %2170 = vrot.lane.b32.xlu0 %v2133, 48
        %v2171 = vpop.permute.xlu0 %2170
        %2172 = vrot.lane.b32.xlu0 %v2138, 48
        %v2173 = vpop.permute.xlu0 %2172
        %v2177 = vsel %vm1207, %v1418, %v2145
        %v2178 = vsel %vm1207, %v1423, %v2147
        %v2179 = vsel %vm1207, %v1428, %v2149
        %vm2180 = vcmask 261120
        %v2181 = vsel %vm2180, %v2177, %v2157
        %v2182 = vsel %vm2180, %v2178, %v2159
        %v2183 = vsel %vm2180, %v2179, %v2161
        %vm2184 = vcmask 392192
        %v2185 = vsel %vm2184, %v2181, %v2169
        %v2186 = vsel %vm2184, %v2182, %v2171
        %v2187 = vsel %vm2184, %v2183, %v2173
        %v2188 = vpack.c.bf16 %v2186, %v2185
        %v2189 = vpack.c.bf16 %v2187, %v2187
        %v2190 = vld [vmem:[%s889] sm:$0xf]
        %v2191 = vld [vmem:[%s889 + $0x4] sm:$0xf]
        %v2192 = vld [vmem:[%s889 + $0x8] sm:$0xf]
        %v2193 = vld [vmem:[%s889 + $0xc] sm:$0xf]
        %v2194 = vld [vmem:[%s889 + $0x10] sm:$0xf]
        %v2195 = vld [vmem:[%s889 + $0x14] sm:$0xf]
        %v2196 = vld [vmem:[%s889 + $0x18] sm:$0xf]
        %v2197 = vld [vmem:[%s889 + $0x1c] sm:$0xf]
        %v2198 = vld [vmem:[%s892] sm:$0x1]
        %v2200 = vlaneseq
        %v2201 = vshrl.u32 %v2200, 7
        %v2202 = vsub.s32 0, %v2201
        %v2203 = vrot.slane %v2198, %v2202
        %v2213 = vunpack.c.l.b16 %v2190
        %v2214 = vunpack.c.l.b16 %v2191
        %v2215 = vunpack.c.l.b16 %v2192
        %v2216 = vunpack.c.l.b16 %v2193
        %v2217 = vunpack.c.l.b16 %v2194
        %v2218 = vunpack.c.l.b16 %v2195
        %v2219 = vunpack.c.l.b16 %v2196
        %v2220 = vunpack.c.l.b16 %v2197
        %v2221 = vpack.c.b16 %v2214, %v2213
        %v2222 = vpack.c.b16 %v2216, %v2215
        %v2223 = vpack.c.b16 %v2218, %v2217
        %v2224 = vpack.c.b16 %v2220, %v2219
        %v2230 = vsel %vm1016, %v2188, 0
        %v2233 = vsel %vm1016, %v2189, 0
        %2235 = vmatprep.subr.bf16.mxu0 0
        %2236 = vmatpush1.bf16.msra.mxu0 %v2221
        %2237 = vmatprep.subr.bf16.mxu0 0
        %2238 = vmatpush1.bf16.msra.mxu0 %v2222
        %2239 = vmatprep.subr.bf16.mxu0 0
        %2240 = vmatpush1.bf16.msra.mxu0 %v2223
        %2241 = vmatprep.subr.bf16.mxu0 0
        %2242 = vmatpush1.bf16.msra.mxu0 %v2224
        %2243 = vmatprep.subr.bf16.mxu0 0
        %2244 = vmatpush1.bf16.msra.mxu0 0
        %2245 = vmatprep.subr.bf16.mxu0 0
        %2246 = vmatpush1.bf16.msra.mxu0 0
        %2247 = vmatprep.subr.bf16.mxu0 0
        %2248 = vmatpush1.bf16.msra.mxu0 0
        %2249 = vmatprep.subr.bf16.mxu0 0
        %2250 = vmatpush1.bf16.msra.mxu0 0
        %2251 = vmatprep.subr.bf16.mxu0 0
        %2252 = vmatpush1.bf16.msra.mxu0 0
        %2253 = vmatprep.subr.bf16.mxu0 0
        %2254 = vmatpush1.bf16.msra.mxu0 0
        %2255 = vmatprep.subr.bf16.mxu0 0
        %2256 = vmatpush1.bf16.msra.mxu0 0
        %2257 = vmatprep.subr.bf16.mxu0 0
        %2258 = vmatpush1.bf16.msra.mxu0 0
        %2259 = vmatprep.subr.bf16.mxu0 0
        %2260 = vmatpush1.bf16.msra.mxu0 0
        %2261 = vmatprep.subr.bf16.mxu0 0
        %2262 = vmatpush1.bf16.msra.mxu0 0
        %2263 = vmatprep.subr.bf16.mxu0 0
        %2264 = vmatpush1.bf16.msra.mxu0 0
        %2265 = vmatprep.subr.bf16.mxu0 0
        %2266 = vmatpush1.bf16.msra.mxu0 0
        %2267 = vmatprep.mubr.bf16.mxu0 0
        %2268 = vmatmul.mubr.bf16.gmra.mrb[0].mxu0 %v2230
        %v2269 = vpop.f32.mrb[0].mxu0
        %v2270 = vadd.f32 %v2203, %v2269
        %v2271 = vpop.f32.mrb[0].mxu0
        %v2272 = vpop.f32.mrb[0].mxu0
        %v2273 = vadd.f32 %v2203, %v2272
        %v2274 = vpop.f32.mrb[0].mxu0
        %2275 = vmatprep.mubr.bf16.mxu0 0
        %2276 = vmatmul.mubr.bf16.gmra.mrb[0].mxu0 %v2233
        %v2277 = vpop.f32.mrb[0].mxu0
        %v2278 = vadd.f32 %v2203, %v2277
        %v2279 = vpop.f32.mrb[0].mxu0
        %v2280 = vpop.f32.mrb[0].mxu0
        %v2281 = vpop.f32.mrb[0].mxu0
        %2282 = vdwg.mxu0
        %v2283 = vadd.f32 %v2270, %v1011
        %v2284 = vadd.f32 %v2273, %v1012
        %v2285 = vadd.f32 %v2278, %v1013
        %v2286 = vld [vmem:[%s895] sm:$0x1]
        %v2287 = vld [vmem:[%s898] sm:$0x1]
        %v2288 = vsel %vm1016, %v2283, 0.0
        %2289 = vadd.xlane.f32.xlu0 %v2288
        %v2290 = vpop.xlane.xlu0 %2289
        %v2291 = vsel %vm1016, %v2284, 0.0
        %2292 = vadd.xlane.f32.xlu0 %v2291
        %v2293 = vpop.xlane.xlu0 %2292
        %v2294 = vsel %vm1023, %v2285, 0.0
        %2295 = vadd.xlane.f32.xlu0 %v2294
        %v2296 = vpop.xlane.xlu0 %2295
        %v2297 = vmul.f32 %v2290, %v1027
        %v2298 = vmul.f32 %v2293, %v1027
        %v2299 = vmul.f32 %v2296, %v1027
        %v2300 = vsub.f32 %v2283, %v2297
        %v2301 = vsub.f32 %v2284, %v2298
        %v2302 = vsub.f32 %v2285, %v2299
        %v2303 = vmul.f32 %v2300, %v2300
        %v2304 = vmul.f32 %v2301, %v2301
        %v2305 = vmul.f32 %v2302, %v2302
        %v2306 = vsel %vm1016, %v2303, 0.0
        %2307 = vadd.xlane.f32.xlu0 %v2306
        %v2308 = vpop.xlane.xlu0 %2307
        %v2309 = vsel %vm1016, %v2304, 0.0
        %2310 = vadd.xlane.f32.xlu0 %v2309
        %v2311 = vpop.xlane.xlu0 %2310
        %v2312 = vsel %vm1023, %v2305, 0.0
        %2313 = vadd.xlane.f32.xlu0 %v2312
        %v2314 = vpop.xlane.xlu0 %2313
        %v2315 = vmul.f32 %v2308, %v1027
        %v2316 = vmul.f32 %v2311, %v1027
        %v2317 = vmul.f32 %v2314, %v1027
        %v2318 = vadd.f32 %v2315, 1e-05
        %v2319 = vadd.f32 %v2316, 1e-05
        %v2320 = vadd.f32 %v2317, 1e-05
        %v2321 = vrsqrt.pop %v2318
        %v2322 = vrsqrt.pop %v2319
        %v2323 = vrsqrt.pop %v2320
        %v2324 = vmul.f32 %v2300, %v2321
        %v2325 = vmul.f32 %v2301, %v2322
        %v2326 = vmul.f32 %v2302, %v2323
        %v2328 = vlaneseq
        %v2329 = vshrl.u32 %v2328, 7
        %v2330 = vsub.s32 0, %v2329
        %v2331 = vrot.slane %v2286, %v2330
        %v2333 = vmul.f32 %v2324, %v2331
        %v2334 = vmul.f32 %v2325, %v2331
        %v2335 = vmul.f32 %v2326, %v2331
        %v2337 = vlaneseq
        %v2338 = vshrl.u32 %v2337, 7
        %v2339 = vsub.s32 0, %v2338
        %v2340 = vrot.slane %v2287, %v2339
        %v2342 = vadd.f32 %v2333, %v2340
        %v2343 = vadd.f32 %v2334, %v2340
        %v2344 = vadd.f32 %v2335, %v2340
        %v2345 = vpack.c.bf16 %v2343, %v2342
        %v2346 = vpack.c.bf16 %v2344, %v2344
        %v2347 = vld [vmem:[%s903] sm:$0xf]
        %v2348 = vld [vmem:[%s903 + $0x4] sm:$0xf]
        %v2349 = vld [vmem:[%s903 + $0x8] sm:$0xf]
        %v2350 = vld [vmem:[%s903 + $0xc] sm:$0xf]
        %v2351 = vld [vmem:[%s903 + $0x10] sm:$0xf]
        %v2352 = vld [vmem:[%s903 + $0x14] sm:$0xf]
        %v2353 = vld [vmem:[%s903 + $0x18] sm:$0xf]
        %v2354 = vld [vmem:[%s903 + $0x1c] sm:$0xf]
        %v2355 = vld [vmem:[%s906] sm:$0x1]
        %v2357 = vlaneseq
        %v2358 = vshrl.u32 %v2357, 7
        %v2359 = vsub.s32 0, %v2358
        %v2360 = vrot.slane %v2355, %v2359
        %v2370 = vunpack.c.l.b16 %v2347
        %v2371 = vunpack.c.l.b16 %v2348
        %v2372 = vunpack.c.l.b16 %v2349
        %v2373 = vunpack.c.l.b16 %v2350
        %v2374 = vunpack.c.l.b16 %v2351
        %v2375 = vunpack.c.l.b16 %v2352
        %v2376 = vunpack.c.l.b16 %v2353
        %v2377 = vunpack.c.l.b16 %v2354
        %v2378 = vpack.c.b16 %v2371, %v2370
        %v2379 = vpack.c.b16 %v2373, %v2372
        %v2380 = vpack.c.b16 %v2375, %v2374
        %v2381 = vpack.c.b16 %v2377, %v2376
        %v2387 = vsel %vm1016, %v2345, 0
        %v2390 = vsel %vm1016, %v2346, 0
        %2392 = vmatprep.subr.bf16.mxu0 0
        %2393 = vmatpush1.bf16.msra.mxu0 %v2378
        %2394 = vmatprep.subr.bf16.mxu0 0
        %2395 = vmatpush1.bf16.msra.mxu0 %v2379
        %2396 = vmatprep.subr.bf16.mxu0 0
        %2397 = vmatpush1.bf16.msra.mxu0 %v2380
        %2398 = vmatprep.subr.bf16.mxu0 0
        %2399 = vmatpush1.bf16.msra.mxu0 %v2381
        %2400 = vmatprep.subr.bf16.mxu0 0
        %2401 = vmatpush1.bf16.msra.mxu0 0
        %2402 = vmatprep.subr.bf16.mxu0 0
        %2403 = vmatpush1.bf16.msra.mxu0 0
        %2404 = vmatprep.subr.bf16.mxu0 0
        %2405 = vmatpush1.bf16.msra.mxu0 0
        %2406 = vmatprep.subr.bf16.mxu0 0
        %2407 = vmatpush1.bf16.msra.mxu0 0
        %2408 = vmatprep.subr.bf16.mxu0 0
        %2409 = vmatpush1.bf16.msra.mxu0 0
        %2410 = vmatprep.subr.bf16.mxu0 0
        %2411 = vmatpush1.bf16.msra.mxu0 0
        %2412 = vmatprep.subr.bf16.mxu0 0
        %2413 = vmatpush1.bf16.msra.mxu0 0
        %2414 = vmatprep.subr.bf16.mxu0 0
        %2415 = vmatpush1.bf16.msra.mxu0 0
        %2416 = vmatprep.subr.bf16.mxu0 0
        %2417 = vmatpush1.bf16.msra.mxu0 0
        %2418 = vmatprep.subr.bf16.mxu0 0
        %2419 = vmatpush1.bf16.msra.mxu0 0
        %2420 = vmatprep.subr.bf16.mxu0 0
        %2421 = vmatpush1.bf16.msra.mxu0 0
        %2422 = vmatprep.subr.bf16.mxu0 0
        %2423 = vmatpush1.bf16.msra.mxu0 0
        %2424 = vmatprep.mubr.bf16.mxu0 0
        %2425 = vmatmul.mubr.bf16.gmra.mrb[0].mxu0 %v2387
        %v2426 = vpop.f32.mrb[0].mxu0
        %v2427 = vadd.f32 %v2360, %v2426
        %v2428 = vpop.f32.mrb[0].mxu0
        %v2429 = vpop.f32.mrb[0].mxu0
        %v2430 = vadd.f32 %v2360, %v2429
        %v2431 = vpop.f32.mrb[0].mxu0
        %2432 = vmatprep.mubr.bf16.mxu0 0
        %2433 = vmatmul.mubr.bf16.gmra.mrb[0].mxu0 %v2390
        %v2434 = vpop.f32.mrb[0].mxu0
        %v2435 = vadd.f32 %v2360, %v2434
        %v2436 = vpop.f32.mrb[0].mxu0
        %v2437 = vpop.f32.mrb[0].mxu0
        %v2438 = vpop.f32.mrb[0].mxu0
        %2439 = vdwg.mxu0
        %v2440 = vmul.f32 %v2427, 0.5
        %v2441 = vmul.f32 %v2430, 0.5
        %v2442 = vmul.f32 %v2435, 0.5
        %v2443 = vmul.f32 %v2427, 0.70710677
        %v2444 = vmul.f32 %v2430, 0.70710677
        %v2445 = vmul.f32 %v2435, 0.70710677
        %vm2446 = vcmp.ge.f32.partialorder %v2443, 0.0
        %vm2447 = vcmp.ge.f32.partialorder %v2444, 0.0
        %vm2448 = vcmp.ge.f32.partialorder %v2445, 0.0
        %v2449 = vsel %vm2446, 1.0, -1.0
        %v2450 = vsel %vm2447, 1.0, -1.0
        %v2451 = vsel %vm2448, 1.0, -1.0
        %v2452 = vand.u32 2147483647, %v2443
        %v2453 = vand.u32 2147483647, %v2444
        %v2454 = vand.u32 2147483647, %v2445
        %v2455 = vmul.f32 %v2452, 0.3275911
        %v2456 = vmul.f32 %v2453, 0.3275911
        %v2457 = vmul.f32 %v2454, 0.3275911
        %v2458 = vadd.f32 %v2455, 1.0
        %v2459 = vadd.f32 %v2456, 1.0
        %v2460 = vadd.f32 %v2457, 1.0
        %v2461 = vrcp.pop %v2458
        %v2462 = vmul.f32 1.0, %v2461
        %v2463 = vrcp.pop %v2459
        %v2464 = vmul.f32 1.0, %v2463
        %v2465 = vrcp.pop %v2460
        %v2466 = vmul.f32 1.0, %v2465
        %v2467 = vmul.f32 %v2462, 1.0614054
        %v2468 = vmul.f32 %v2464, 1.0614054
        %v2469 = vmul.f32 %v2466, 1.0614054
        %v2470 = vadd.f32 %v2467, -1.4531521
        %v2471 = vadd.f32 %v2468, -1.4531521
        %v2472 = vadd.f32 %v2469, -1.4531521
        %v2473 = vmul.f32 %v2470, %v2462
        %v2474 = vmul.f32 %v2471, %v2464
        %v2475 = vmul.f32 %v2472, %v2466
        %v2476 = vadd.f32 %v2473, 1.4214138
        %v2477 = vadd.f32 %v2474, 1.4214138
        %v2478 = vadd.f32 %v2475, 1.4214138
        %v2479 = vmul.f32 %v2476, %v2462
        %v2480 = vmul.f32 %v2477, %v2464
        %v2481 = vmul.f32 %v2478, %v2466
        %v2482 = vadd.f32 %v2479, -0.28449672
        %v2483 = vadd.f32 %v2480, -0.28449672
        %v2484 = vadd.f32 %v2481, -0.28449672
        %v2485 = vmul.f32 %v2482, %v2462
        %v2486 = vmul.f32 %v2483, %v2464
        %v2487 = vmul.f32 %v2484, %v2466
        %v2488 = vadd.f32 %v2485, 0.2548296
        %v2489 = vadd.f32 %v2486, 0.2548296
        %v2490 = vadd.f32 %v2487, 0.2548296
        %v2491 = vmul.f32 %v2488, %v2462
        %v2492 = vmul.f32 %v2489, %v2464
        %v2493 = vmul.f32 %v2490, %v2466
        %v2494 = vsub.f32 0.0, %v2452
        %v2495 = vsub.f32 0.0, %v2453
        %v2496 = vsub.f32 0.0, %v2454
        %v2497 = vmul.f32 %v2494, %v2452
        %v2498 = vmul.f32 %v2495, %v2453
        %v2499 = vmul.f32 %v2496, %v2454
        %v2500 = vmul.f32 %v2497, 1.442695
        %v2501 = vpow.pop %v2500
        %v2502 = vmul.f32 %v2498, 1.442695
        %v2503 = vpow.pop %v2502
        %v2504 = vmul.f32 %v2499, 1.442695
        %v2505 = vpow.pop %v2504
        %v2506 = vmul.f32 %v2491, %v2501
        %v2507 = vmul.f32 %v2492, %v2503
        %v2508 = vmul.f32 %v2493, %v2505
        %v2509 = vsub.f32 1.0, %v2506
        %v2510 = vsub.f32 1.0, %v2507
        %v2511 = vsub.f32 1.0, %v2508
        %v2512 = vmul.f32 %v2449, %v2509
        %v2513 = vmul.f32 %v2450, %v2510
        %v2514 = vmul.f32 %v2451, %v2511
        %v2515 = vadd.f32 %v2512, 1.0
        %v2516 = vadd.f32 %v2513, 1.0
        %v2517 = vadd.f32 %v2514, 1.0
        %v2518 = vmul.f32 %v2440, %v2515
        %v2519 = vmul.f32 %v2441, %v2516
        %v2520 = vmul.f32 %v2442, %v2517
        %v2521 = vpack.c.bf16 %v2519, %v2518
        %v2522 = vpack.c.bf16 %v2520, %v2520
        %v2523 = vld [vmem:[%s911] sm:$0xf]
        %v2524 = vld [vmem:[%s911 + $0x4] sm:$0xf]
        %v2525 = vld [vmem:[%s911 + $0x8] sm:$0xf]
        %v2526 = vld [vmem:[%s911 + $0xc] sm:$0xf]
        %v2527 = vld [vmem:[%s911 + $0x10] sm:$0xf]
        %v2528 = vld [vmem:[%s911 + $0x14] sm:$0xf]
        %v2529 = vld [vmem:[%s911 + $0x18] sm:$0xf]
        %v2530 = vld [vmem:[%s911 + $0x1c] sm:$0xf]
        %v2531 = vld [vmem:[%s911 + $0x20] sm:$0xf]
        %v2532 = vld [vmem:[%s911 + $0x24] sm:$0xf]
        %v2533 = vld [vmem:[%s911 + $0x28] sm:$0xf]
        %v2534 = vld [vmem:[%s911 + $0x2c] sm:$0xf]
        %v2535 = vld [vmem:[%s911 + $0x30] sm:$0xf]
        %v2536 = vld [vmem:[%s911 + $0x34] sm:$0xf]
        %v2537 = vld [vmem:[%s911 + $0x38] sm:$0xf]
        %v2538 = vld [vmem:[%s911 + $0x3c] sm:$0xf]
        %v2539 = vld [vmem:[%s914] sm:$0x1]
        %v2541 = vlaneseq
        %v2542 = vshrl.u32 %v2541, 7
        %v2543 = vsub.s32 0, %v2542
        %v2544 = vrot.slane %v2539, %v2543
        %v2562 = vunpack.c.l.b16 %v2523
        %v2563 = vunpack.c.l.b16 %v2524
        %v2564 = vunpack.c.l.b16 %v2525
        %v2565 = vunpack.c.l.b16 %v2526
        %v2566 = vunpack.c.l.b16 %v2527
        %v2567 = vunpack.c.l.b16 %v2528
        %v2568 = vunpack.c.l.b16 %v2529
        %v2569 = vunpack.c.l.b16 %v2530
        %v2570 = vunpack.c.l.b16 %v2531
        %v2571 = vunpack.c.l.b16 %v2532
        %v2572 = vunpack.c.l.b16 %v2533
        %v2573 = vunpack.c.l.b16 %v2534
        %v2574 = vunpack.c.l.b16 %v2535
        %v2575 = vunpack.c.l.b16 %v2536
        %v2576 = vunpack.c.l.b16 %v2537
        %v2577 = vunpack.c.l.b16 %v2538
        %v2578 = vpack.c.b16 %v2563, %v2562
        %v2579 = vpack.c.b16 %v2565, %v2564
        %v2580 = vpack.c.b16 %v2567, %v2566
        %v2581 = vpack.c.b16 %v2569, %v2568
        %v2582 = vpack.c.b16 %v2571, %v2570
        %v2583 = vpack.c.b16 %v2573, %v2572
        %v2584 = vpack.c.b16 %v2575, %v2574
        %v2585 = vpack.c.b16 %v2577, %v2576
        %2594 = vmatprep.subr.bf16.mxu0 0
        %2595 = vmatpush1.bf16.msra.mxu0 %v2578
        %2596 = vmatprep.subr.bf16.mxu0 0
        %2597 = vmatpush1.bf16.msra.mxu0 %v2579
        %2598 = vmatprep.subr.bf16.mxu0 0
        %2599 = vmatpush1.bf16.msra.mxu0 %v2580
        %2600 = vmatprep.subr.bf16.mxu0 0
        %2601 = vmatpush1.bf16.msra.mxu0 %v2581
        %2602 = vmatprep.subr.bf16.mxu0 0
        %2603 = vmatpush1.bf16.msra.mxu0 %v2582
        %2604 = vmatprep.subr.bf16.mxu0 0
        %2605 = vmatpush1.bf16.msra.mxu0 %v2583
        %2606 = vmatprep.subr.bf16.mxu0 0
        %2607 = vmatpush1.bf16.msra.mxu0 %v2584
        %2608 = vmatprep.subr.bf16.mxu0 0
        %2609 = vmatpush1.bf16.msra.mxu0 %v2585
        %2610 = vmatprep.subr.bf16.mxu0 0
        %2611 = vmatpush1.bf16.msra.mxu0 0
        %2612 = vmatprep.subr.bf16.mxu0 0
        %2613 = vmatpush1.bf16.msra.mxu0 0
        %2614 = vmatprep.subr.bf16.mxu0 0
        %2615 = vmatpush1.bf16.msra.mxu0 0
        %2616 = vmatprep.subr.bf16.mxu0 0
        %2617 = vmatpush1.bf16.msra.mxu0 0
        %2618 = vmatprep.subr.bf16.mxu0 0
        %2619 = vmatpush1.bf16.msra.mxu0 0
        %2620 = vmatprep.subr.bf16.mxu0 0
        %2621 = vmatpush1.bf16.msra.mxu0 0
        %2622 = vmatprep.subr.bf16.mxu0 0
        %2623 = vmatpush1.bf16.msra.mxu0 0
        %2624 = vmatprep.subr.bf16.mxu0 0
        %2625 = vmatpush1.bf16.msra.mxu0 0
        %2626 = vmatprep.mubr.bf16.mxu0 0
        %2627 = vmatmul.mubr.bf16.gmra.mrb[0].mxu0 %v2521
        %v2628 = vpop.f32.mrb[0].mxu0
        %v2629 = vadd.f32 %v2544, %v2628
        %v2630 = vpop.f32.mrb[0].mxu0
        %v2631 = vpop.f32.mrb[0].mxu0
        %v2632 = vadd.f32 %v2544, %v2631
        %v2633 = vpop.f32.mrb[0].mxu0
        %2634 = vmatprep.mubr.bf16.mxu0 0
        %2635 = vmatmul.mubr.bf16.gmra.mrb[0].mxu0 %v2522
        %v2636 = vpop.f32.mrb[0].mxu0
        %v2637 = vadd.f32 %v2544, %v2636
        %v2638 = vpop.f32.mrb[0].mxu0
        %v2639 = vpop.f32.mrb[0].mxu0
        %v2640 = vpop.f32.mrb[0].mxu0
        %2641 = vdwg.mxu0
        %v2642 = vadd.f32 %v2629, %v2283
        %v2643 = vadd.f32 %v2632, %v2284
        %v2644 = vadd.f32 %v2637, %v2285
        %2645 = vst.msk [vmem:[#allocation2] sm:$0xff] %vm1016, %v2642
        %2646 = vst.msk [vmem:[#allocation2 + $0x8] sm:$0xff] %vm1016, %v2643
        %2647 = vst.msk [vmem:[#allocation2 + $0x10] sm:$0x1] %vm1023, %v2644
        %p2648 = scmp.eq.s32.totalorder %s42, 1
        // Predicated region
        $region117: #{vit_forward.1} parent=111 // pred_check
          %p2649 = pneg %p2648
        $region118: #{vit_forward.1} parent=111 // pred_check_branch
          %2651 = sbr.rel (%p2649) target = $region120
        $region119: #{vit_forward.1} parent=111 // pred_region
          %v2652 = vld [vmem:[%s17] sm:$0x1]
          %v2653 = vld [vmem:[%s18] sm:$0x1]
          %v2654 = vsel %vm1023, %v2642, 0.0
          %2655 = vadd.xlane.f32.xlu0 %v2654
          %v2656 = vpop.xlane.xlu0 %2655
          %v2657 = vmul.f32 %v2656, %v1027
          %v2658 = vsub.f32 %v2642, %v2657
          %v2659 = vmul.f32 %v2658, %v2658
          %v2660 = vsel %vm1023, %v2659, 0.0
          %2661 = vadd.xlane.f32.xlu0 %v2660
          %v2662 = vpop.xlane.xlu0 %2661
          %v2663 = vmul.f32 %v2662, %v1027
          %v2664 = vadd.f32 %v2663, 1e-05
          %v2665 = vrsqrt.pop %v2664
          %v2666 = vmul.f32 %v2658, %v2665
          %v2667 = vmul.f32 %v2666, %v2652
          %v2668 = vadd.f32 %v2667, %v2653
          %v2669 = vpack.c.bf16 %v2668, %v2668
          %v2670 = vld [vmem:[%s19] sm:$0xf]
          %v2671 = vld [vmem:[%s19 + $0x4] sm:$0xf]
          %v2672 = vld [vmem:[%s19 + $0x8] sm:$0xf]
          %v2673 = vld [vmem:[%s19 + $0xc] sm:$0xf]
          %v2674 = vld [vmem:[%s19 + $0x10] sm:$0xf]
          %v2675 = vld [vmem:[%s19 + $0x14] sm:$0xf]
          %v2676 = vld [vmem:[%s19 + $0x18] sm:$0xf]
          %v2677 = vld [vmem:[%s19 + $0x1c] sm:$0xf]
          %v2678 = vld [vmem:[%s20] sm:$0x1]
          %v2687 = vunpack.c.l.b16 %v2670
          %v2688 = vunpack.c.l.b16 %v2671
          %v2689 = vunpack.c.l.b16 %v2672
          %v2690 = vunpack.c.l.b16 %v2673
          %v2691 = vunpack.c.l.b16 %v2674
          %v2692 = vunpack.c.l.b16 %v2675
          %v2693 = vunpack.c.l.b16 %v2676
          %v2694 = vunpack.c.l.b16 %v2677
          %v2695 = vpack.c.b16 %v2688, %v2687
          %v2696 = vpack.c.b16 %v2690, %v2689
          %v2697 = vpack.c.b16 %v2692, %v2691
          %v2698 = vpack.c.b16 %v2694, %v2693
          %v2704 = vsel %vm1016, %v2669, 0
          %2706 = vmatprep.subr.bf16.mxu0 0
          %2707 = vmatpush1.bf16.msra.mxu0 %v2695
          %2708 = vmatprep.subr.bf16.mxu0 0
          %2709 = vmatpush1.bf16.msra.mxu0 %v2696
          %2710 = vmatprep.subr.bf16.mxu0 0
          %2711 = vmatpush1.bf16.msra.mxu0 %v2697
          %2712 = vmatprep.subr.bf16.mxu0 0
          %2713 = vmatpush1.bf16.msra.mxu0 %v2698
          %2714 = vmatprep.subr.bf16.mxu0 0
          %2715 = vmatpush1.bf16.msra.mxu0 0
          %2716 = vmatprep.subr.bf16.mxu0 0
          %2717 = vmatpush1.bf16.msra.mxu0 0
          %2718 = vmatprep.subr.bf16.mxu0 0
          %2719 = vmatpush1.bf16.msra.mxu0 0
          %2720 = vmatprep.subr.bf16.mxu0 0
          %2721 = vmatpush1.bf16.msra.mxu0 0
          %2722 = vmatprep.subr.bf16.mxu0 0
          %2723 = vmatpush1.bf16.msra.mxu0 0
          %2724 = vmatprep.subr.bf16.mxu0 0
          %2725 = vmatpush1.bf16.msra.mxu0 0
          %2726 = vmatprep.subr.bf16.mxu0 0
          %2727 = vmatpush1.bf16.msra.mxu0 0
          %2728 = vmatprep.subr.bf16.mxu0 0
          %2729 = vmatpush1.bf16.msra.mxu0 0
          %2730 = vmatprep.subr.bf16.mxu0 0
          %2731 = vmatpush1.bf16.msra.mxu0 0
          %2732 = vmatprep.subr.bf16.mxu0 0
          %2733 = vmatpush1.bf16.msra.mxu0 0
          %2734 = vmatprep.subr.bf16.mxu0 0
          %2735 = vmatpush1.bf16.msra.mxu0 0
          %2736 = vmatprep.subr.bf16.mxu0 0
          %2737 = vmatpush1.bf16.msra.mxu0 0
          %2738 = vmatprep.mubr.bf16.mxu0 0
          %2739 = vmatmul.mubr.bf16.gmra.mrb[0].mxu0 %v2704
          %v2740 = vpop.f32.mrb[0].mxu0
          %v2741 = vadd.f32 %v2678, %v2740
          %v2742 = vpop.f32.mrb[0].mxu0
          %v2743 = vpop.f32.mrb[0].mxu0
          %v2744 = vpop.f32.mrb[0].mxu0
          %2745 = vdwg.mxu0
          %v2746 = vtanh.pop %v2741
          %v2747 = vpack.c.bf16 %v2746, %v2746
          %v2748 = vld [vmem:[%s21] sm:$0xf]
          %v2749 = vld [vmem:[%s21 + $0x4] sm:$0xf]
          %v2750 = vld [vmem:[%s21 + $0x8] sm:$0xf]
          %v2751 = vld [vmem:[%s21 + $0xc] sm:$0xf]
          %v2752 = vld [vmem:[%s21 + $0x10] sm:$0xf]
          %v2753 = vld [vmem:[%s21 + $0x14] sm:$0xf]
          %v2754 = vld [vmem:[%s21 + $0x18] sm:$0xf]
          %v2755 = vld [vmem:[%s21 + $0x1c] sm:$0xf]
          %v2756 = vld [vmem:[%s21 + $0x20] sm:$0xf]
          %v2757 = vld [vmem:[%s21 + $0x24] sm:$0xf]
          %v2758 = vld [vmem:[%s21 + $0x28] sm:$0xf]
          %v2759 = vld [vmem:[%s21 + $0x2c] sm:$0xf]
          %v2760 = vld [vmem:[%s21 + $0x30] sm:$0xf]
          %v2761 = vld [vmem:[%s21 + $0x34] sm:$0xf]
          %v2762 = vld [vmem:[%s21 + $0x38] sm:$0xf]
          %v2763 = vld [vmem:[%s21 + $0x3c] sm:$0xf]
          %v2764 = vld [vmem:[%s22] sm:$0x1]
          %v2781 = vunpack.c.l.b16 %v2748
          %v2782 = vunpack.c.l.b16 %v2749
          %v2783 = vunpack.c.l.b16 %v2750
          %v2784 = vunpack.c.l.b16 %v2751
          %v2785 = vunpack.c.l.b16 %v2752
          %v2786 = vunpack.c.l.b16 %v2753
          %v2787 = vunpack.c.l.b16 %v2754
          %v2788 = vunpack.c.l.b16 %v2755
          %v2789 = vunpack.c.l.b16 %v2756
          %v2790 = vunpack.c.l.b16 %v2757
          %v2791 = vunpack.c.l.b16 %v2758
          %v2792 = vunpack.c.l.b16 %v2759
          %v2793 = vunpack.c.l.b16 %v2760
          %v2794 = vunpack.c.l.b16 %v2761
          %v2795 = vunpack.c.l.b16 %v2762
          %v2796 = vunpack.c.l.b16 %v2763
          %v2797 = vpack.c.b16 %v2782, %v2781
          %v2798 = vpack.c.b16 %v2784, %v2783
          %v2799 = vpack.c.b16 %v2786, %v2785
          %v2800 = vpack.c.b16 %v2788, %v2787
          %v2801 = vpack.c.b16 %v2790, %v2789
          %v2802 = vpack.c.b16 %v2792, %v2791
          %v2803 = vpack.c.b16 %v2794, %v2793
          %v2804 = vpack.c.b16 %v2796, %v2795
          %2813 = vmatprep.subr.bf16.mxu0 0
          %2814 = vmatpush1.bf16.msra.mxu0 %v2797
          %2815 = vmatprep.subr.bf16.mxu0 0
          %2816 = vmatpush1.bf16.msra.mxu0 %v2798
          %2817 = vmatprep.subr.bf16.mxu0 0
          %2818 = vmatpush1.bf16.msra.mxu0 %v2799
          %2819 = vmatprep.subr.bf16.mxu0 0
          %2820 = vmatpush1.bf16.msra.mxu0 %v2800
          %2821 = vmatprep.subr.bf16.mxu0 0
          %2822 = vmatpush1.bf16.msra.mxu0 %v2801
          %2823 = vmatprep.subr.bf16.mxu0 0
          %2824 = vmatpush1.bf16.msra.mxu0 %v2802
          %2825 = vmatprep.subr.bf16.mxu0 0
          %2826 = vmatpush1.bf16.msra.mxu0 %v2803
          %2827 = vmatprep.subr.bf16.mxu0 0
          %2828 = vmatpush1.bf16.msra.mxu0 %v2804
          %2829 = vmatprep.subr.bf16.mxu0 0
          %2830 = vmatpush1.bf16.msra.mxu0 0
          %2831 = vmatprep.subr.bf16.mxu0 0
          %2832 = vmatpush1.bf16.msra.mxu0 0
          %2833 = vmatprep.subr.bf16.mxu0 0
          %2834 = vmatpush1.bf16.msra.mxu0 0
          %2835 = vmatprep.subr.bf16.mxu0 0
          %2836 = vmatpush1.bf16.msra.mxu0 0
          %2837 = vmatprep.subr.bf16.mxu0 0
          %2838 = vmatpush1.bf16.msra.mxu0 0
          %2839 = vmatprep.subr.bf16.mxu0 0
          %2840 = vmatpush1.bf16.msra.mxu0 0
          %2841 = vmatprep.subr.bf16.mxu0 0
          %2842 = vmatpush1.bf16.msra.mxu0 0
          %2843 = vmatprep.subr.bf16.mxu0 0
          %2844 = vmatpush1.bf16.msra.mxu0 0
          %2845 = vmatprep.mubr.bf16.mxu0 0
          %2846 = vmatmul.mubr.bf16.gmra.mrb[0].mxu0 %v2747
          %v2847 = vpop.f32.mrb[0].mxu0
          %v2848 = vadd.f32 %v2764, %v2847
          %v2849 = vpop.f32.mrb[0].mxu0
          %v2850 = vpop.f32.mrb[0].mxu0
          %v2851 = vpop.f32.mrb[0].mxu0
          %2852 = vdwg.mxu0
          %2853 = vst [vmem:[%s864] sm:$0x1] %v2848
        $region120: #{vit_forward.1} parent=111 // pred_fallthru
          _
        %s2854 = sand.u32 %s605, 1
        %s2855 = scalar_lea.sflag [#allocation4], %s2854
        %s2856 = sand.u32 %s605, 1
        %s2857 = scalar_lea.vmem [#allocation3], %s2856
        // Predicated region
        $region121: #{vit_forward.1} parent=111 // pred_check
          %p2858 = pneg %p615
        $region122: #{vit_forward.1} parent=111 // pred_check_branch
          %2860 = sbr.rel (%p2858) target = $region124
        $region123: #{vit_forward.1} parent=111 // pred_region
          %s2862 = ssub.s32 16, 16
          %2863 = vsyncadd %s2855, %s2862
          %s2864 = smul.addr %s41, 16
          %s2865 = scalar_lea.hbm %s23, %s2864
          %s2867 = sshll.u32 %s2857, 4
          %s2868 = int_to_ptr.vmem [resolvable:$true] %s2867
          %2870 = dma.vmem_to_hbm [thread:$0]  %s2868, 16, %s2865, %s2855
        $region124: #{vit_forward.1} parent=111 // pred_fallthru
          _
      $region112: #{vit_forward.1} parent=5 // pred_fallthru
        _
      %p2871 = scmp.le.s32.totalorder 2, %s32
      // Predicated region
      $region125: #{vit_forward.1} parent=5 // pred_check
        %p2872 = pneg %p2871
      $region126: #{vit_forward.1} parent=5 // pred_check_branch
        %2874 = sbr.rel (%p2872) target = $region128
      $region127: #{vit_forward.1} parent=5 // pred_region
        %s2875 = ssub.s32 %s32, 2
        // Predicated region
        $region129: #{vit_forward.1} parent=127 // pred_check
          %p2876 = pneg %p621
        $region130: #{vit_forward.1} parent=127 // pred_check_branch
          %2878 = sbr.rel (%p2876) target = $region132
        $region131: #{vit_forward.1} parent=127 // pred_region
          %s2879 = sand.u32 %s606, 1
          %s2880 = scalar_lea.sflag [#allocation4], %s2879
          %s2881 = sand.u32 %s606, 1
          %s2882 = scalar_lea.vmem [#allocation3], %s2881
          %2883 = dma.done %s2880, 16
        $region132: #{vit_forward.1} parent=127 // pred_fallthru
          _
      $region128: #{vit_forward.1} parent=5 // pred_fallthru
        _
    $region6: #{vit_forward.1} parent=1 // loop_footer
      %s36 = sadd.s32 1, %s32
    $region7: #{vit_forward.1} parent=1 // loop_footer_branch
      %31 = sbr.rel target = $region3
    $region8: #{vit_forward.1} parent=1 // loop_exit
      _
    %2884 = vsyncpa [#allocation4], 1
    %s2885 = scalar_lea.sflag [#allocation4], 1
    %2886 = vsyncpa %s2885, 1

</llo_original>
